<compile_context>
chip_gen: v5e
topology: v5e:2x2
jax: 0.10.0
libtpu: 0.0.40
codegen_flags: <defaults>
</compile_context>

<pallas_src>
import math
import jax
import jax.numpy as jnp
from jax.experimental import pallas as pl
from jax.experimental.pallas import tpu as pltpu

_INV_SQRT2 = 1.0 / math.sqrt(2.0)


def _mlp_kernel(x_ref, w1_ref, b1_ref, w2_ref, b2_ref, o_ref):
    # fc1: compute-dtype (bf16) MXU inputs, f32 accumulation.
    h = jnp.dot(x_ref[...], w1_ref[...], preferred_element_type=jnp.float32)
    h = h + b1_ref[...]                                   # (tm, HID) f32, b1 is (1, HID)
    # Exact (erf-based) GELU, matching nn.GELU(approximate='none').
    h = 0.5 * h * (1.0 + jax.lax.erf(h * _INV_SQRT2))
    # fc2: cast the activation back to the MXU compute dtype, accumulate in f32.
    o = jnp.dot(h.astype(w2_ref.dtype), w2_ref[...], preferred_element_type=jnp.float32)
    o = o + b2_ref[...]                                   # (tm, OUT) f32, b2 is (1, OUT)
    o_ref[...] = o.astype(o_ref.dtype)


def _build_call(M_pad, C_in, hid, C_out, tm, out_dtype,
                single_buffer_weights, vmem_limit_bytes):
    def resident_spec(shape):
        if single_buffer_weights:
            # Constant index_map => never re-fetched; one buffer is enough.
            return pl.BlockSpec(shape, lambda i: (0, 0), pipeline_mode=pl.Buffered(1))
        return pl.BlockSpec(shape, lambda i: (0, 0))

    return pl.pallas_call(
        _mlp_kernel,
        out_shape=jax.ShapeDtypeStruct((M_pad, C_out), out_dtype),
        grid_spec=pltpu.PrefetchScalarGridSpec(
            num_scalar_prefetch=0,
            grid=(M_pad // tm,),
            in_specs=[
                pl.BlockSpec((tm, C_in), lambda i: (i, 0)),   # x tile (pipelined)
                resident_spec((C_in, hid)),                   # w1 (resident)
                resident_spec((1, hid)),                      # b1
                resident_spec((hid, C_out)),                  # w2 (resident)
                resident_spec((1, C_out)),                    # b2
            ],
            out_specs=pl.BlockSpec((tm, C_out), lambda i: (i, 0)),
        ),
        compiler_params=pltpu.CompilerParams(
            dimension_semantics=("parallel",),
            vmem_limit_bytes=vmem_limit_bytes,
        ),
    )


def mlp_pallas(x, w1, b1, w2, b2, *, tm=256, compute_dtype=jnp.bfloat16,
               vmem_limit_bytes=64 * 1024 * 1024):
    """x: (B, N, C_in). Returns (B, N, C_out) in x.dtype.

    Matmuls run in `compute_dtype` on the MXU with f32 accumulation; biases and
    the GELU epilogue stay f32. Pass compute_dtype=jnp.float32 for exact f32.
    """
    B, N, C_in = x.shape
    hid = w1.shape[1]
    C_out = w2.shape[1]
    out_dtype = x.dtype

    M = B * N
    M_pad = pl.cdiv(M, tm) * tm

    x2 = x.reshape(M, C_in).astype(compute_dtype)
    if M_pad != M:
        x2 = jnp.pad(x2, ((0, M_pad - M), (0, 0)))

    w1c = w1.astype(compute_dtype)
    w2c = w2.astype(compute_dtype)
    b1_2d = b1.reshape(1, hid).astype(jnp.float32)
    b2_2d = b2.reshape(1, C_out).astype(jnp.float32)

    try:
        call = _build_call(M_pad, C_in, hid, C_out, tm, out_dtype,
                           single_buffer_weights=True,
                           vmem_limit_bytes=vmem_limit_bytes)
        out = call(x2, w1c, b1_2d, w2c, b2_2d)
    except Exception:
        # Fallback: default (double-buffered) pipelining for the resident operands.
        call = _build_call(M_pad, C_in, hid, C_out, tm, out_dtype,
                           single_buffer_weights=False,
                           vmem_limit_bytes=vmem_limit_bytes)
        out = call(x2, w1c, b1_2d, w2c, b2_2d)

    return out[:M].reshape(B, N, C_out)


def _reference(x, w1, b1, w2, b2):
    h = jnp.dot(x, w1) + b1
    h = 0.5 * h * (1.0 + jax.lax.erf(h / math.sqrt(2.0)))
    return jnp.dot(h, w2) + b2


if __name__ == "__main__":
    # Small shapes consistent with the module's forward:
    # batch=2, seq=8, in_features=32, hidden_features=64, out_features=32
    B, N = 2, 8
    in_features, hidden_features, out_features = 32, 64, 32

    key = jax.random.PRNGKey(0)
    kx, kw1, kb1, kw2, kb2 = jax.random.split(key, 5)

    x = jax.random.normal(kx, (B, N, in_features), dtype=jnp.float32)

    bound1 = 1.0 / math.sqrt(in_features)
    w1 = jax.random.uniform(kw1, (in_features, hidden_features),
                            minval=-bound1, maxval=bound1, dtype=jnp.float32)
    b1 = jax.random.uniform(kb1, (hidden_features,),
                            minval=-bound1, maxval=bound1, dtype=jnp.float32)
    bound2 = 1.0 / math.sqrt(hidden_features)
    w2 = jax.random.uniform(kw2, (hidden_features, out_features),
                            minval=-bound2, maxval=bound2, dtype=jnp.float32)
    b2 = jax.random.uniform(kb2, (out_features,),
                            minval=-bound2, maxval=bound2, dtype=jnp.float32)

    ref = _reference(x, w1, b1, w2, b2)

    # Exact f32 path: must match the reference tightly.
    out_f32 = jax.block_until_ready(
        mlp_pallas(x, w1, b1, w2, b2, compute_dtype=jnp.float32))
    assert out_f32.shape == (B, N, out_features)
    assert jnp.allclose(out_f32, ref, atol=1e-5, rtol=1e-5), "f32 mismatch vs reference"

    # Performance path: bf16 MXU inputs with f32 accumulation (loosened tolerance).
    out_bf16 = jax.block_until_ready(mlp_pallas(x, w1, b1, w2, b2))
    assert out_bf16.shape == (B, N, out_features)
    assert jnp.allclose(out_bf16, ref, atol=5e-2, rtol=5e-2), "bf16 mismatch vs reference"

    print("KERNEL_OK")
</pallas_src>

<mosaic_0001>
module attributes {stable_mosaic.version = 11 : i64} {
  func.func @_mlp_kernel(%arg0: i32, %arg1: memref<256x32xf32, #tpu.memory_space<vmem>>, %arg2: memref<32x64xf32, #tpu.memory_space<vmem>>, %arg3: memref<1x64xf32, #tpu.memory_space<vmem>>, %arg4: memref<64x32xf32, #tpu.memory_space<vmem>>, %arg5: memref<1x32xf32, #tpu.memory_space<vmem>>, %arg6: memref<256x32xf32, #tpu.memory_space<vmem>>) attributes {dimension_semantics = [#tpu.dimension_semantics<parallel>], iteration_bounds = array<i64: 1>, scalar_prefetch = 0 : i64, scratch_operands = 0 : i64, tpu.core_type = #tpu.core_type<tc>, window_params = [{transform_indices = @transform_0, window_bounds = array<i64: 256, 32>}, {pipeline_mode = #tpu.pipeline_mode<synchronous>, transform_indices = @transform_1, window_bounds = array<i64: 32, 64>}, {pipeline_mode = #tpu.pipeline_mode<synchronous>, transform_indices = @transform_2, window_bounds = array<i64: 1, 64>}, {pipeline_mode = #tpu.pipeline_mode<synchronous>, transform_indices = @transform_3, window_bounds = array<i64: 64, 32>}, {pipeline_mode = #tpu.pipeline_mode<synchronous>, transform_indices = @transform_4, window_bounds = array<i64: 1, 32>}, {transform_indices = @transform_5, window_bounds = array<i64: 256, 32>}]} {
    %c0 = arith.constant 0 : index
    %c0_0 = arith.constant 0 : index
    %0 = vector.load %arg1[%c0, %c0_0] : memref<256x32xf32, #tpu.memory_space<vmem>>, vector<256x32xf32>
    %c0_1 = arith.constant 0 : index
    %c0_2 = arith.constant 0 : index
    %1 = vector.load %arg2[%c0_1, %c0_2] : memref<32x64xf32, #tpu.memory_space<vmem>>, vector<32x64xf32>
    %cst = arith.constant dense<0.000000e+00> : vector<256x64xf32>
    %2 = tpu.matmul %0, %1, %cst {dimension_numbers = #tpu.dot_dimension_numbers<[1], [0], [0], [1], [0, 0, 1, 1], [], []>} : vector<256x32xf32>, vector<32x64xf32>, vector<256x64xf32> -> vector<256x64xf32>
    %c0_3 = arith.constant 0 : index
    %c0_4 = arith.constant 0 : index
    %3 = vector.load %arg3[%c0_3, %c0_4] : memref<1x64xf32, #tpu.memory_space<vmem>>, vector<1x64xf32>
    %4 = vector.broadcast %3 : vector<1x64xf32> to vector<256x64xf32>
    %5 = arith.addf %2, %4 : vector<256x64xf32>
    %cst_5 = arith.constant 5.000000e-01 : f32
    %6 = vector.broadcast %cst_5 : f32 to vector<256x64xf32>
    %7 = arith.mulf %6, %5 : vector<256x64xf32>
    %cst_6 = arith.constant 0.707106769 : f32
    %8 = vector.broadcast %cst_6 : f32 to vector<256x64xf32>
    %9 = arith.mulf %5, %8 : vector<256x64xf32>
    %10 = math.erf %9 : vector<256x64xf32>
    %cst_7 = arith.constant 1.000000e+00 : f32
    %11 = vector.broadcast %cst_7 : f32 to vector<256x64xf32>
    %12 = arith.addf %11, %10 : vector<256x64xf32>
    %13 = arith.mulf %7, %12 : vector<256x64xf32>
    %c0_8 = arith.constant 0 : index
    %c0_9 = arith.constant 0 : index
    %14 = vector.load %arg4[%c0_8, %c0_9] : memref<64x32xf32, #tpu.memory_space<vmem>>, vector<64x32xf32>
    %cst_10 = arith.constant dense<0.000000e+00> : vector<256x32xf32>
    %15 = tpu.matmul %13, %14, %cst_10 {dimension_numbers = #tpu.dot_dimension_numbers<[1], [0], [0], [1], [0, 0, 1, 1], [], []>} : vector<256x64xf32>, vector<64x32xf32>, vector<256x32xf32> -> vector<256x32xf32>
    %c0_11 = arith.constant 0 : index
    %c0_12 = arith.constant 0 : index
    %16 = vector.load %arg5[%c0_11, %c0_12] : memref<1x32xf32, #tpu.memory_space<vmem>>, vector<1x32xf32>
    %17 = vector.broadcast %16 : vector<1x32xf32> to vector<256x32xf32>
    %18 = arith.addf %15, %17 : vector<256x32xf32>
    %c0_13 = arith.constant 0 : index
    %c0_14 = arith.constant 0 : index
    %19 = vector.load %arg6[%c0_13, %c0_14] : memref<256x32xf32, #tpu.memory_space<vmem>>, vector<256x32xf32>
    tpu.vector_store %arg6[%c0_13, %c0_14], %18 {strides = array<i32>} : memref<256x32xf32, #tpu.memory_space<vmem>>, vector<256x32xf32>,
    return
  }
  func.func @transform_0(%arg0: i32) -> (i32, i32) {
    %c0_i32 = arith.constant 0 : i32
    %c0_i32_0 = arith.constant 0 : i32
    return %arg0, %c0_i32 : i32, i32
  }
  func.func @transform_1(%arg0: i32) -> (i32, i32) {
    %c0_i32 = arith.constant 0 : i32
    %c0_i32_0 = arith.constant 0 : i32
    %c0_i32_1 = arith.constant 0 : i32
    return %c0_i32, %c0_i32_0 : i32, i32
  }
  func.func @transform_2(%arg0: i32) -> (i32, i32) {
    %c0_i32 = arith.constant 0 : i32
    %c0_i32_0 = arith.constant 0 : i32
    %c0_i32_1 = arith.constant 0 : i32
    return %c0_i32, %c0_i32_0 : i32, i32
  }
  func.func @transform_3(%arg0: i32) -> (i32, i32) {
    %c0_i32 = arith.constant 0 : i32
    %c0_i32_0 = arith.constant 0 : i32
    %c0_i32_1 = arith.constant 0 : i32
    return %c0_i32, %c0_i32_0 : i32, i32
  }
  func.func @transform_4(%arg0: i32) -> (i32, i32) {
    %c0_i32 = arith.constant 0 : i32
    %c0_i32_0 = arith.constant 0 : i32
    %c0_i32_1 = arith.constant 0 : i32
    return %c0_i32, %c0_i32_0 : i32, i32
  }
  func.func @transform_5(%arg0: i32) -> (i32, i32) {
    %c0_i32 = arith.constant 0 : i32
    %c0_i32_0 = arith.constant 0 : i32
    return %arg0, %c0_i32 : i32, i32
  }
}

module attributes {stable_mosaic.version = 11 : i64} {
  func.func @_mlp_kernel(%arg0: i32, %arg1: memref<256x32xf32, #tpu.memory_space<vmem>>, %arg2: memref<32x64xf32, #tpu.memory_space<vmem>>, %arg3: memref<1x64xf32, #tpu.memory_space<vmem>>, %arg4: memref<64x32xf32, #tpu.memory_space<vmem>>, %arg5: memref<1x32xf32, #tpu.memory_space<vmem>>, %arg6: memref<256x32xf32, #tpu.memory_space<vmem>>) attributes {dimension_semantics = [#tpu.dimension_semantics<parallel>], iteration_bounds = array<i64: 1>, scalar_prefetch = 0 : i64, scratch_operands = 0 : i64, tpu.core_type = #tpu.core_type<tc>, window_params = [{transform_indices = @transform_0, window_bounds = array<i64: 256, 32>}, {pipeline_mode = #tpu.pipeline_mode<synchronous>, transform_indices = @transform_1, window_bounds = array<i64: 32, 64>}, {pipeline_mode = #tpu.pipeline_mode<synchronous>, transform_indices = @transform_2, window_bounds = array<i64: 1, 64>}, {pipeline_mode = #tpu.pipeline_mode<synchronous>, transform_indices = @transform_3, window_bounds = array<i64: 64, 32>}, {pipeline_mode = #tpu.pipeline_mode<synchronous>, transform_indices = @transform_4, window_bounds = array<i64: 1, 32>}, {transform_indices = @transform_5, window_bounds = array<i64: 256, 32>}]} {
    %c0 = arith.constant 0 : index
    %c0_0 = arith.constant 0 : index
    %0 = vector.load %arg1[%c0, %c0_0] : memref<256x32xf32, #tpu.memory_space<vmem>>, vector<256x32xf32>
    %c0_1 = arith.constant 0 : index
    %c0_2 = arith.constant 0 : index
    %1 = vector.load %arg2[%c0_1, %c0_2] : memref<32x64xf32, #tpu.memory_space<vmem>>, vector<32x64xf32>
    %cst = arith.constant dense<0.000000e+00> : vector<256x64xf32>
    %2 = tpu.matmul %0, %1, %cst {dimension_numbers = #tpu.dot_dimension_numbers<[1], [0], [0], [1], [0, 0, 1, 1], [], []>} : vector<256x32xf32>, vector<32x64xf32>, vector<256x64xf32> -> vector<256x64xf32>
    %c0_3 = arith.constant 0 : index
    %c0_4 = arith.constant 0 : index
    %3 = vector.load %arg3[%c0_3, %c0_4] : memref<1x64xf32, #tpu.memory_space<vmem>>, vector<1x64xf32>
    %4 = vector.broadcast %3 : vector<1x64xf32> to vector<256x64xf32>
    %5 = arith.addf %2, %4 : vector<256x64xf32>
    %cst_5 = arith.constant 5.000000e-01 : f32
    %6 = vector.broadcast %cst_5 : f32 to vector<256x64xf32>
    %7 = arith.mulf %6, %5 : vector<256x64xf32>
    %cst_6 = arith.constant 0.707106769 : f32
    %8 = vector.broadcast %cst_6 : f32 to vector<256x64xf32>
    %9 = arith.mulf %5, %8 : vector<256x64xf32>
    %10 = math.erf %9 : vector<256x64xf32>
    %cst_7 = arith.constant 1.000000e+00 : f32
    %11 = vector.broadcast %cst_7 : f32 to vector<256x64xf32>
    %12 = arith.addf %11, %10 : vector<256x64xf32>
    %13 = arith.mulf %7, %12 : vector<256x64xf32>
    %c0_8 = arith.constant 0 : index
    %c0_9 = arith.constant 0 : index
    %14 = vector.load %arg4[%c0_8, %c0_9] : memref<64x32xf32, #tpu.memory_space<vmem>>, vector<64x32xf32>
    %cst_10 = arith.constant dense<0.000000e+00> : vector<256x32xf32>
    %15 = tpu.matmul %13, %14, %cst_10 {dimension_numbers = #tpu.dot_dimension_numbers<[1], [0], [0], [1], [0, 0, 1, 1], [], []>} : vector<256x64xf32>, vector<64x32xf32>, vector<256x32xf32> -> vector<256x32xf32>
    %c0_11 = arith.constant 0 : index
    %c0_12 = arith.constant 0 : index
    %16 = vector.load %arg5[%c0_11, %c0_12] : memref<1x32xf32, #tpu.memory_space<vmem>>, vector<1x32xf32>
    %17 = vector.broadcast %16 : vector<1x32xf32> to vector<256x32xf32>
    %18 = arith.addf %15, %17 : vector<256x32xf32>
    %c0_13 = arith.constant 0 : index
    %c0_14 = arith.constant 0 : index
    %19 = vector.load %arg6[%c0_13, %c0_14] : memref<256x32xf32, #tpu.memory_space<vmem>>, vector<256x32xf32>
    tpu.vector_store %arg6[%c0_13, %c0_14], %18 {strides = array<i32>} : memref<256x32xf32, #tpu.memory_space<vmem>>, vector<256x32xf32>,
    return
  }
  func.func @transform_0(%arg0: i32) -> (i32, i32) {
    %c0_i32 = arith.constant 0 : i32
    %c0_i32_0 = arith.constant 0 : i32
    return %arg0, %c0_i32 : i32, i32
  }
  func.func @transform_1(%arg0: i32) -> (i32, i32) {
    %c0_i32 = arith.constant 0 : i32
    %c0_i32_0 = arith.constant 0 : i32
    %c0_i32_1 = arith.constant 0 : i32
    return %c0_i32, %c0_i32_0 : i32, i32
  }
  func.func @transform_2(%arg0: i32) -> (i32, i32) {
    %c0_i32 = arith.constant 0 : i32
    %c0_i32_0 = arith.constant 0 : i32
    %c0_i32_1 = arith.constant 0 : i32
    return %c0_i32, %c0_i32_0 : i32, i32
  }
  func.func @transform_3(%arg0: i32) -> (i32, i32) {
    %c0_i32 = arith.constant 0 : i32
    %c0_i32_0 = arith.constant 0 : i32
    %c0_i32_1 = arith.constant 0 : i32
    return %c0_i32, %c0_i32_0 : i32, i32
  }
  func.func @transform_4(%arg0: i32) -> (i32, i32) {
    %c0_i32 = arith.constant 0 : i32
    %c0_i32_0 = arith.constant 0 : i32
    %c0_i32_1 = arith.constant 0 : i32
    return %c0_i32, %c0_i32_0 : i32, i32
  }
  func.func @transform_5(%arg0: i32) -> (i32, i32) {
    %c0_i32 = arith.constant 0 : i32
    %c0_i32_0 = arith.constant 0 : i32
    return %arg0, %c0_i32 : i32, i32
  }
}

</mosaic_0001>

<llo_original>
// kernel: tpu_custom_call.1
$region0: #{tpu_custom_call.1}
  #allocation0 [shape = 'u32[]', space=smem, size = 0x4, offset = 0x4, fixed_abs, tag = 'smem constant byte address 0x4 - core index']
  #allocation1 [shape = 'u32[72,128]{1,0:T(1,128)}', space=vmem, size = 0x9000, scoped, tag = 'internal scratch']
  %s0 = inlined_call_operand.vmem [shape: f32[256,32], index: 0, kind: input, shape index: {}]
  %s1 = inlined_call_operand.vmem [shape: f32[32,64], index: 1, kind: input, shape index: {}]
  %s2 = inlined_call_operand.vmem [shape: f32[1,64], index: 2, kind: input, shape index: {}]
  %s3 = inlined_call_operand.vmem [shape: f32[64,32], index: 3, kind: input, shape index: {}]
  %s4 = inlined_call_operand.vmem [shape: f32[1,32], index: 4, kind: input, shape index: {}]
  %s5 = inlined_call_operand.vmem [shape: f32[256,32], index: 5, kind: output, shape index: {}]
  %s6 = sld [smem:[#allocation0]]
  $region30: #{tpu_custom_call.1} parent=0
    _
  %s8 = ssub.s32 1, %s6
  %s9 = scalar_select 0, %s8, %s6
  // Predicated region
  $region2: #{tpu_custom_call.1} parent=0 // pred_check
    _
  $region3: #{tpu_custom_call.1} parent=0 // pred_check_branch
    %11 = sbr.rel (0) target = $region5
  $region4: #{tpu_custom_call.1} parent=0 // pred_region
    _
  $region5: #{tpu_custom_call.1} parent=0 // pred_fallthru
    _
  // Predicated region
  $region6: #{tpu_custom_call.1} parent=0 // pred_check
    _
  $region7: #{tpu_custom_call.1} parent=0 // pred_check_branch
    %13 = sbr.rel (0) target = $region9
  $region8: #{tpu_custom_call.1} parent=0 // pred_region
    _
  $region9: #{tpu_custom_call.1} parent=0 // pred_fallthru
    _
  // Predicated region
  $region10: #{tpu_custom_call.1} parent=0 // pred_check
    _
  $region11: #{tpu_custom_call.1} parent=0 // pred_check_branch
    %15 = sbr.rel (0) target = $region13
  $region12: #{tpu_custom_call.1} parent=0 // pred_region
    _
  $region13: #{tpu_custom_call.1} parent=0 // pred_fallthru
    _
  // Predicated region
  $region14: #{tpu_custom_call.1} parent=0 // pred_check
    _
  $region15: #{tpu_custom_call.1} parent=0 // pred_check_branch
    %17 = sbr.rel (0) target = $region17
  $region16: #{tpu_custom_call.1} parent=0 // pred_region
    _
  $region17: #{tpu_custom_call.1} parent=0 // pred_fallthru
    _
  // Predicated region
  $region18: #{tpu_custom_call.1} parent=0 // pred_check
    _
  $region19: #{tpu_custom_call.1} parent=0 // pred_check_branch
    %19 = sbr.rel (0) target = $region21
  $region20: #{tpu_custom_call.1} parent=0 // pred_region
    _
  $region21: #{tpu_custom_call.1} parent=0 // pred_fallthru
    _
  %v20 = vld [vmem:[%s0] sm:$0xff]
  %v21 = vld [vmem:[%s0 + $0x8] sm:$0xff]
  %v22 = vld [vmem:[%s0 + $0x10] sm:$0xff]
  %v23 = vld [vmem:[%s0 + $0x18] sm:$0xff]
  %v24 = vld [vmem:[%s0 + $0x20] sm:$0xff]
  %v25 = vld [vmem:[%s0 + $0x28] sm:$0xff]
  %v26 = vld [vmem:[%s0 + $0x30] sm:$0xff]
  %v27 = vld [vmem:[%s0 + $0x38] sm:$0xff]
  %v28 = vld [vmem:[%s0 + $0x40] sm:$0xff]
  %v29 = vld [vmem:[%s0 + $0x48] sm:$0xff]
  %v30 = vld [vmem:[%s0 + $0x50] sm:$0xff]
  %v31 = vld [vmem:[%s0 + $0x58] sm:$0xff]
  %v32 = vld [vmem:[%s0 + $0x60] sm:$0xff]
  %v33 = vld [vmem:[%s0 + $0x68] sm:$0xff]
  %v34 = vld [vmem:[%s0 + $0x70] sm:$0xff]
  %v35 = vld [vmem:[%s0 + $0x78] sm:$0xff]
  %v36 = vld [vmem:[%s0 + $0x80] sm:$0xff]
  %v37 = vld [vmem:[%s0 + $0x88] sm:$0xff]
  %v38 = vld [vmem:[%s0 + $0x90] sm:$0xff]
  %v39 = vld [vmem:[%s0 + $0x98] sm:$0xff]
  %v40 = vld [vmem:[%s0 + $0xa0] sm:$0xff]
  %v41 = vld [vmem:[%s0 + $0xa8] sm:$0xff]
  %v42 = vld [vmem:[%s0 + $0xb0] sm:$0xff]
  %v43 = vld [vmem:[%s0 + $0xb8] sm:$0xff]
  %v44 = vld [vmem:[%s0 + $0xc0] sm:$0xff]
  %v45 = vld [vmem:[%s0 + $0xc8] sm:$0xff]
  %v46 = vld [vmem:[%s0 + $0xd0] sm:$0xff]
  %v47 = vld [vmem:[%s0 + $0xd8] sm:$0xff]
  %v48 = vld [vmem:[%s0 + $0xe0] sm:$0xff]
  %v49 = vld [vmem:[%s0 + $0xe8] sm:$0xff]
  %v50 = vld [vmem:[%s0 + $0xf0] sm:$0xff]
  %v51 = vld [vmem:[%s0 + $0xf8] sm:$0xff]
  %v52 = vld [vmem:[%s1] sm:$0xff]
  %v53 = vld [vmem:[%s1 + $0x8] sm:$0xff]
  %v54 = vld [vmem:[%s1 + $0x10] sm:$0xff]
  %v55 = vld [vmem:[%s1 + $0x18] sm:$0xff]
  %v56 = vld [vmem:[%s2] sm:$0x1]
  %v58 = vperm.slane %v56, 0
  %vm60 = vcmask 261120
  %v62 = vsel %vm60, %v20, 0
  %v65 = vsel %vm60, %v21, 0
  %v68 = vsel %vm60, %v22, 0
  %v71 = vsel %vm60, %v23, 0
  %v74 = vsel %vm60, %v24, 0
  %v77 = vsel %vm60, %v25, 0
  %v80 = vsel %vm60, %v26, 0
  %v83 = vsel %vm60, %v27, 0
  %v86 = vsel %vm60, %v28, 0
  %v89 = vsel %vm60, %v29, 0
  %v92 = vsel %vm60, %v30, 0
  %v95 = vsel %vm60, %v31, 0
  %v98 = vsel %vm60, %v32, 0
  %v101 = vsel %vm60, %v33, 0
  %v104 = vsel %vm60, %v34, 0
  %v107 = vsel %vm60, %v35, 0
  %v110 = vsel %vm60, %v36, 0
  %v113 = vsel %vm60, %v37, 0
  %v116 = vsel %vm60, %v38, 0
  %v119 = vsel %vm60, %v39, 0
  %v122 = vsel %vm60, %v40, 0
  %v125 = vsel %vm60, %v41, 0
  %v128 = vsel %vm60, %v42, 0
  %v131 = vsel %vm60, %v43, 0
  %v134 = vsel %vm60, %v44, 0
  %v137 = vsel %vm60, %v45, 0
  %v140 = vsel %vm60, %v46, 0
  %v143 = vsel %vm60, %v47, 0
  %v146 = vsel %vm60, %v48, 0
  %v149 = vsel %vm60, %v49, 0
  %v152 = vsel %vm60, %v50, 0
  %v155 = vsel %vm60, %v51, 0
  %157 = vmatpush.msra.mxu0 0.0
  %158 = vmatpush.msra.mxu0 0.0
  %159 = vmatpush.msra.mxu0 0.0
  %160 = vmatpush.msra.mxu0 0.0
  %161 = vmatpush.msra.mxu0 0.0
  %162 = vmatpush.msra.mxu0 0.0
  %163 = vmatpush.msra.mxu0 0.0
  %164 = vmatpush.msra.mxu0 0.0
  %165 = vmatpush.msra.mxu0 0.0
  %166 = vmatpush.msra.mxu0 0.0
  %167 = vmatpush.msra.mxu0 0.0
  %168 = vmatpush.msra.mxu0 0.0
  %169 = vmatpush.msra.mxu0 %v55
  %170 = vmatpush.msra.mxu0 %v54
  %171 = vmatpush.msra.mxu0 %v53
  %172 = vmatpush.msra.mxu0 %v52
  %173 = vmatmul.f32.gmra.mxu0 %v62
  %v174 = vpop.f32.mrf.mxu0
  %v175 = vadd.f32 %v58, %v174
  %176 = vmatmul.f32.gmra.mxu0 %v65
  %v177 = vpop.f32.mrf.mxu0
  %v178 = vadd.f32 %v58, %v177
  %179 = vmatmul.f32.gmra.mxu0 %v68
  %v180 = vpop.f32.mrf.mxu0
  %v181 = vadd.f32 %v58, %v180
  %182 = vmatmul.f32.gmra.mxu0 %v71
  %v183 = vpop.f32.mrf.mxu0
  %v184 = vadd.f32 %v58, %v183
  %185 = vmatmul.f32.gmra.mxu0 %v74
  %v186 = vpop.f32.mrf.mxu0
  %v187 = vadd.f32 %v58, %v186
  %188 = vmatmul.f32.gmra.mxu0 %v77
  %v189 = vpop.f32.mrf.mxu0
  %v190 = vadd.f32 %v58, %v189
  %191 = vmatmul.f32.gmra.mxu0 %v80
  %v192 = vpop.f32.mrf.mxu0
  %v193 = vadd.f32 %v58, %v192
  %194 = vmatmul.f32.gmra.mxu0 %v83
  %v195 = vpop.f32.mrf.mxu0
  %v196 = vadd.f32 %v58, %v195
  %197 = vmatmul.f32.gmra.mxu0 %v86
  %v198 = vpop.f32.mrf.mxu0
  %v199 = vadd.f32 %v58, %v198
  %200 = vmatmul.f32.gmra.mxu0 %v89
  %v201 = vpop.f32.mrf.mxu0
  %v202 = vadd.f32 %v58, %v201
  %203 = vmatmul.f32.gmra.mxu0 %v92
  %v204 = vpop.f32.mrf.mxu0
  %v205 = vadd.f32 %v58, %v204
  %206 = vmatmul.f32.gmra.mxu0 %v95
  %v207 = vpop.f32.mrf.mxu0
  %v208 = vadd.f32 %v58, %v207
  %209 = vmatmul.f32.gmra.mxu0 %v98
  %v210 = vpop.f32.mrf.mxu0
  %v211 = vadd.f32 %v58, %v210
  %212 = vmatmul.f32.gmra.mxu0 %v101
  %v213 = vpop.f32.mrf.mxu0
  %v214 = vadd.f32 %v58, %v213
  %215 = vmatmul.f32.gmra.mxu0 %v104
  %v216 = vpop.f32.mrf.mxu0
  %v217 = vadd.f32 %v58, %v216
  %218 = vmatmul.f32.gmra.mxu0 %v107
  %v219 = vpop.f32.mrf.mxu0
  %v220 = vadd.f32 %v58, %v219
  %221 = vmatmul.f32.gmra.mxu0 %v110
  %v222 = vpop.f32.mrf.mxu0
  %v223 = vadd.f32 %v58, %v222
  %224 = vmatmul.f32.gmra.mxu0 %v113
  %v225 = vpop.f32.mrf.mxu0
  %v226 = vadd.f32 %v58, %v225
  %227 = vmatmul.f32.gmra.mxu0 %v116
  %v228 = vpop.f32.mrf.mxu0
  %v229 = vadd.f32 %v58, %v228
  %230 = vmatmul.f32.gmra.mxu0 %v119
  %v231 = vpop.f32.mrf.mxu0
  %v232 = vadd.f32 %v58, %v231
  %233 = vmatmul.f32.gmra.mxu0 %v122
  %v234 = vpop.f32.mrf.mxu0
  %v235 = vadd.f32 %v58, %v234
  %236 = vmatmul.f32.gmra.mxu0 %v125
  %v237 = vpop.f32.mrf.mxu0
  %v238 = vadd.f32 %v58, %v237
  %239 = vmatmul.f32.gmra.mxu0 %v128
  %v240 = vpop.f32.mrf.mxu0
  %v241 = vadd.f32 %v58, %v240
  %242 = vmatmul.f32.gmra.mxu0 %v131
  %v243 = vpop.f32.mrf.mxu0
  %v244 = vadd.f32 %v58, %v243
  %245 = vmatmul.f32.gmra.mxu0 %v134
  %v246 = vpop.f32.mrf.mxu0
  %v247 = vadd.f32 %v58, %v246
  %248 = vmatmul.f32.gmra.mxu0 %v137
  %v249 = vpop.f32.mrf.mxu0
  %v250 = vadd.f32 %v58, %v249
  %251 = vmatmul.f32.gmra.mxu0 %v140
  %v252 = vpop.f32.mrf.mxu0
  %v253 = vadd.f32 %v58, %v252
  %254 = vmatmul.f32.gmra.mxu0 %v143
  %v255 = vpop.f32.mrf.mxu0
  %v256 = vadd.f32 %v58, %v255
  %257 = vmatmul.f32.gmra.mxu0 %v146
  %v258 = vpop.f32.mrf.mxu0
  %v259 = vadd.f32 %v58, %v258
  %260 = vmatmul.f32.gmra.mxu0 %v149
  %v261 = vpop.f32.mrf.mxu0
  %v262 = vadd.f32 %v58, %v261
  %263 = vmatmul.f32.gmra.mxu0 %v152
  %v264 = vpop.f32.mrf.mxu0
  %v265 = vadd.f32 %v58, %v264
  %266 = vmatmul.f32.gmra.mxu0 %v155
  %v267 = vpop.f32.mrf.mxu0
  %v268 = vadd.f32 %v58, %v267
  %269 = vdwg.mxu0
  %v270 = vmul.f32 %v175, 0.5
  %v271 = vmul.f32 %v178, 0.5
  %v272 = vmul.f32 %v181, 0.5
  %v273 = vmul.f32 %v184, 0.5
  %v274 = vmul.f32 %v187, 0.5
  %v275 = vmul.f32 %v190, 0.5
  %v276 = vmul.f32 %v193, 0.5
  %v277 = vmul.f32 %v196, 0.5
  %v278 = vmul.f32 %v199, 0.5
  %v279 = vmul.f32 %v202, 0.5
  %v280 = vmul.f32 %v205, 0.5
  %v281 = vmul.f32 %v208, 0.5
  %v282 = vmul.f32 %v211, 0.5
  %v283 = vmul.f32 %v214, 0.5
  %v284 = vmul.f32 %v217, 0.5
  %v285 = vmul.f32 %v220, 0.5
  %v286 = vmul.f32 %v223, 0.5
  %v287 = vmul.f32 %v226, 0.5
  %v288 = vmul.f32 %v229, 0.5
  %v289 = vmul.f32 %v232, 0.5
  %v290 = vmul.f32 %v235, 0.5
  %v291 = vmul.f32 %v238, 0.5
  %v292 = vmul.f32 %v241, 0.5
  %v293 = vmul.f32 %v244, 0.5
  %v294 = vmul.f32 %v247, 0.5
  %v295 = vmul.f32 %v250, 0.5
  %v296 = vmul.f32 %v253, 0.5
  %v297 = vmul.f32 %v256, 0.5
  %v298 = vmul.f32 %v259, 0.5
  %v299 = vmul.f32 %v262, 0.5
  %v300 = vmul.f32 %v265, 0.5
  %v301 = vmul.f32 %v268, 0.5
  %v302 = vmul.f32 %v175, 0.70710677
  %v303 = vmul.f32 %v178, 0.70710677
  %v304 = vmul.f32 %v181, 0.70710677
  %v305 = vmul.f32 %v184, 0.70710677
  %v306 = vmul.f32 %v187, 0.70710677
  %v307 = vmul.f32 %v190, 0.70710677
  %v308 = vmul.f32 %v193, 0.70710677
  %v309 = vmul.f32 %v196, 0.70710677
  %v310 = vmul.f32 %v199, 0.70710677
  %v311 = vmul.f32 %v202, 0.70710677
  %v312 = vmul.f32 %v205, 0.70710677
  %v313 = vmul.f32 %v208, 0.70710677
  %v314 = vmul.f32 %v211, 0.70710677
  %v315 = vmul.f32 %v214, 0.70710677
  %v316 = vmul.f32 %v217, 0.70710677
  %v317 = vmul.f32 %v220, 0.70710677
  %v318 = vmul.f32 %v223, 0.70710677
  %v319 = vmul.f32 %v226, 0.70710677
  %v320 = vmul.f32 %v229, 0.70710677
  %v321 = vmul.f32 %v232, 0.70710677
  %v322 = vmul.f32 %v235, 0.70710677
  %v323 = vmul.f32 %v238, 0.70710677
  %v324 = vmul.f32 %v241, 0.70710677
  %v325 = vmul.f32 %v244, 0.70710677
  %v326 = vmul.f32 %v247, 0.70710677
  %v327 = vmul.f32 %v250, 0.70710677
  %v328 = vmul.f32 %v253, 0.70710677
  %v329 = vmul.f32 %v256, 0.70710677
  %v330 = vmul.f32 %v259, 0.70710677
  %v331 = vmul.f32 %v262, 0.70710677
  %v332 = vmul.f32 %v265, 0.70710677
  %v333 = vmul.f32 %v268, 0.70710677
  %v334 = vmul.f32 %v302, %v302
  %v335 = vmin.f32 16.0, %v334
  %v336 = vmul.f32 %v335, 2.1237322e-06
  %v337 = vadd.f32 %v336, 0.00028619796
  %v338 = vmul.f32 %v335, %v337
  %v339 = vadd.f32 %v338, 0.0036580483
  %v340 = vmul.f32 %v335, %v339
  %v341 = vadd.f32 %v340, 0.05243302
  %v342 = vmul.f32 %v335, %v341
  %v343 = vadd.f32 %v342, 0.18741608
  %v344 = vmul.f32 %v335, %v343
  %v345 = vadd.f32 %v344, 1.1283791
  %v346 = vmul.f32 %v302, %v345
  %v347 = vmul.f32 %v335, 3.8918573e-05
  %v348 = vadd.f32 %v347, 0.001143296
  %v349 = vmul.f32 %v335, %v348
  %v350 = vadd.f32 %v349, 0.014752088
  %v351 = vmul.f32 %v335, %v350
  %v352 = vadd.f32 %v351, 0.112945676
  %v353 = vmul.f32 %v335, %v352
  %v354 = vadd.f32 %v353, 0.4994258
  %v355 = vmul.f32 %v335, %v354
  %v356 = vadd.f32 %v355, 1.0
  %v357 = vrcp.pop %v356
  %v358 = vmul.f32 %v356, %v357
  %v359 = vsub.f32 1.0, %v358
  %v360 = vmul.f32 %v357, %v359
  %v361 = vadd.f32 %v357, %v360
  %vm362 = vweird.f32 %v356
  %vm363 = vweird.f32 %v357
  %vm364 = vmor %vm362, %vm363
  %v365 = vsel %vm364, %v357, %v361
  %v366 = vand.u32 2147483647, %v356
  %vm367 = vcmp.eq.f32.partialorder %v366, 8.507059e+37
  %v368 = vand.u32 %v356, 2147483648
  %v369 = vor.u32 1.1754944e-38, %v368
  %v370 = vsel %vm367, %v369, %v365
  %v371 = vmul.f32 %v346, %v370
  %v372 = vmin.f32 %v371, 1.0
  %v373 = vmax.f32 %v372, -1.0
  %v374 = vmul.f32 %v303, %v303
  %v375 = vmin.f32 16.0, %v374
  %v376 = vmul.f32 %v375, 2.1237322e-06
  %v377 = vadd.f32 %v376, 0.00028619796
  %v378 = vmul.f32 %v375, %v377
  %v379 = vadd.f32 %v378, 0.0036580483
  %v380 = vmul.f32 %v375, %v379
  %v381 = vadd.f32 %v380, 0.05243302
  %v382 = vmul.f32 %v375, %v381
  %v383 = vadd.f32 %v382, 0.18741608
  %v384 = vmul.f32 %v375, %v383
  %v385 = vadd.f32 %v384, 1.1283791
  %v386 = vmul.f32 %v303, %v385
  %v387 = vmul.f32 %v375, 3.8918573e-05
  %v388 = vadd.f32 %v387, 0.001143296
  %v389 = vmul.f32 %v375, %v388
  %v390 = vadd.f32 %v389, 0.014752088
  %v391 = vmul.f32 %v375, %v390
  %v392 = vadd.f32 %v391, 0.112945676
  %v393 = vmul.f32 %v375, %v392
  %v394 = vadd.f32 %v393, 0.4994258
  %v395 = vmul.f32 %v375, %v394
  %v396 = vadd.f32 %v395, 1.0
  %v397 = vrcp.pop %v396
  %v398 = vmul.f32 %v396, %v397
  %v399 = vsub.f32 1.0, %v398
  %v400 = vmul.f32 %v397, %v399
  %v401 = vadd.f32 %v397, %v400
  %vm402 = vweird.f32 %v396
  %vm403 = vweird.f32 %v397
  %vm404 = vmor %vm402, %vm403
  %v405 = vsel %vm404, %v397, %v401
  %v406 = vand.u32 2147483647, %v396
  %vm407 = vcmp.eq.f32.partialorder %v406, 8.507059e+37
  %v408 = vand.u32 %v396, 2147483648
  %v409 = vor.u32 1.1754944e-38, %v408
  %v410 = vsel %vm407, %v409, %v405
  %v411 = vmul.f32 %v386, %v410
  %v412 = vmin.f32 %v411, 1.0
  %v413 = vmax.f32 %v412, -1.0
  %v414 = vmul.f32 %v304, %v304
  %v415 = vmin.f32 16.0, %v414
  %v416 = vmul.f32 %v415, 2.1237322e-06
  %v417 = vadd.f32 %v416, 0.00028619796
  %v418 = vmul.f32 %v415, %v417
  %v419 = vadd.f32 %v418, 0.0036580483
  %v420 = vmul.f32 %v415, %v419
  %v421 = vadd.f32 %v420, 0.05243302
  %v422 = vmul.f32 %v415, %v421
  %v423 = vadd.f32 %v422, 0.18741608
  %v424 = vmul.f32 %v415, %v423
  %v425 = vadd.f32 %v424, 1.1283791
  %v426 = vmul.f32 %v304, %v425
  %v427 = vmul.f32 %v415, 3.8918573e-05
  %v428 = vadd.f32 %v427, 0.001143296
  %v429 = vmul.f32 %v415, %v428
  %v430 = vadd.f32 %v429, 0.014752088
  %v431 = vmul.f32 %v415, %v430
  %v432 = vadd.f32 %v431, 0.112945676
  %v433 = vmul.f32 %v415, %v432
  %v434 = vadd.f32 %v433, 0.4994258
  %v435 = vmul.f32 %v415, %v434
  %v436 = vadd.f32 %v435, 1.0
  %v437 = vrcp.pop %v436
  %v438 = vmul.f32 %v436, %v437
  %v439 = vsub.f32 1.0, %v438
  %v440 = vmul.f32 %v437, %v439
  %v441 = vadd.f32 %v437, %v440
  %vm442 = vweird.f32 %v436
  %vm443 = vweird.f32 %v437
  %vm444 = vmor %vm442, %vm443
  %v445 = vsel %vm444, %v437, %v441
  %v446 = vand.u32 2147483647, %v436
  %vm447 = vcmp.eq.f32.partialorder %v446, 8.507059e+37
  %v448 = vand.u32 %v436, 2147483648
  %v449 = vor.u32 1.1754944e-38, %v448
  %v450 = vsel %vm447, %v449, %v445
  %v451 = vmul.f32 %v426, %v450
  %v452 = vmin.f32 %v451, 1.0
  %v453 = vmax.f32 %v452, -1.0
  %v454 = vmul.f32 %v305, %v305
  %v455 = vmin.f32 16.0, %v454
  %v456 = vmul.f32 %v455, 2.1237322e-06
  %v457 = vadd.f32 %v456, 0.00028619796
  %v458 = vmul.f32 %v455, %v457
  %v459 = vadd.f32 %v458, 0.0036580483
  %v460 = vmul.f32 %v455, %v459
  %v461 = vadd.f32 %v460, 0.05243302
  %v462 = vmul.f32 %v455, %v461
  %v463 = vadd.f32 %v462, 0.18741608
  %v464 = vmul.f32 %v455, %v463
  %v465 = vadd.f32 %v464, 1.1283791
  %v466 = vmul.f32 %v305, %v465
  %v467 = vmul.f32 %v455, 3.8918573e-05
  %v468 = vadd.f32 %v467, 0.001143296
  %v469 = vmul.f32 %v455, %v468
  %v470 = vadd.f32 %v469, 0.014752088
  %v471 = vmul.f32 %v455, %v470
  %v472 = vadd.f32 %v471, 0.112945676
  %v473 = vmul.f32 %v455, %v472
  %v474 = vadd.f32 %v473, 0.4994258
  %v475 = vmul.f32 %v455, %v474
  %v476 = vadd.f32 %v475, 1.0
  %v477 = vrcp.pop %v476
  %v478 = vmul.f32 %v476, %v477
  %v479 = vsub.f32 1.0, %v478
  %v480 = vmul.f32 %v477, %v479
  %v481 = vadd.f32 %v477, %v480
  %vm482 = vweird.f32 %v476
  %vm483 = vweird.f32 %v477
  %vm484 = vmor %vm482, %vm483
  %v485 = vsel %vm484, %v477, %v481
  %v486 = vand.u32 2147483647, %v476
  %vm487 = vcmp.eq.f32.partialorder %v486, 8.507059e+37
  %v488 = vand.u32 %v476, 2147483648
  %v489 = vor.u32 1.1754944e-38, %v488
  %v490 = vsel %vm487, %v489, %v485
  %v491 = vmul.f32 %v466, %v490
  %v492 = vmin.f32 %v491, 1.0
  %v493 = vmax.f32 %v492, -1.0
  %v494 = vmul.f32 %v306, %v306
  %v495 = vmin.f32 16.0, %v494
  %v496 = vmul.f32 %v495, 2.1237322e-06
  %v497 = vadd.f32 %v496, 0.00028619796
  %v498 = vmul.f32 %v495, %v497
  %v499 = vadd.f32 %v498, 0.0036580483
  %v500 = vmul.f32 %v495, %v499
  %v501 = vadd.f32 %v500, 0.05243302
  %v502 = vmul.f32 %v495, %v501
  %v503 = vadd.f32 %v502, 0.18741608
  %v504 = vmul.f32 %v495, %v503
  %v505 = vadd.f32 %v504, 1.1283791
  %v506 = vmul.f32 %v306, %v505
  %v507 = vmul.f32 %v495, 3.8918573e-05
  %v508 = vadd.f32 %v507, 0.001143296
  %v509 = vmul.f32 %v495, %v508
  %v510 = vadd.f32 %v509, 0.014752088
  %v511 = vmul.f32 %v495, %v510
  %v512 = vadd.f32 %v511, 0.112945676
  %v513 = vmul.f32 %v495, %v512
  %v514 = vadd.f32 %v513, 0.4994258
  %v515 = vmul.f32 %v495, %v514
  %v516 = vadd.f32 %v515, 1.0
  %v517 = vrcp.pop %v516
  %v518 = vmul.f32 %v516, %v517
  %v519 = vsub.f32 1.0, %v518
  %v520 = vmul.f32 %v517, %v519
  %v521 = vadd.f32 %v517, %v520
  %vm522 = vweird.f32 %v516
  %vm523 = vweird.f32 %v517
  %vm524 = vmor %vm522, %vm523
  %v525 = vsel %vm524, %v517, %v521
  %v526 = vand.u32 2147483647, %v516
  %vm527 = vcmp.eq.f32.partialorder %v526, 8.507059e+37
  %v528 = vand.u32 %v516, 2147483648
  %v529 = vor.u32 1.1754944e-38, %v528
  %v530 = vsel %vm527, %v529, %v525
  %v531 = vmul.f32 %v506, %v530
  %v532 = vmin.f32 %v531, 1.0
  %v533 = vmax.f32 %v532, -1.0
  %v534 = vmul.f32 %v307, %v307
  %v535 = vmin.f32 16.0, %v534
  %v536 = vmul.f32 %v535, 2.1237322e-06
  %v537 = vadd.f32 %v536, 0.00028619796
  %v538 = vmul.f32 %v535, %v537
  %v539 = vadd.f32 %v538, 0.0036580483
  %v540 = vmul.f32 %v535, %v539
  %v541 = vadd.f32 %v540, 0.05243302
  %v542 = vmul.f32 %v535, %v541
  %v543 = vadd.f32 %v542, 0.18741608
  %v544 = vmul.f32 %v535, %v543
  %v545 = vadd.f32 %v544, 1.1283791
  %v546 = vmul.f32 %v307, %v545
  %v547 = vmul.f32 %v535, 3.8918573e-05
  %v548 = vadd.f32 %v547, 0.001143296
  %v549 = vmul.f32 %v535, %v548
  %v550 = vadd.f32 %v549, 0.014752088
  %v551 = vmul.f32 %v535, %v550
  %v552 = vadd.f32 %v551, 0.112945676
  %v553 = vmul.f32 %v535, %v552
  %v554 = vadd.f32 %v553, 0.4994258
  %v555 = vmul.f32 %v535, %v554
  %v556 = vadd.f32 %v555, 1.0
  %v557 = vrcp.pop %v556
  %v558 = vmul.f32 %v556, %v557
  %v559 = vsub.f32 1.0, %v558
  %v560 = vmul.f32 %v557, %v559
  %v561 = vadd.f32 %v557, %v560
  %vm562 = vweird.f32 %v556
  %vm563 = vweird.f32 %v557
  %vm564 = vmor %vm562, %vm563
  %v565 = vsel %vm564, %v557, %v561
  %v566 = vand.u32 2147483647, %v556
  %vm567 = vcmp.eq.f32.partialorder %v566, 8.507059e+37
  %v568 = vand.u32 %v556, 2147483648
  %v569 = vor.u32 1.1754944e-38, %v568
  %v570 = vsel %vm567, %v569, %v565
  %v571 = vmul.f32 %v546, %v570
  %v572 = vmin.f32 %v571, 1.0
  %v573 = vmax.f32 %v572, -1.0
  %v574 = vmul.f32 %v308, %v308
  %v575 = vmin.f32 16.0, %v574
  %v576 = vmul.f32 %v575, 2.1237322e-06
  %v577 = vadd.f32 %v576, 0.00028619796
  %v578 = vmul.f32 %v575, %v577
  %v579 = vadd.f32 %v578, 0.0036580483
  %v580 = vmul.f32 %v575, %v579
  %v581 = vadd.f32 %v580, 0.05243302
  %v582 = vmul.f32 %v575, %v581
  %v583 = vadd.f32 %v582, 0.18741608
  %v584 = vmul.f32 %v575, %v583
  %v585 = vadd.f32 %v584, 1.1283791
  %v586 = vmul.f32 %v308, %v585
  %v587 = vmul.f32 %v575, 3.8918573e-05
  %v588 = vadd.f32 %v587, 0.001143296
  %v589 = vmul.f32 %v575, %v588
  %v590 = vadd.f32 %v589, 0.014752088
  %v591 = vmul.f32 %v575, %v590
  %v592 = vadd.f32 %v591, 0.112945676
  %v593 = vmul.f32 %v575, %v592
  %v594 = vadd.f32 %v593, 0.4994258
  %v595 = vmul.f32 %v575, %v594
  %v596 = vadd.f32 %v595, 1.0
  %v597 = vrcp.pop %v596
  %v598 = vmul.f32 %v596, %v597
  %v599 = vsub.f32 1.0, %v598
  %v600 = vmul.f32 %v597, %v599
  %v601 = vadd.f32 %v597, %v600
  %vm602 = vweird.f32 %v596
  %vm603 = vweird.f32 %v597
  %vm604 = vmor %vm602, %vm603
  %v605 = vsel %vm604, %v597, %v601
  %v606 = vand.u32 2147483647, %v596
  %vm607 = vcmp.eq.f32.partialorder %v606, 8.507059e+37
  %v608 = vand.u32 %v596, 2147483648
  %v609 = vor.u32 1.1754944e-38, %v608
  %v610 = vsel %vm607, %v609, %v605
  %v611 = vmul.f32 %v586, %v610
  %v612 = vmin.f32 %v611, 1.0
  %v613 = vmax.f32 %v612, -1.0
  %v614 = vmul.f32 %v309, %v309
  %v615 = vmin.f32 16.0, %v614
  %v616 = vmul.f32 %v615, 2.1237322e-06
  %v617 = vadd.f32 %v616, 0.00028619796
  %v618 = vmul.f32 %v615, %v617
  %v619 = vadd.f32 %v618, 0.0036580483
  %v620 = vmul.f32 %v615, %v619
  %v621 = vadd.f32 %v620, 0.05243302
  %v622 = vmul.f32 %v615, %v621
  %v623 = vadd.f32 %v622, 0.18741608
  %v624 = vmul.f32 %v615, %v623
  %v625 = vadd.f32 %v624, 1.1283791
  %v626 = vmul.f32 %v309, %v625
  %v627 = vmul.f32 %v615, 3.8918573e-05
  %v628 = vadd.f32 %v627, 0.001143296
  %v629 = vmul.f32 %v615, %v628
  %v630 = vadd.f32 %v629, 0.014752088
  %v631 = vmul.f32 %v615, %v630
  %v632 = vadd.f32 %v631, 0.112945676
  %v633 = vmul.f32 %v615, %v632
  %v634 = vadd.f32 %v633, 0.4994258
  %v635 = vmul.f32 %v615, %v634
  %v636 = vadd.f32 %v635, 1.0
  %v637 = vrcp.pop %v636
  %v638 = vmul.f32 %v636, %v637
  %v639 = vsub.f32 1.0, %v638
  %v640 = vmul.f32 %v637, %v639
  %v641 = vadd.f32 %v637, %v640
  %vm642 = vweird.f32 %v636
  %vm643 = vweird.f32 %v637
  %vm644 = vmor %vm642, %vm643
  %v645 = vsel %vm644, %v637, %v641
  %v646 = vand.u32 2147483647, %v636
  %vm647 = vcmp.eq.f32.partialorder %v646, 8.507059e+37
  %v648 = vand.u32 %v636, 2147483648
  %v649 = vor.u32 1.1754944e-38, %v648
  %v650 = vsel %vm647, %v649, %v645
  %v651 = vmul.f32 %v626, %v650
  %v652 = vmin.f32 %v651, 1.0
  %v653 = vmax.f32 %v652, -1.0
  %v654 = vmul.f32 %v310, %v310
  %v655 = vmin.f32 16.0, %v654
  %v656 = vmul.f32 %v655, 2.1237322e-06
  %v657 = vadd.f32 %v656, 0.00028619796
  %v658 = vmul.f32 %v655, %v657
  %v659 = vadd.f32 %v658, 0.0036580483
  %v660 = vmul.f32 %v655, %v659
  %v661 = vadd.f32 %v660, 0.05243302
  %v662 = vmul.f32 %v655, %v661
  %v663 = vadd.f32 %v662, 0.18741608
  %v664 = vmul.f32 %v655, %v663
  %v665 = vadd.f32 %v664, 1.1283791
  %v666 = vmul.f32 %v310, %v665
  %v667 = vmul.f32 %v655, 3.8918573e-05
  %v668 = vadd.f32 %v667, 0.001143296
  %v669 = vmul.f32 %v655, %v668
  %v670 = vadd.f32 %v669, 0.014752088
  %v671 = vmul.f32 %v655, %v670
  %v672 = vadd.f32 %v671, 0.112945676
  %v673 = vmul.f32 %v655, %v672
  %v674 = vadd.f32 %v673, 0.4994258
  %v675 = vmul.f32 %v655, %v674
  %v676 = vadd.f32 %v675, 1.0
  %v677 = vrcp.pop %v676
  %v678 = vmul.f32 %v676, %v677
  %v679 = vsub.f32 1.0, %v678
  %v680 = vmul.f32 %v677, %v679
  %v681 = vadd.f32 %v677, %v680
  %vm682 = vweird.f32 %v676
  %vm683 = vweird.f32 %v677
  %vm684 = vmor %vm682, %vm683
  %v685 = vsel %vm684, %v677, %v681
  %v686 = vand.u32 2147483647, %v676
  %vm687 = vcmp.eq.f32.partialorder %v686, 8.507059e+37
  %v688 = vand.u32 %v676, 2147483648
  %v689 = vor.u32 1.1754944e-38, %v688
  %v690 = vsel %vm687, %v689, %v685
  %v691 = vmul.f32 %v666, %v690
  %v692 = vmin.f32 %v691, 1.0
  %v693 = vmax.f32 %v692, -1.0
  %v694 = vmul.f32 %v311, %v311
  %v695 = vmin.f32 16.0, %v694
  %v696 = vmul.f32 %v695, 2.1237322e-06
  %v697 = vadd.f32 %v696, 0.00028619796
  %v698 = vmul.f32 %v695, %v697
  %v699 = vadd.f32 %v698, 0.0036580483
  %v700 = vmul.f32 %v695, %v699
  %v701 = vadd.f32 %v700, 0.05243302
  %v702 = vmul.f32 %v695, %v701
  %v703 = vadd.f32 %v702, 0.18741608
  %v704 = vmul.f32 %v695, %v703
  %v705 = vadd.f32 %v704, 1.1283791
  %v706 = vmul.f32 %v311, %v705
  %v707 = vmul.f32 %v695, 3.8918573e-05
  %v708 = vadd.f32 %v707, 0.001143296
  %v709 = vmul.f32 %v695, %v708
  %v710 = vadd.f32 %v709, 0.014752088
  %v711 = vmul.f32 %v695, %v710
  %v712 = vadd.f32 %v711, 0.112945676
  %v713 = vmul.f32 %v695, %v712
  %v714 = vadd.f32 %v713, 0.4994258
  %v715 = vmul.f32 %v695, %v714
  %v716 = vadd.f32 %v715, 1.0
  %v717 = vrcp.pop %v716
  %v718 = vmul.f32 %v716, %v717
  %v719 = vsub.f32 1.0, %v718
  %v720 = vmul.f32 %v717, %v719
  %v721 = vadd.f32 %v717, %v720
  %vm722 = vweird.f32 %v716
  %vm723 = vweird.f32 %v717
  %vm724 = vmor %vm722, %vm723
  %v725 = vsel %vm724, %v717, %v721
  %v726 = vand.u32 2147483647, %v716
  %vm727 = vcmp.eq.f32.partialorder %v726, 8.507059e+37
  %v728 = vand.u32 %v716, 2147483648
  %v729 = vor.u32 1.1754944e-38, %v728
  %v730 = vsel %vm727, %v729, %v725
  %v731 = vmul.f32 %v706, %v730
  %v732 = vmin.f32 %v731, 1.0
  %v733 = vmax.f32 %v732, -1.0
  %v734 = vmul.f32 %v312, %v312
  %v735 = vmin.f32 16.0, %v734
  %v736 = vmul.f32 %v735, 2.1237322e-06
  %v737 = vadd.f32 %v736, 0.00028619796
  %v738 = vmul.f32 %v735, %v737
  %v739 = vadd.f32 %v738, 0.0036580483
  %v740 = vmul.f32 %v735, %v739
  %v741 = vadd.f32 %v740, 0.05243302
  %v742 = vmul.f32 %v735, %v741
  %v743 = vadd.f32 %v742, 0.18741608
  %v744 = vmul.f32 %v735, %v743
  %v745 = vadd.f32 %v744, 1.1283791
  %v746 = vmul.f32 %v312, %v745
  %v747 = vmul.f32 %v735, 3.8918573e-05
  %v748 = vadd.f32 %v747, 0.001143296
  %v749 = vmul.f32 %v735, %v748
  %v750 = vadd.f32 %v749, 0.014752088
  %v751 = vmul.f32 %v735, %v750
  %v752 = vadd.f32 %v751, 0.112945676
  %v753 = vmul.f32 %v735, %v752
  %v754 = vadd.f32 %v753, 0.4994258
  %v755 = vmul.f32 %v735, %v754
  %v756 = vadd.f32 %v755, 1.0
  %v757 = vrcp.pop %v756
  %v758 = vmul.f32 %v756, %v757
  %v759 = vsub.f32 1.0, %v758
  %v760 = vmul.f32 %v757, %v759
  %v761 = vadd.f32 %v757, %v760
  %vm762 = vweird.f32 %v756
  %vm763 = vweird.f32 %v757
  %vm764 = vmor %vm762, %vm763
  %v765 = vsel %vm764, %v757, %v761
  %v766 = vand.u32 2147483647, %v756
  %vm767 = vcmp.eq.f32.partialorder %v766, 8.507059e+37
  %v768 = vand.u32 %v756, 2147483648
  %v769 = vor.u32 1.1754944e-38, %v768
  %v770 = vsel %vm767, %v769, %v765
  %v771 = vmul.f32 %v746, %v770
  %v772 = vmin.f32 %v771, 1.0
  %v773 = vmax.f32 %v772, -1.0
  %v774 = vmul.f32 %v313, %v313
  %v775 = vmin.f32 16.0, %v774
  %v776 = vmul.f32 %v775, 2.1237322e-06
  %v777 = vadd.f32 %v776, 0.00028619796
  %v778 = vmul.f32 %v775, %v777
  %v779 = vadd.f32 %v778, 0.0036580483
  %v780 = vmul.f32 %v775, %v779
  %v781 = vadd.f32 %v780, 0.05243302
  %v782 = vmul.f32 %v775, %v781
  %v783 = vadd.f32 %v782, 0.18741608
  %v784 = vmul.f32 %v775, %v783
  %v785 = vadd.f32 %v784, 1.1283791
  %v786 = vmul.f32 %v313, %v785
  %v787 = vmul.f32 %v775, 3.8918573e-05
  %v788 = vadd.f32 %v787, 0.001143296
  %v789 = vmul.f32 %v775, %v788
  %v790 = vadd.f32 %v789, 0.014752088
  %v791 = vmul.f32 %v775, %v790
  %v792 = vadd.f32 %v791, 0.112945676
  %v793 = vmul.f32 %v775, %v792
  %v794 = vadd.f32 %v793, 0.4994258
  %v795 = vmul.f32 %v775, %v794
  %v796 = vadd.f32 %v795, 1.0
  %v797 = vrcp.pop %v796
  %v798 = vmul.f32 %v796, %v797
  %v799 = vsub.f32 1.0, %v798
  %v800 = vmul.f32 %v797, %v799
  %v801 = vadd.f32 %v797, %v800
  %vm802 = vweird.f32 %v796
  %vm803 = vweird.f32 %v797
  %vm804 = vmor %vm802, %vm803
  %v805 = vsel %vm804, %v797, %v801
  %v806 = vand.u32 2147483647, %v796
  %vm807 = vcmp.eq.f32.partialorder %v806, 8.507059e+37
  %v808 = vand.u32 %v796, 2147483648
  %v809 = vor.u32 1.1754944e-38, %v808
  %v810 = vsel %vm807, %v809, %v805
  %v811 = vmul.f32 %v786, %v810
  %v812 = vmin.f32 %v811, 1.0
  %v813 = vmax.f32 %v812, -1.0
  %v814 = vmul.f32 %v314, %v314
  %v815 = vmin.f32 16.0, %v814
  %v816 = vmul.f32 %v815, 2.1237322e-06
  %v817 = vadd.f32 %v816, 0.00028619796
  %v818 = vmul.f32 %v815, %v817
  %v819 = vadd.f32 %v818, 0.0036580483
  %v820 = vmul.f32 %v815, %v819
  %v821 = vadd.f32 %v820, 0.05243302
  %v822 = vmul.f32 %v815, %v821
  %v823 = vadd.f32 %v822, 0.18741608
  %v824 = vmul.f32 %v815, %v823
  %v825 = vadd.f32 %v824, 1.1283791
  %v826 = vmul.f32 %v314, %v825
  %v827 = vmul.f32 %v815, 3.8918573e-05
  %v828 = vadd.f32 %v827, 0.001143296
  %v829 = vmul.f32 %v815, %v828
  %v830 = vadd.f32 %v829, 0.014752088
  %v831 = vmul.f32 %v815, %v830
  %v832 = vadd.f32 %v831, 0.112945676
  %v833 = vmul.f32 %v815, %v832
  %v834 = vadd.f32 %v833, 0.4994258
  %v835 = vmul.f32 %v815, %v834
  %v836 = vadd.f32 %v835, 1.0
  %v837 = vrcp.pop %v836
  %v838 = vmul.f32 %v836, %v837
  %v839 = vsub.f32 1.0, %v838
  %v840 = vmul.f32 %v837, %v839
  %v841 = vadd.f32 %v837, %v840
  %vm842 = vweird.f32 %v836
  %vm843 = vweird.f32 %v837
  %vm844 = vmor %vm842, %vm843
  %v845 = vsel %vm844, %v837, %v841
  %v846 = vand.u32 2147483647, %v836
  %vm847 = vcmp.eq.f32.partialorder %v846, 8.507059e+37
  %v848 = vand.u32 %v836, 2147483648
  %v849 = vor.u32 1.1754944e-38, %v848
  %v850 = vsel %vm847, %v849, %v845
  %v851 = vmul.f32 %v826, %v850
  %v852 = vmin.f32 %v851, 1.0
  %v853 = vmax.f32 %v852, -1.0
  %v854 = vmul.f32 %v315, %v315
  %v855 = vmin.f32 16.0, %v854
  %v856 = vmul.f32 %v855, 2.1237322e-06
  %v857 = vadd.f32 %v856, 0.00028619796
  %v858 = vmul.f32 %v855, %v857
  %v859 = vadd.f32 %v858, 0.0036580483
  %v860 = vmul.f32 %v855, %v859
  %v861 = vadd.f32 %v860, 0.05243302
  %v862 = vmul.f32 %v855, %v861
  %v863 = vadd.f32 %v862, 0.18741608
  %v864 = vmul.f32 %v855, %v863
  %v865 = vadd.f32 %v864, 1.1283791
  %v866 = vmul.f32 %v315, %v865
  %v867 = vmul.f32 %v855, 3.8918573e-05
  %v868 = vadd.f32 %v867, 0.001143296
  %v869 = vmul.f32 %v855, %v868
  %v870 = vadd.f32 %v869, 0.014752088
  %v871 = vmul.f32 %v855, %v870
  %v872 = vadd.f32 %v871, 0.112945676
  %v873 = vmul.f32 %v855, %v872
  %v874 = vadd.f32 %v873, 0.4994258
  %v875 = vmul.f32 %v855, %v874
  %v876 = vadd.f32 %v875, 1.0
  %v877 = vrcp.pop %v876
  %v878 = vmul.f32 %v876, %v877
  %v879 = vsub.f32 1.0, %v878
  %v880 = vmul.f32 %v877, %v879
  %v881 = vadd.f32 %v877, %v880
  %vm882 = vweird.f32 %v876
  %vm883 = vweird.f32 %v877
  %vm884 = vmor %vm882, %vm883
  %v885 = vsel %vm884, %v877, %v881
  %v886 = vand.u32 2147483647, %v876
  %vm887 = vcmp.eq.f32.partialorder %v886, 8.507059e+37
  %v888 = vand.u32 %v876, 2147483648
  %v889 = vor.u32 1.1754944e-38, %v888
  %v890 = vsel %vm887, %v889, %v885
  %v891 = vmul.f32 %v866, %v890
  %v892 = vmin.f32 %v891, 1.0
  %v893 = vmax.f32 %v892, -1.0
  %v894 = vmul.f32 %v316, %v316
  %v895 = vmin.f32 16.0, %v894
  %v896 = vmul.f32 %v895, 2.1237322e-06
  %v897 = vadd.f32 %v896, 0.00028619796
  %v898 = vmul.f32 %v895, %v897
  %v899 = vadd.f32 %v898, 0.0036580483
  %v900 = vmul.f32 %v895, %v899
  %v901 = vadd.f32 %v900, 0.05243302
  %v902 = vmul.f32 %v895, %v901
  %v903 = vadd.f32 %v902, 0.18741608
  %v904 = vmul.f32 %v895, %v903
  %v905 = vadd.f32 %v904, 1.1283791
  %v906 = vmul.f32 %v316, %v905
  %v907 = vmul.f32 %v895, 3.8918573e-05
  %v908 = vadd.f32 %v907, 0.001143296
  %v909 = vmul.f32 %v895, %v908
  %v910 = vadd.f32 %v909, 0.014752088
  %v911 = vmul.f32 %v895, %v910
  %v912 = vadd.f32 %v911, 0.112945676
  %v913 = vmul.f32 %v895, %v912
  %v914 = vadd.f32 %v913, 0.4994258
  %v915 = vmul.f32 %v895, %v914
  %v916 = vadd.f32 %v915, 1.0
  %v917 = vrcp.pop %v916
  %v918 = vmul.f32 %v916, %v917
  %v919 = vsub.f32 1.0, %v918
  %v920 = vmul.f32 %v917, %v919
  %v921 = vadd.f32 %v917, %v920
  %vm922 = vweird.f32 %v916
  %vm923 = vweird.f32 %v917
  %vm924 = vmor %vm922, %vm923
  %v925 = vsel %vm924, %v917, %v921
  %v926 = vand.u32 2147483647, %v916
  %vm927 = vcmp.eq.f32.partialorder %v926, 8.507059e+37
  %v928 = vand.u32 %v916, 2147483648
  %v929 = vor.u32 1.1754944e-38, %v928
  %v930 = vsel %vm927, %v929, %v925
  %v931 = vmul.f32 %v906, %v930
  %v932 = vmin.f32 %v931, 1.0
  %v933 = vmax.f32 %v932, -1.0
  %v934 = vmul.f32 %v317, %v317
  %v935 = vmin.f32 16.0, %v934
  %v936 = vmul.f32 %v935, 2.1237322e-06
  %v937 = vadd.f32 %v936, 0.00028619796
  %v938 = vmul.f32 %v935, %v937
  %v939 = vadd.f32 %v938, 0.0036580483
  %v940 = vmul.f32 %v935, %v939
  %v941 = vadd.f32 %v940, 0.05243302
  %v942 = vmul.f32 %v935, %v941
  %v943 = vadd.f32 %v942, 0.18741608
  %v944 = vmul.f32 %v935, %v943
  %v945 = vadd.f32 %v944, 1.1283791
  %v946 = vmul.f32 %v317, %v945
  %v947 = vmul.f32 %v935, 3.8918573e-05
  %v948 = vadd.f32 %v947, 0.001143296
  %v949 = vmul.f32 %v935, %v948
  %v950 = vadd.f32 %v949, 0.014752088
  %v951 = vmul.f32 %v935, %v950
  %v952 = vadd.f32 %v951, 0.112945676
  %v953 = vmul.f32 %v935, %v952
  %v954 = vadd.f32 %v953, 0.4994258
  %v955 = vmul.f32 %v935, %v954
  %v956 = vadd.f32 %v955, 1.0
  %v957 = vrcp.pop %v956
  %v958 = vmul.f32 %v956, %v957
  %v959 = vsub.f32 1.0, %v958
  %v960 = vmul.f32 %v957, %v959
  %v961 = vadd.f32 %v957, %v960
  %vm962 = vweird.f32 %v956
  %vm963 = vweird.f32 %v957
  %vm964 = vmor %vm962, %vm963
  %v965 = vsel %vm964, %v957, %v961
  %v966 = vand.u32 2147483647, %v956
  %vm967 = vcmp.eq.f32.partialorder %v966, 8.507059e+37
  %v968 = vand.u32 %v956, 2147483648
  %v969 = vor.u32 1.1754944e-38, %v968
  %v970 = vsel %vm967, %v969, %v965
  %v971 = vmul.f32 %v946, %v970
  %v972 = vmin.f32 %v971, 1.0
  %v973 = vmax.f32 %v972, -1.0
  %v974 = vmul.f32 %v318, %v318
  %v975 = vmin.f32 16.0, %v974
  %v976 = vmul.f32 %v975, 2.1237322e-06
  %v977 = vadd.f32 %v976, 0.00028619796
  %v978 = vmul.f32 %v975, %v977
  %v979 = vadd.f32 %v978, 0.0036580483
  %v980 = vmul.f32 %v975, %v979
  %v981 = vadd.f32 %v980, 0.05243302
  %v982 = vmul.f32 %v975, %v981
  %v983 = vadd.f32 %v982, 0.18741608
  %v984 = vmul.f32 %v975, %v983
  %v985 = vadd.f32 %v984, 1.1283791
  %v986 = vmul.f32 %v318, %v985
  %v987 = vmul.f32 %v975, 3.8918573e-05
  %v988 = vadd.f32 %v987, 0.001143296
  %v989 = vmul.f32 %v975, %v988
  %v990 = vadd.f32 %v989, 0.014752088
  %v991 = vmul.f32 %v975, %v990
  %v992 = vadd.f32 %v991, 0.112945676
  %v993 = vmul.f32 %v975, %v992
  %v994 = vadd.f32 %v993, 0.4994258
  %v995 = vmul.f32 %v975, %v994
  %v996 = vadd.f32 %v995, 1.0
  %v997 = vrcp.pop %v996
  %v998 = vmul.f32 %v996, %v997
  %v999 = vsub.f32 1.0, %v998
  %v1000 = vmul.f32 %v997, %v999
  %v1001 = vadd.f32 %v997, %v1000
  %vm1002 = vweird.f32 %v996
  %vm1003 = vweird.f32 %v997
  %vm1004 = vmor %vm1002, %vm1003
  %v1005 = vsel %vm1004, %v997, %v1001
  %v1006 = vand.u32 2147483647, %v996
  %vm1007 = vcmp.eq.f32.partialorder %v1006, 8.507059e+37
  %v1008 = vand.u32 %v996, 2147483648
  %v1009 = vor.u32 1.1754944e-38, %v1008
  %v1010 = vsel %vm1007, %v1009, %v1005
  %v1011 = vmul.f32 %v986, %v1010
  %v1012 = vmin.f32 %v1011, 1.0
  %v1013 = vmax.f32 %v1012, -1.0
  %v1014 = vmul.f32 %v319, %v319
  %v1015 = vmin.f32 16.0, %v1014
  %v1016 = vmul.f32 %v1015, 2.1237322e-06
  %v1017 = vadd.f32 %v1016, 0.00028619796
  %v1018 = vmul.f32 %v1015, %v1017
  %v1019 = vadd.f32 %v1018, 0.0036580483
  %v1020 = vmul.f32 %v1015, %v1019
  %v1021 = vadd.f32 %v1020, 0.05243302
  %v1022 = vmul.f32 %v1015, %v1021
  %v1023 = vadd.f32 %v1022, 0.18741608
  %v1024 = vmul.f32 %v1015, %v1023
  %v1025 = vadd.f32 %v1024, 1.1283791
  %v1026 = vmul.f32 %v319, %v1025
  %v1027 = vmul.f32 %v1015, 3.8918573e-05
  %v1028 = vadd.f32 %v1027, 0.001143296
  %v1029 = vmul.f32 %v1015, %v1028
  %v1030 = vadd.f32 %v1029, 0.014752088
  %v1031 = vmul.f32 %v1015, %v1030
  %v1032 = vadd.f32 %v1031, 0.112945676
  %v1033 = vmul.f32 %v1015, %v1032
  %v1034 = vadd.f32 %v1033, 0.4994258
  %v1035 = vmul.f32 %v1015, %v1034
  %v1036 = vadd.f32 %v1035, 1.0
  %v1037 = vrcp.pop %v1036
  %v1038 = vmul.f32 %v1036, %v1037
  %v1039 = vsub.f32 1.0, %v1038
  %v1040 = vmul.f32 %v1037, %v1039
  %v1041 = vadd.f32 %v1037, %v1040
  %vm1042 = vweird.f32 %v1036
  %vm1043 = vweird.f32 %v1037
  %vm1044 = vmor %vm1042, %vm1043
  %v1045 = vsel %vm1044, %v1037, %v1041
  %v1046 = vand.u32 2147483647, %v1036
  %vm1047 = vcmp.eq.f32.partialorder %v1046, 8.507059e+37
  %v1048 = vand.u32 %v1036, 2147483648
  %v1049 = vor.u32 1.1754944e-38, %v1048
  %v1050 = vsel %vm1047, %v1049, %v1045
  %v1051 = vmul.f32 %v1026, %v1050
  %v1052 = vmin.f32 %v1051, 1.0
  %v1053 = vmax.f32 %v1052, -1.0
  %v1054 = vmul.f32 %v320, %v320
  %v1055 = vmin.f32 16.0, %v1054
  %v1056 = vmul.f32 %v1055, 2.1237322e-06
  %v1057 = vadd.f32 %v1056, 0.00028619796
  %v1058 = vmul.f32 %v1055, %v1057
  %v1059 = vadd.f32 %v1058, 0.0036580483
  %v1060 = vmul.f32 %v1055, %v1059
  %v1061 = vadd.f32 %v1060, 0.05243302
  %v1062 = vmul.f32 %v1055, %v1061
  %v1063 = vadd.f32 %v1062, 0.18741608
  %v1064 = vmul.f32 %v1055, %v1063
  %v1065 = vadd.f32 %v1064, 1.1283791
  %v1066 = vmul.f32 %v320, %v1065
  %v1067 = vmul.f32 %v1055, 3.8918573e-05
  %v1068 = vadd.f32 %v1067, 0.001143296
  %v1069 = vmul.f32 %v1055, %v1068
  %v1070 = vadd.f32 %v1069, 0.014752088
  %v1071 = vmul.f32 %v1055, %v1070
  %v1072 = vadd.f32 %v1071, 0.112945676
  %v1073 = vmul.f32 %v1055, %v1072
  %v1074 = vadd.f32 %v1073, 0.4994258
  %v1075 = vmul.f32 %v1055, %v1074
  %v1076 = vadd.f32 %v1075, 1.0
  %v1077 = vrcp.pop %v1076
  %v1078 = vmul.f32 %v1076, %v1077
  %v1079 = vsub.f32 1.0, %v1078
  %v1080 = vmul.f32 %v1077, %v1079
  %v1081 = vadd.f32 %v1077, %v1080
  %vm1082 = vweird.f32 %v1076
  %vm1083 = vweird.f32 %v1077
  %vm1084 = vmor %vm1082, %vm1083
  %v1085 = vsel %vm1084, %v1077, %v1081
  %v1086 = vand.u32 2147483647, %v1076
  %vm1087 = vcmp.eq.f32.partialorder %v1086, 8.507059e+37
  %v1088 = vand.u32 %v1076, 2147483648
  %v1089 = vor.u32 1.1754944e-38, %v1088
  %v1090 = vsel %vm1087, %v1089, %v1085
  %v1091 = vmul.f32 %v1066, %v1090
  %v1092 = vmin.f32 %v1091, 1.0
  %v1093 = vmax.f32 %v1092, -1.0
  %v1094 = vmul.f32 %v321, %v321
  %v1095 = vmin.f32 16.0, %v1094
  %v1096 = vmul.f32 %v1095, 2.1237322e-06
  %v1097 = vadd.f32 %v1096, 0.00028619796
  %v1098 = vmul.f32 %v1095, %v1097
  %v1099 = vadd.f32 %v1098, 0.0036580483
  %v1100 = vmul.f32 %v1095, %v1099
  %v1101 = vadd.f32 %v1100, 0.05243302
  %v1102 = vmul.f32 %v1095, %v1101
  %v1103 = vadd.f32 %v1102, 0.18741608
  %v1104 = vmul.f32 %v1095, %v1103
  %v1105 = vadd.f32 %v1104, 1.1283791
  %v1106 = vmul.f32 %v321, %v1105
  %v1107 = vmul.f32 %v1095, 3.8918573e-05
  %v1108 = vadd.f32 %v1107, 0.001143296
  %v1109 = vmul.f32 %v1095, %v1108
  %v1110 = vadd.f32 %v1109, 0.014752088
  %v1111 = vmul.f32 %v1095, %v1110
  %v1112 = vadd.f32 %v1111, 0.112945676
  %v1113 = vmul.f32 %v1095, %v1112
  %v1114 = vadd.f32 %v1113, 0.4994258
  %v1115 = vmul.f32 %v1095, %v1114
  %v1116 = vadd.f32 %v1115, 1.0
  %v1117 = vrcp.pop %v1116
  %v1118 = vmul.f32 %v1116, %v1117
  %v1119 = vsub.f32 1.0, %v1118
  %v1120 = vmul.f32 %v1117, %v1119
  %v1121 = vadd.f32 %v1117, %v1120
  %vm1122 = vweird.f32 %v1116
  %vm1123 = vweird.f32 %v1117
  %vm1124 = vmor %vm1122, %vm1123
  %v1125 = vsel %vm1124, %v1117, %v1121
  %v1126 = vand.u32 2147483647, %v1116
  %vm1127 = vcmp.eq.f32.partialorder %v1126, 8.507059e+37
  %v1128 = vand.u32 %v1116, 2147483648
  %v1129 = vor.u32 1.1754944e-38, %v1128
  %v1130 = vsel %vm1127, %v1129, %v1125
  %v1131 = vmul.f32 %v1106, %v1130
  %v1132 = vmin.f32 %v1131, 1.0
  %v1133 = vmax.f32 %v1132, -1.0
  %v1134 = vmul.f32 %v322, %v322
  %v1135 = vmin.f32 16.0, %v1134
  %v1136 = vmul.f32 %v1135, 2.1237322e-06
  %v1137 = vadd.f32 %v1136, 0.00028619796
  %v1138 = vmul.f32 %v1135, %v1137
  %v1139 = vadd.f32 %v1138, 0.0036580483
  %v1140 = vmul.f32 %v1135, %v1139
  %v1141 = vadd.f32 %v1140, 0.05243302
  %v1142 = vmul.f32 %v1135, %v1141
  %v1143 = vadd.f32 %v1142, 0.18741608
  %v1144 = vmul.f32 %v1135, %v1143
  %v1145 = vadd.f32 %v1144, 1.1283791
  %v1146 = vmul.f32 %v322, %v1145
  %v1147 = vmul.f32 %v1135, 3.8918573e-05
  %v1148 = vadd.f32 %v1147, 0.001143296
  %v1149 = vmul.f32 %v1135, %v1148
  %v1150 = vadd.f32 %v1149, 0.014752088
  %v1151 = vmul.f32 %v1135, %v1150
  %v1152 = vadd.f32 %v1151, 0.112945676
  %v1153 = vmul.f32 %v1135, %v1152
  %v1154 = vadd.f32 %v1153, 0.4994258
  %v1155 = vmul.f32 %v1135, %v1154
  %v1156 = vadd.f32 %v1155, 1.0
  %v1157 = vrcp.pop %v1156
  %v1158 = vmul.f32 %v1156, %v1157
  %v1159 = vsub.f32 1.0, %v1158
  %v1160 = vmul.f32 %v1157, %v1159
  %v1161 = vadd.f32 %v1157, %v1160
  %vm1162 = vweird.f32 %v1156
  %vm1163 = vweird.f32 %v1157
  %vm1164 = vmor %vm1162, %vm1163
  %v1165 = vsel %vm1164, %v1157, %v1161
  %v1166 = vand.u32 2147483647, %v1156
  %vm1167 = vcmp.eq.f32.partialorder %v1166, 8.507059e+37
  %v1168 = vand.u32 %v1156, 2147483648
  %v1169 = vor.u32 1.1754944e-38, %v1168
  %v1170 = vsel %vm1167, %v1169, %v1165
  %v1171 = vmul.f32 %v1146, %v1170
  %v1172 = vmin.f32 %v1171, 1.0
  %v1173 = vmax.f32 %v1172, -1.0
  %v1174 = vmul.f32 %v323, %v323
  %v1175 = vmin.f32 16.0, %v1174
  %v1176 = vmul.f32 %v1175, 2.1237322e-06
  %v1177 = vadd.f32 %v1176, 0.00028619796
  %v1178 = vmul.f32 %v1175, %v1177
  %v1179 = vadd.f32 %v1178, 0.0036580483
  %v1180 = vmul.f32 %v1175, %v1179
  %v1181 = vadd.f32 %v1180, 0.05243302
  %v1182 = vmul.f32 %v1175, %v1181
  %v1183 = vadd.f32 %v1182, 0.18741608
  %v1184 = vmul.f32 %v1175, %v1183
  %v1185 = vadd.f32 %v1184, 1.1283791
  %v1186 = vmul.f32 %v323, %v1185
  %v1187 = vmul.f32 %v1175, 3.8918573e-05
  %v1188 = vadd.f32 %v1187, 0.001143296
  %v1189 = vmul.f32 %v1175, %v1188
  %v1190 = vadd.f32 %v1189, 0.014752088
  %v1191 = vmul.f32 %v1175, %v1190
  %v1192 = vadd.f32 %v1191, 0.112945676
  %v1193 = vmul.f32 %v1175, %v1192
  %v1194 = vadd.f32 %v1193, 0.4994258
  %v1195 = vmul.f32 %v1175, %v1194
  %v1196 = vadd.f32 %v1195, 1.0
  %v1197 = vrcp.pop %v1196
  %v1198 = vmul.f32 %v1196, %v1197
  %v1199 = vsub.f32 1.0, %v1198
  %v1200 = vmul.f32 %v1197, %v1199
  %v1201 = vadd.f32 %v1197, %v1200
  %vm1202 = vweird.f32 %v1196
  %vm1203 = vweird.f32 %v1197
  %vm1204 = vmor %vm1202, %vm1203
  %v1205 = vsel %vm1204, %v1197, %v1201
  %v1206 = vand.u32 2147483647, %v1196
  %vm1207 = vcmp.eq.f32.partialorder %v1206, 8.507059e+37
  %v1208 = vand.u32 %v1196, 2147483648
  %v1209 = vor.u32 1.1754944e-38, %v1208
  %v1210 = vsel %vm1207, %v1209, %v1205
  %v1211 = vmul.f32 %v1186, %v1210
  %v1212 = vmin.f32 %v1211, 1.0
  %v1213 = vmax.f32 %v1212, -1.0
  %v1214 = vmul.f32 %v324, %v324
  %v1215 = vmin.f32 16.0, %v1214
  %v1216 = vmul.f32 %v1215, 2.1237322e-06
  %v1217 = vadd.f32 %v1216, 0.00028619796
  %v1218 = vmul.f32 %v1215, %v1217
  %v1219 = vadd.f32 %v1218, 0.0036580483
  %v1220 = vmul.f32 %v1215, %v1219
  %v1221 = vadd.f32 %v1220, 0.05243302
  %v1222 = vmul.f32 %v1215, %v1221
  %v1223 = vadd.f32 %v1222, 0.18741608
  %v1224 = vmul.f32 %v1215, %v1223
  %v1225 = vadd.f32 %v1224, 1.1283791
  %v1226 = vmul.f32 %v324, %v1225
  %v1227 = vmul.f32 %v1215, 3.8918573e-05
  %v1228 = vadd.f32 %v1227, 0.001143296
  %v1229 = vmul.f32 %v1215, %v1228
  %v1230 = vadd.f32 %v1229, 0.014752088
  %v1231 = vmul.f32 %v1215, %v1230
  %v1232 = vadd.f32 %v1231, 0.112945676
  %v1233 = vmul.f32 %v1215, %v1232
  %v1234 = vadd.f32 %v1233, 0.4994258
  %v1235 = vmul.f32 %v1215, %v1234
  %v1236 = vadd.f32 %v1235, 1.0
  %v1237 = vrcp.pop %v1236
  %v1238 = vmul.f32 %v1236, %v1237
  %v1239 = vsub.f32 1.0, %v1238
  %v1240 = vmul.f32 %v1237, %v1239
  %v1241 = vadd.f32 %v1237, %v1240
  %vm1242 = vweird.f32 %v1236
  %vm1243 = vweird.f32 %v1237
  %vm1244 = vmor %vm1242, %vm1243
  %v1245 = vsel %vm1244, %v1237, %v1241
  %v1246 = vand.u32 2147483647, %v1236
  %vm1247 = vcmp.eq.f32.partialorder %v1246, 8.507059e+37
  %v1248 = vand.u32 %v1236, 2147483648
  %v1249 = vor.u32 1.1754944e-38, %v1248
  %v1250 = vsel %vm1247, %v1249, %v1245
  %v1251 = vmul.f32 %v1226, %v1250
  %v1252 = vmin.f32 %v1251, 1.0
  %v1253 = vmax.f32 %v1252, -1.0
  %v1254 = vmul.f32 %v325, %v325
  %v1255 = vmin.f32 16.0, %v1254
  %v1256 = vmul.f32 %v1255, 2.1237322e-06
  %v1257 = vadd.f32 %v1256, 0.00028619796
  %v1258 = vmul.f32 %v1255, %v1257
  %v1259 = vadd.f32 %v1258, 0.0036580483
  %v1260 = vmul.f32 %v1255, %v1259
  %v1261 = vadd.f32 %v1260, 0.05243302
  %v1262 = vmul.f32 %v1255, %v1261
  %v1263 = vadd.f32 %v1262, 0.18741608
  %v1264 = vmul.f32 %v1255, %v1263
  %v1265 = vadd.f32 %v1264, 1.1283791
  %v1266 = vmul.f32 %v325, %v1265
  %v1267 = vmul.f32 %v1255, 3.8918573e-05
  %v1268 = vadd.f32 %v1267, 0.001143296
  %v1269 = vmul.f32 %v1255, %v1268
  %v1270 = vadd.f32 %v1269, 0.014752088
  %v1271 = vmul.f32 %v1255, %v1270
  %v1272 = vadd.f32 %v1271, 0.112945676
  %v1273 = vmul.f32 %v1255, %v1272
  %v1274 = vadd.f32 %v1273, 0.4994258
  %v1275 = vmul.f32 %v1255, %v1274
  %v1276 = vadd.f32 %v1275, 1.0
  %v1277 = vrcp.pop %v1276
  %v1278 = vmul.f32 %v1276, %v1277
  %v1279 = vsub.f32 1.0, %v1278
  %v1280 = vmul.f32 %v1277, %v1279
  %v1281 = vadd.f32 %v1277, %v1280
  %vm1282 = vweird.f32 %v1276
  %vm1283 = vweird.f32 %v1277
  %vm1284 = vmor %vm1282, %vm1283
  %v1285 = vsel %vm1284, %v1277, %v1281
  %v1286 = vand.u32 2147483647, %v1276
  %vm1287 = vcmp.eq.f32.partialorder %v1286, 8.507059e+37
  %v1288 = vand.u32 %v1276, 2147483648
  %v1289 = vor.u32 1.1754944e-38, %v1288
  %v1290 = vsel %vm1287, %v1289, %v1285
  %v1291 = vmul.f32 %v1266, %v1290
  %v1292 = vmin.f32 %v1291, 1.0
  %v1293 = vmax.f32 %v1292, -1.0
  %v1294 = vmul.f32 %v326, %v326
  %v1295 = vmin.f32 16.0, %v1294
  %v1296 = vmul.f32 %v1295, 2.1237322e-06
  %v1297 = vadd.f32 %v1296, 0.00028619796
  %v1298 = vmul.f32 %v1295, %v1297
  %v1299 = vadd.f32 %v1298, 0.0036580483
  %v1300 = vmul.f32 %v1295, %v1299
  %v1301 = vadd.f32 %v1300, 0.05243302
  %v1302 = vmul.f32 %v1295, %v1301
  %v1303 = vadd.f32 %v1302, 0.18741608
  %v1304 = vmul.f32 %v1295, %v1303
  %v1305 = vadd.f32 %v1304, 1.1283791
  %v1306 = vmul.f32 %v326, %v1305
  %v1307 = vmul.f32 %v1295, 3.8918573e-05
  %v1308 = vadd.f32 %v1307, 0.001143296
  %v1309 = vmul.f32 %v1295, %v1308
  %v1310 = vadd.f32 %v1309, 0.014752088
  %v1311 = vmul.f32 %v1295, %v1310
  %v1312 = vadd.f32 %v1311, 0.112945676
  %v1313 = vmul.f32 %v1295, %v1312
  %v1314 = vadd.f32 %v1313, 0.4994258
  %v1315 = vmul.f32 %v1295, %v1314
  %v1316 = vadd.f32 %v1315, 1.0
  %v1317 = vrcp.pop %v1316
  %v1318 = vmul.f32 %v1316, %v1317
  %v1319 = vsub.f32 1.0, %v1318
  %v1320 = vmul.f32 %v1317, %v1319
  %v1321 = vadd.f32 %v1317, %v1320
  %vm1322 = vweird.f32 %v1316
  %vm1323 = vweird.f32 %v1317
  %vm1324 = vmor %vm1322, %vm1323
  %v1325 = vsel %vm1324, %v1317, %v1321
  %v1326 = vand.u32 2147483647, %v1316
  %vm1327 = vcmp.eq.f32.partialorder %v1326, 8.507059e+37
  %v1328 = vand.u32 %v1316, 2147483648
  %v1329 = vor.u32 1.1754944e-38, %v1328
  %v1330 = vsel %vm1327, %v1329, %v1325
  %v1331 = vmul.f32 %v1306, %v1330
  %v1332 = vmin.f32 %v1331, 1.0
  %v1333 = vmax.f32 %v1332, -1.0
  %v1334 = vmul.f32 %v327, %v327
  %v1335 = vmin.f32 16.0, %v1334
  %v1336 = vmul.f32 %v1335, 2.1237322e-06
  %v1337 = vadd.f32 %v1336, 0.00028619796
  %v1338 = vmul.f32 %v1335, %v1337
  %v1339 = vadd.f32 %v1338, 0.0036580483
  %v1340 = vmul.f32 %v1335, %v1339
  %v1341 = vadd.f32 %v1340, 0.05243302
  %v1342 = vmul.f32 %v1335, %v1341
  %v1343 = vadd.f32 %v1342, 0.18741608
  %v1344 = vmul.f32 %v1335, %v1343
  %v1345 = vadd.f32 %v1344, 1.1283791
  %v1346 = vmul.f32 %v327, %v1345
  %v1347 = vmul.f32 %v1335, 3.8918573e-05
  %v1348 = vadd.f32 %v1347, 0.001143296
  %v1349 = vmul.f32 %v1335, %v1348
  %v1350 = vadd.f32 %v1349, 0.014752088
  %v1351 = vmul.f32 %v1335, %v1350
  %v1352 = vadd.f32 %v1351, 0.112945676
  %v1353 = vmul.f32 %v1335, %v1352
  %v1354 = vadd.f32 %v1353, 0.4994258
  %v1355 = vmul.f32 %v1335, %v1354
  %v1356 = vadd.f32 %v1355, 1.0
  %v1357 = vrcp.pop %v1356
  %v1358 = vmul.f32 %v1356, %v1357
  %v1359 = vsub.f32 1.0, %v1358
  %v1360 = vmul.f32 %v1357, %v1359
  %v1361 = vadd.f32 %v1357, %v1360
  %vm1362 = vweird.f32 %v1356
  %vm1363 = vweird.f32 %v1357
  %vm1364 = vmor %vm1362, %vm1363
  %v1365 = vsel %vm1364, %v1357, %v1361
  %v1366 = vand.u32 2147483647, %v1356
  %vm1367 = vcmp.eq.f32.partialorder %v1366, 8.507059e+37
  %v1368 = vand.u32 %v1356, 2147483648
  %v1369 = vor.u32 1.1754944e-38, %v1368
  %v1370 = vsel %vm1367, %v1369, %v1365
  %v1371 = vmul.f32 %v1346, %v1370
  %v1372 = vmin.f32 %v1371, 1.0
  %v1373 = vmax.f32 %v1372, -1.0
  %v1374 = vmul.f32 %v328, %v328
  %v1375 = vmin.f32 16.0, %v1374
  %v1376 = vmul.f32 %v1375, 2.1237322e-06
  %v1377 = vadd.f32 %v1376, 0.00028619796
  %v1378 = vmul.f32 %v1375, %v1377
  %v1379 = vadd.f32 %v1378, 0.0036580483
  %v1380 = vmul.f32 %v1375, %v1379
  %v1381 = vadd.f32 %v1380, 0.05243302
  %v1382 = vmul.f32 %v1375, %v1381
  %v1383 = vadd.f32 %v1382, 0.18741608
  %v1384 = vmul.f32 %v1375, %v1383
  %v1385 = vadd.f32 %v1384, 1.1283791
  %v1386 = vmul.f32 %v328, %v1385
  %v1387 = vmul.f32 %v1375, 3.8918573e-05
  %v1388 = vadd.f32 %v1387, 0.001143296
  %v1389 = vmul.f32 %v1375, %v1388
  %v1390 = vadd.f32 %v1389, 0.014752088
  %v1391 = vmul.f32 %v1375, %v1390
  %v1392 = vadd.f32 %v1391, 0.112945676
  %v1393 = vmul.f32 %v1375, %v1392
  %v1394 = vadd.f32 %v1393, 0.4994258
  %v1395 = vmul.f32 %v1375, %v1394
  %v1396 = vadd.f32 %v1395, 1.0
  %v1397 = vrcp.pop %v1396
  %v1398 = vmul.f32 %v1396, %v1397
  %v1399 = vsub.f32 1.0, %v1398
  %v1400 = vmul.f32 %v1397, %v1399
  %v1401 = vadd.f32 %v1397, %v1400
  %vm1402 = vweird.f32 %v1396
  %vm1403 = vweird.f32 %v1397
  %vm1404 = vmor %vm1402, %vm1403
  %v1405 = vsel %vm1404, %v1397, %v1401
  %v1406 = vand.u32 2147483647, %v1396
  %vm1407 = vcmp.eq.f32.partialorder %v1406, 8.507059e+37
  %v1408 = vand.u32 %v1396, 2147483648
  %v1409 = vor.u32 1.1754944e-38, %v1408
  %v1410 = vsel %vm1407, %v1409, %v1405
  %v1411 = vmul.f32 %v1386, %v1410
  %v1412 = vmin.f32 %v1411, 1.0
  %v1413 = vmax.f32 %v1412, -1.0
  %v1414 = vmul.f32 %v329, %v329
  %v1415 = vmin.f32 16.0, %v1414
  %v1416 = vmul.f32 %v1415, 2.1237322e-06
  %v1417 = vadd.f32 %v1416, 0.00028619796
  %v1418 = vmul.f32 %v1415, %v1417
  %v1419 = vadd.f32 %v1418, 0.0036580483
  %v1420 = vmul.f32 %v1415, %v1419
  %v1421 = vadd.f32 %v1420, 0.05243302
  %v1422 = vmul.f32 %v1415, %v1421
  %v1423 = vadd.f32 %v1422, 0.18741608
  %v1424 = vmul.f32 %v1415, %v1423
  %v1425 = vadd.f32 %v1424, 1.1283791
  %v1426 = vmul.f32 %v329, %v1425
  %v1427 = vmul.f32 %v1415, 3.8918573e-05
  %v1428 = vadd.f32 %v1427, 0.001143296
  %v1429 = vmul.f32 %v1415, %v1428
  %v1430 = vadd.f32 %v1429, 0.014752088
  %v1431 = vmul.f32 %v1415, %v1430
  %v1432 = vadd.f32 %v1431, 0.112945676
  %v1433 = vmul.f32 %v1415, %v1432
  %v1434 = vadd.f32 %v1433, 0.4994258
  %v1435 = vmul.f32 %v1415, %v1434
  %v1436 = vadd.f32 %v1435, 1.0
  %v1437 = vrcp.pop %v1436
  %v1438 = vmul.f32 %v1436, %v1437
  %v1439 = vsub.f32 1.0, %v1438
  %v1440 = vmul.f32 %v1437, %v1439
  %v1441 = vadd.f32 %v1437, %v1440
  %vm1442 = vweird.f32 %v1436
  %vm1443 = vweird.f32 %v1437
  %vm1444 = vmor %vm1442, %vm1443
  %v1445 = vsel %vm1444, %v1437, %v1441
  %v1446 = vand.u32 2147483647, %v1436
  %vm1447 = vcmp.eq.f32.partialorder %v1446, 8.507059e+37
  %v1448 = vand.u32 %v1436, 2147483648
  %v1449 = vor.u32 1.1754944e-38, %v1448
  %v1450 = vsel %vm1447, %v1449, %v1445
  %v1451 = vmul.f32 %v1426, %v1450
  %v1452 = vmin.f32 %v1451, 1.0
  %v1453 = vmax.f32 %v1452, -1.0
  %v1454 = vmul.f32 %v330, %v330
  %v1455 = vmin.f32 16.0, %v1454
  %v1456 = vmul.f32 %v1455, 2.1237322e-06
  %v1457 = vadd.f32 %v1456, 0.00028619796
  %v1458 = vmul.f32 %v1455, %v1457
  %v1459 = vadd.f32 %v1458, 0.0036580483
  %v1460 = vmul.f32 %v1455, %v1459
  %v1461 = vadd.f32 %v1460, 0.05243302
  %v1462 = vmul.f32 %v1455, %v1461
  %v1463 = vadd.f32 %v1462, 0.18741608
  %v1464 = vmul.f32 %v1455, %v1463
  %v1465 = vadd.f32 %v1464, 1.1283791
  %v1466 = vmul.f32 %v330, %v1465
  %v1467 = vmul.f32 %v1455, 3.8918573e-05
  %v1468 = vadd.f32 %v1467, 0.001143296
  %v1469 = vmul.f32 %v1455, %v1468
  %v1470 = vadd.f32 %v1469, 0.014752088
  %v1471 = vmul.f32 %v1455, %v1470
  %v1472 = vadd.f32 %v1471, 0.112945676
  %v1473 = vmul.f32 %v1455, %v1472
  %v1474 = vadd.f32 %v1473, 0.4994258
  %v1475 = vmul.f32 %v1455, %v1474
  %v1476 = vadd.f32 %v1475, 1.0
  %v1477 = vrcp.pop %v1476
  %v1478 = vmul.f32 %v1476, %v1477
  %v1479 = vsub.f32 1.0, %v1478
  %v1480 = vmul.f32 %v1477, %v1479
  %v1481 = vadd.f32 %v1477, %v1480
  %vm1482 = vweird.f32 %v1476
  %vm1483 = vweird.f32 %v1477
  %vm1484 = vmor %vm1482, %vm1483
  %v1485 = vsel %vm1484, %v1477, %v1481
  %v1486 = vand.u32 2147483647, %v1476
  %vm1487 = vcmp.eq.f32.partialorder %v1486, 8.507059e+37
  %v1488 = vand.u32 %v1476, 2147483648
  %v1489 = vor.u32 1.1754944e-38, %v1488
  %v1490 = vsel %vm1487, %v1489, %v1485
  %v1491 = vmul.f32 %v1466, %v1490
  %v1492 = vmin.f32 %v1491, 1.0
  %v1493 = vmax.f32 %v1492, -1.0
  %v1494 = vmul.f32 %v331, %v331
  %v1495 = vmin.f32 16.0, %v1494
  %v1496 = vmul.f32 %v1495, 2.1237322e-06
  %v1497 = vadd.f32 %v1496, 0.00028619796
  %v1498 = vmul.f32 %v1495, %v1497
  %v1499 = vadd.f32 %v1498, 0.0036580483
  %v1500 = vmul.f32 %v1495, %v1499
  %v1501 = vadd.f32 %v1500, 0.05243302
  %v1502 = vmul.f32 %v1495, %v1501
  %v1503 = vadd.f32 %v1502, 0.18741608
  %v1504 = vmul.f32 %v1495, %v1503
  %v1505 = vadd.f32 %v1504, 1.1283791
  %v1506 = vmul.f32 %v331, %v1505
  %v1507 = vmul.f32 %v1495, 3.8918573e-05
  %v1508 = vadd.f32 %v1507, 0.001143296
  %v1509 = vmul.f32 %v1495, %v1508
  %v1510 = vadd.f32 %v1509, 0.014752088
  %v1511 = vmul.f32 %v1495, %v1510
  %v1512 = vadd.f32 %v1511, 0.112945676
  %v1513 = vmul.f32 %v1495, %v1512
  %v1514 = vadd.f32 %v1513, 0.4994258
  %v1515 = vmul.f32 %v1495, %v1514
  %v1516 = vadd.f32 %v1515, 1.0
  %v1517 = vrcp.pop %v1516
  %v1518 = vmul.f32 %v1516, %v1517
  %v1519 = vsub.f32 1.0, %v1518
  %v1520 = vmul.f32 %v1517, %v1519
  %v1521 = vadd.f32 %v1517, %v1520
  %vm1522 = vweird.f32 %v1516
  %vm1523 = vweird.f32 %v1517
  %vm1524 = vmor %vm1522, %vm1523
  %v1525 = vsel %vm1524, %v1517, %v1521
  %v1526 = vand.u32 2147483647, %v1516
  %vm1527 = vcmp.eq.f32.partialorder %v1526, 8.507059e+37
  %v1528 = vand.u32 %v1516, 2147483648
  %v1529 = vor.u32 1.1754944e-38, %v1528
  %v1530 = vsel %vm1527, %v1529, %v1525
  %v1531 = vmul.f32 %v1506, %v1530
  %v1532 = vmin.f32 %v1531, 1.0
  %v1533 = vmax.f32 %v1532, -1.0
  %v1534 = vmul.f32 %v332, %v332
  %v1535 = vmin.f32 16.0, %v1534
  %v1536 = vmul.f32 %v1535, 2.1237322e-06
  %v1537 = vadd.f32 %v1536, 0.00028619796
  %v1538 = vmul.f32 %v1535, %v1537
  %v1539 = vadd.f32 %v1538, 0.0036580483
  %v1540 = vmul.f32 %v1535, %v1539
  %v1541 = vadd.f32 %v1540, 0.05243302
  %v1542 = vmul.f32 %v1535, %v1541
  %v1543 = vadd.f32 %v1542, 0.18741608
  %v1544 = vmul.f32 %v1535, %v1543
  %v1545 = vadd.f32 %v1544, 1.1283791
  %v1546 = vmul.f32 %v332, %v1545
  %v1547 = vmul.f32 %v1535, 3.8918573e-05
  %v1548 = vadd.f32 %v1547, 0.001143296
  %v1549 = vmul.f32 %v1535, %v1548
  %v1550 = vadd.f32 %v1549, 0.014752088
  %v1551 = vmul.f32 %v1535, %v1550
  %v1552 = vadd.f32 %v1551, 0.112945676
  %v1553 = vmul.f32 %v1535, %v1552
  %v1554 = vadd.f32 %v1553, 0.4994258
  %v1555 = vmul.f32 %v1535, %v1554
  %v1556 = vadd.f32 %v1555, 1.0
  %v1557 = vrcp.pop %v1556
  %v1558 = vmul.f32 %v1556, %v1557
  %v1559 = vsub.f32 1.0, %v1558
  %v1560 = vmul.f32 %v1557, %v1559
  %v1561 = vadd.f32 %v1557, %v1560
  %vm1562 = vweird.f32 %v1556
  %vm1563 = vweird.f32 %v1557
  %vm1564 = vmor %vm1562, %vm1563
  %v1565 = vsel %vm1564, %v1557, %v1561
  %v1566 = vand.u32 2147483647, %v1556
  %vm1567 = vcmp.eq.f32.partialorder %v1566, 8.507059e+37
  %v1568 = vand.u32 %v1556, 2147483648
  %v1569 = vor.u32 1.1754944e-38, %v1568
  %v1570 = vsel %vm1567, %v1569, %v1565
  %v1571 = vmul.f32 %v1546, %v1570
  %v1572 = vmin.f32 %v1571, 1.0
  %v1573 = vmax.f32 %v1572, -1.0
  %v1574 = vmul.f32 %v333, %v333
  %v1575 = vmin.f32 16.0, %v1574
  %v1576 = vmul.f32 %v1575, 2.1237322e-06
  %v1577 = vadd.f32 %v1576, 0.00028619796
  %v1578 = vmul.f32 %v1575, %v1577
  %v1579 = vadd.f32 %v1578, 0.0036580483
  %v1580 = vmul.f32 %v1575, %v1579
  %v1581 = vadd.f32 %v1580, 0.05243302
  %v1582 = vmul.f32 %v1575, %v1581
  %v1583 = vadd.f32 %v1582, 0.18741608
  %v1584 = vmul.f32 %v1575, %v1583
  %v1585 = vadd.f32 %v1584, 1.1283791
  %v1586 = vmul.f32 %v333, %v1585
  %v1587 = vmul.f32 %v1575, 3.8918573e-05
  %v1588 = vadd.f32 %v1587, 0.001143296
  %v1589 = vmul.f32 %v1575, %v1588
  %v1590 = vadd.f32 %v1589, 0.014752088
  %v1591 = vmul.f32 %v1575, %v1590
  %v1592 = vadd.f32 %v1591, 0.112945676
  %v1593 = vmul.f32 %v1575, %v1592
  %v1594 = vadd.f32 %v1593, 0.4994258
  %v1595 = vmul.f32 %v1575, %v1594
  %v1596 = vadd.f32 %v1595, 1.0
  %v1597 = vrcp.pop %v1596
  %v1598 = vmul.f32 %v1596, %v1597
  %v1599 = vsub.f32 1.0, %v1598
  %v1600 = vmul.f32 %v1597, %v1599
  %v1601 = vadd.f32 %v1597, %v1600
  %vm1602 = vweird.f32 %v1596
  %vm1603 = vweird.f32 %v1597
  %vm1604 = vmor %vm1602, %vm1603
  %v1605 = vsel %vm1604, %v1597, %v1601
  %v1606 = vand.u32 2147483647, %v1596
  %vm1607 = vcmp.eq.f32.partialorder %v1606, 8.507059e+37
  %v1608 = vand.u32 %v1596, 2147483648
  %v1609 = vor.u32 1.1754944e-38, %v1608
  %v1610 = vsel %vm1607, %v1609, %v1605
  %v1611 = vmul.f32 %v1586, %v1610
  %v1612 = vmin.f32 %v1611, 1.0
  %v1613 = vmax.f32 %v1612, -1.0
  %v1614 = vadd.f32 %v373, 1.0
  %v1615 = vadd.f32 %v413, 1.0
  %v1616 = vadd.f32 %v453, 1.0
  %v1617 = vadd.f32 %v493, 1.0
  %v1618 = vadd.f32 %v533, 1.0
  %v1619 = vadd.f32 %v573, 1.0
  %v1620 = vadd.f32 %v613, 1.0
  %v1621 = vadd.f32 %v653, 1.0
  %v1622 = vadd.f32 %v693, 1.0
  %v1623 = vadd.f32 %v733, 1.0
  %v1624 = vadd.f32 %v773, 1.0
  %v1625 = vadd.f32 %v813, 1.0
  %v1626 = vadd.f32 %v853, 1.0
  %v1627 = vadd.f32 %v893, 1.0
  %v1628 = vadd.f32 %v933, 1.0
  %v1629 = vadd.f32 %v973, 1.0
  %v1630 = vadd.f32 %v1013, 1.0
  %v1631 = vadd.f32 %v1053, 1.0
  %v1632 = vadd.f32 %v1093, 1.0
  %v1633 = vadd.f32 %v1133, 1.0
  %v1634 = vadd.f32 %v1173, 1.0
  %v1635 = vadd.f32 %v1213, 1.0
  %v1636 = vadd.f32 %v1253, 1.0
  %v1637 = vadd.f32 %v1293, 1.0
  %v1638 = vadd.f32 %v1333, 1.0
  %v1639 = vadd.f32 %v1373, 1.0
  %v1640 = vadd.f32 %v1413, 1.0
  %v1641 = vadd.f32 %v1453, 1.0
  %v1642 = vadd.f32 %v1493, 1.0
  %v1643 = vadd.f32 %v1533, 1.0
  %v1644 = vadd.f32 %v1573, 1.0
  %v1645 = vadd.f32 %v1613, 1.0
  %v1646 = vmul.f32 %v270, %v1614
  %v1647 = vmul.f32 %v271, %v1615
  %v1648 = vmul.f32 %v272, %v1616
  %v1649 = vmul.f32 %v273, %v1617
  %v1650 = vmul.f32 %v274, %v1618
  %v1651 = vmul.f32 %v275, %v1619
  %v1652 = vmul.f32 %v276, %v1620
  %v1653 = vmul.f32 %v277, %v1621
  %v1654 = vmul.f32 %v278, %v1622
  %v1655 = vmul.f32 %v279, %v1623
  %v1656 = vmul.f32 %v280, %v1624
  %v1657 = vmul.f32 %v281, %v1625
  %v1658 = vmul.f32 %v282, %v1626
  %v1659 = vmul.f32 %v283, %v1627
  %v1660 = vmul.f32 %v284, %v1628
  %v1661 = vmul.f32 %v285, %v1629
  %v1662 = vmul.f32 %v286, %v1630
  %v1663 = vmul.f32 %v287, %v1631
  %v1664 = vmul.f32 %v288, %v1632
  %v1665 = vmul.f32 %v289, %v1633
  %v1666 = vmul.f32 %v290, %v1634
  %v1667 = vmul.f32 %v291, %v1635
  %v1668 = vmul.f32 %v292, %v1636
  %v1669 = vmul.f32 %v293, %v1637
  %v1670 = vmul.f32 %v294, %v1638
  %v1671 = vmul.f32 %v295, %v1639
  %v1672 = vmul.f32 %v296, %v1640
  %v1673 = vmul.f32 %v297, %v1641
  %v1674 = vmul.f32 %v298, %v1642
  %v1675 = vmul.f32 %v299, %v1643
  %v1676 = vmul.f32 %v300, %v1644
  %v1677 = vmul.f32 %v301, %v1645
  %v1678 = vld [vmem:[%s3] sm:$0xff]
  %v1679 = vld [vmem:[%s3 + $0x8] sm:$0xff]
  %v1680 = vld [vmem:[%s3 + $0x10] sm:$0xff]
  %v1681 = vld [vmem:[%s3 + $0x18] sm:$0xff]
  %v1682 = vld [vmem:[%s3 + $0x20] sm:$0xff]
  %v1683 = vld [vmem:[%s3 + $0x28] sm:$0xff]
  %v1684 = vld [vmem:[%s3 + $0x30] sm:$0xff]
  %v1685 = vld [vmem:[%s3 + $0x38] sm:$0xff]
  %v1686 = vld [vmem:[%s4] sm:$0x1]
  %v1688 = vperm.slane %v1686, 0
  %vm1690 = vcmask 523264
  %v1692 = vsel %vm1690, %v1646, 0
  %v1695 = vsel %vm1690, %v1647, 0
  %v1698 = vsel %vm1690, %v1648, 0
  %v1701 = vsel %vm1690, %v1649, 0
  %v1704 = vsel %vm1690, %v1650, 0
  %v1707 = vsel %vm1690, %v1651, 0
  %v1710 = vsel %vm1690, %v1652, 0
  %v1713 = vsel %vm1690, %v1653, 0
  %v1716 = vsel %vm1690, %v1654, 0
  %v1719 = vsel %vm1690, %v1655, 0
  %v1722 = vsel %vm1690, %v1656, 0
  %v1725 = vsel %vm1690, %v1657, 0
  %v1728 = vsel %vm1690, %v1658, 0
  %v1731 = vsel %vm1690, %v1659, 0
  %v1734 = vsel %vm1690, %v1660, 0
  %v1737 = vsel %vm1690, %v1661, 0
  %v1740 = vsel %vm1690, %v1662, 0
  %v1743 = vsel %vm1690, %v1663, 0
  %v1746 = vsel %vm1690, %v1664, 0
  %v1749 = vsel %vm1690, %v1665, 0
  %v1752 = vsel %vm1690, %v1666, 0
  %v1755 = vsel %vm1690, %v1667, 0
  %v1758 = vsel %vm1690, %v1668, 0
  %v1761 = vsel %vm1690, %v1669, 0
  %v1764 = vsel %vm1690, %v1670, 0
  %v1767 = vsel %vm1690, %v1671, 0
  %v1770 = vsel %vm1690, %v1672, 0
  %v1773 = vsel %vm1690, %v1673, 0
  %v1776 = vsel %vm1690, %v1674, 0
  %v1779 = vsel %vm1690, %v1675, 0
  %v1782 = vsel %vm1690, %v1676, 0
  %v1785 = vsel %vm1690, %v1677, 0
  %1787 = vmatpush.msra.mxu0 0.0
  %1788 = vmatpush.msra.mxu0 0.0
  %1789 = vmatpush.msra.mxu0 0.0
  %1790 = vmatpush.msra.mxu0 0.0
  %1791 = vmatpush.msra.mxu0 0.0
  %1792 = vmatpush.msra.mxu0 0.0
  %1793 = vmatpush.msra.mxu0 0.0
  %1794 = vmatpush.msra.mxu0 0.0
  %1795 = vmatpush.msra.mxu0 %v1685
  %1796 = vmatpush.msra.mxu0 %v1684
  %1797 = vmatpush.msra.mxu0 %v1683
  %1798 = vmatpush.msra.mxu0 %v1682
  %1799 = vmatpush.msra.mxu0 %v1681
  %1800 = vmatpush.msra.mxu0 %v1680
  %1801 = vmatpush.msra.mxu0 %v1679
  %1802 = vmatpush.msra.mxu0 %v1678
  %1803 = vmatmul.f32.gmra.mxu0 %v1692
  %v1804 = vpop.f32.mrf.mxu0
  %v1805 = vadd.f32 %v1688, %v1804
  %1806 = vmatmul.f32.gmra.mxu0 %v1695
  %v1807 = vpop.f32.mrf.mxu0
  %v1808 = vadd.f32 %v1688, %v1807
  %1809 = vmatmul.f32.gmra.mxu0 %v1698
  %v1810 = vpop.f32.mrf.mxu0
  %v1811 = vadd.f32 %v1688, %v1810
  %1812 = vmatmul.f32.gmra.mxu0 %v1701
  %v1813 = vpop.f32.mrf.mxu0
  %v1814 = vadd.f32 %v1688, %v1813
  %1815 = vmatmul.f32.gmra.mxu0 %v1704
  %v1816 = vpop.f32.mrf.mxu0
  %v1817 = vadd.f32 %v1688, %v1816
  %1818 = vmatmul.f32.gmra.mxu0 %v1707
  %v1819 = vpop.f32.mrf.mxu0
  %v1820 = vadd.f32 %v1688, %v1819
  %1821 = vmatmul.f32.gmra.mxu0 %v1710
  %v1822 = vpop.f32.mrf.mxu0
  %v1823 = vadd.f32 %v1688, %v1822
  %1824 = vmatmul.f32.gmra.mxu0 %v1713
  %v1825 = vpop.f32.mrf.mxu0
  %v1826 = vadd.f32 %v1688, %v1825
  %1827 = vmatmul.f32.gmra.mxu0 %v1716
  %v1828 = vpop.f32.mrf.mxu0
  %v1829 = vadd.f32 %v1688, %v1828
  %1830 = vmatmul.f32.gmra.mxu0 %v1719
  %v1831 = vpop.f32.mrf.mxu0
  %v1832 = vadd.f32 %v1688, %v1831
  %1833 = vmatmul.f32.gmra.mxu0 %v1722
  %v1834 = vpop.f32.mrf.mxu0
  %v1835 = vadd.f32 %v1688, %v1834
  %1836 = vmatmul.f32.gmra.mxu0 %v1725
  %v1837 = vpop.f32.mrf.mxu0
  %v1838 = vadd.f32 %v1688, %v1837
  %1839 = vmatmul.f32.gmra.mxu0 %v1728
  %v1840 = vpop.f32.mrf.mxu0
  %v1841 = vadd.f32 %v1688, %v1840
  %1842 = vmatmul.f32.gmra.mxu0 %v1731
  %v1843 = vpop.f32.mrf.mxu0
  %v1844 = vadd.f32 %v1688, %v1843
  %1845 = vmatmul.f32.gmra.mxu0 %v1734
  %v1846 = vpop.f32.mrf.mxu0
  %v1847 = vadd.f32 %v1688, %v1846
  %1848 = vmatmul.f32.gmra.mxu0 %v1737
  %v1849 = vpop.f32.mrf.mxu0
  %v1850 = vadd.f32 %v1688, %v1849
  %1851 = vmatmul.f32.gmra.mxu0 %v1740
  %v1852 = vpop.f32.mrf.mxu0
  %v1853 = vadd.f32 %v1688, %v1852
  %1854 = vmatmul.f32.gmra.mxu0 %v1743
  %v1855 = vpop.f32.mrf.mxu0
  %v1856 = vadd.f32 %v1688, %v1855
  %1857 = vmatmul.f32.gmra.mxu0 %v1746
  %v1858 = vpop.f32.mrf.mxu0
  %v1859 = vadd.f32 %v1688, %v1858
  %1860 = vmatmul.f32.gmra.mxu0 %v1749
  %v1861 = vpop.f32.mrf.mxu0
  %v1862 = vadd.f32 %v1688, %v1861
  %1863 = vmatmul.f32.gmra.mxu0 %v1752
  %v1864 = vpop.f32.mrf.mxu0
  %v1865 = vadd.f32 %v1688, %v1864
  %1866 = vmatmul.f32.gmra.mxu0 %v1755
  %v1867 = vpop.f32.mrf.mxu0
  %v1868 = vadd.f32 %v1688, %v1867
  %1869 = vmatmul.f32.gmra.mxu0 %v1758
  %v1870 = vpop.f32.mrf.mxu0
  %v1871 = vadd.f32 %v1688, %v1870
  %1872 = vmatmul.f32.gmra.mxu0 %v1761
  %v1873 = vpop.f32.mrf.mxu0
  %v1874 = vadd.f32 %v1688, %v1873
  %1875 = vmatmul.f32.gmra.mxu0 %v1764
  %v1876 = vpop.f32.mrf.mxu0
  %v1877 = vadd.f32 %v1688, %v1876
  %1878 = vmatmul.f32.gmra.mxu0 %v1767
  %v1879 = vpop.f32.mrf.mxu0
  %v1880 = vadd.f32 %v1688, %v1879
  %1881 = vmatmul.f32.gmra.mxu0 %v1770
  %v1882 = vpop.f32.mrf.mxu0
  %v1883 = vadd.f32 %v1688, %v1882
  %1884 = vmatmul.f32.gmra.mxu0 %v1773
  %v1885 = vpop.f32.mrf.mxu0
  %v1886 = vadd.f32 %v1688, %v1885
  %1887 = vmatmul.f32.gmra.mxu0 %v1776
  %v1888 = vpop.f32.mrf.mxu0
  %v1889 = vadd.f32 %v1688, %v1888
  %1890 = vmatmul.f32.gmra.mxu0 %v1779
  %v1891 = vpop.f32.mrf.mxu0
  %v1892 = vadd.f32 %v1688, %v1891
  %1893 = vmatmul.f32.gmra.mxu0 %v1782
  %v1894 = vpop.f32.mrf.mxu0
  %v1895 = vadd.f32 %v1688, %v1894
  %1896 = vmatmul.f32.gmra.mxu0 %v1785
  %v1897 = vpop.f32.mrf.mxu0
  %v1898 = vadd.f32 %v1688, %v1897
  %1899 = vdwg.mxu0
  %1900 = vst.msk [vmem:[%s5] sm:$0xff] %vm60, %v1805
  %1901 = vst.msk [vmem:[%s5 + $0x8] sm:$0xff] %vm60, %v1808
  %1902 = vst.msk [vmem:[%s5 + $0x10] sm:$0xff] %vm60, %v1811
  %1903 = vst.msk [vmem:[%s5 + $0x18] sm:$0xff] %vm60, %v1814
  %1904 = vst.msk [vmem:[%s5 + $0x20] sm:$0xff] %vm60, %v1817
  %1905 = vst.msk [vmem:[%s5 + $0x28] sm:$0xff] %vm60, %v1820
  %1906 = vst.msk [vmem:[%s5 + $0x30] sm:$0xff] %vm60, %v1823
  %1907 = vst.msk [vmem:[%s5 + $0x38] sm:$0xff] %vm60, %v1826
  %1908 = vst.msk [vmem:[%s5 + $0x40] sm:$0xff] %vm60, %v1829
  %1909 = vst.msk [vmem:[%s5 + $0x48] sm:$0xff] %vm60, %v1832
  %1910 = vst.msk [vmem:[%s5 + $0x50] sm:$0xff] %vm60, %v1835
  %1911 = vst.msk [vmem:[%s5 + $0x58] sm:$0xff] %vm60, %v1838
  %1912 = vst.msk [vmem:[%s5 + $0x60] sm:$0xff] %vm60, %v1841
  %1913 = vst.msk [vmem:[%s5 + $0x68] sm:$0xff] %vm60, %v1844
  %1914 = vst.msk [vmem:[%s5 + $0x70] sm:$0xff] %vm60, %v1847
  %1915 = vst.msk [vmem:[%s5 + $0x78] sm:$0xff] %vm60, %v1850
  %1916 = vst.msk [vmem:[%s5 + $0x80] sm:$0xff] %vm60, %v1853
  %1917 = vst.msk [vmem:[%s5 + $0x88] sm:$0xff] %vm60, %v1856
  %1918 = vst.msk [vmem:[%s5 + $0x90] sm:$0xff] %vm60, %v1859
  %1919 = vst.msk [vmem:[%s5 + $0x98] sm:$0xff] %vm60, %v1862
  %1920 = vst.msk [vmem:[%s5 + $0xa0] sm:$0xff] %vm60, %v1865
  %1921 = vst.msk [vmem:[%s5 + $0xa8] sm:$0xff] %vm60, %v1868
  %1922 = vst.msk [vmem:[%s5 + $0xb0] sm:$0xff] %vm60, %v1871
  %1923 = vst.msk [vmem:[%s5 + $0xb8] sm:$0xff] %vm60, %v1874
  %1924 = vst.msk [vmem:[%s5 + $0xc0] sm:$0xff] %vm60, %v1877
  %1925 = vst.msk [vmem:[%s5 + $0xc8] sm:$0xff] %vm60, %v1880
  %1926 = vst.msk [vmem:[%s5 + $0xd0] sm:$0xff] %vm60, %v1883
  %1927 = vst.msk [vmem:[%s5 + $0xd8] sm:$0xff] %vm60, %v1886
  %1928 = vst.msk [vmem:[%s5 + $0xe0] sm:$0xff] %vm60, %v1889
  %1929 = vst.msk [vmem:[%s5 + $0xe8] sm:$0xff] %vm60, %v1892
  %1930 = vst.msk [vmem:[%s5 + $0xf0] sm:$0xff] %vm60, %v1895
  %1931 = vst.msk [vmem:[%s5 + $0xf8] sm:$0xff] %vm60, %v1898
  // Predicated region
  $region22: #{tpu_custom_call.1} parent=0 // pred_check
    _
  $region23: #{tpu_custom_call.1} parent=0 // pred_check_branch
    %1933 = sbr.rel (0) target = $region25
  $region24: #{tpu_custom_call.1} parent=0 // pred_region
    _
  $region25: #{tpu_custom_call.1} parent=0 // pred_fallthru
    _
  // Predicated region
  $region26: #{tpu_custom_call.1} parent=0 // pred_check
    _
  $region27: #{tpu_custom_call.1} parent=0 // pred_check_branch
    %1935 = sbr.rel (0) target = $region29
  $region28: #{tpu_custom_call.1} parent=0 // pred_region
    _
  $region29: #{tpu_custom_call.1} parent=0 // pred_fallthru
    _

// kernel: tpu_custom_call.1
$region0: #{tpu_custom_call.1}
  #allocation0 [shape = 'u32[]', space=smem, size = 0x4, offset = 0x4, fixed_abs, tag = 'smem constant byte address 0x4 - core index']
  #allocation1 [shape = 'u32[72,128]{1,0:T(1,128)}', space=vmem, size = 0x9000, scoped, tag = 'internal scratch']
  %s0 = inlined_call_operand.vmem [shape: f32[256,32], index: 0, kind: input, shape index: {}]
  %s1 = inlined_call_operand.vmem [shape: f32[32,64], index: 1, kind: input, shape index: {}]
  %s2 = inlined_call_operand.vmem [shape: f32[1,64], index: 2, kind: input, shape index: {}]
  %s3 = inlined_call_operand.vmem [shape: f32[64,32], index: 3, kind: input, shape index: {}]
  %s4 = inlined_call_operand.vmem [shape: f32[1,32], index: 4, kind: input, shape index: {}]
  %s5 = inlined_call_operand.vmem [shape: f32[256,32], index: 5, kind: output, shape index: {}]
  %s6 = sld [smem:[#allocation0]]
  $region30: #{tpu_custom_call.1} parent=0
    _
  %s8 = ssub.s32 1, %s6
  %s9 = scalar_select 0, %s8, %s6
  // Predicated region
  $region2: #{tpu_custom_call.1} parent=0 // pred_check
    _
  $region3: #{tpu_custom_call.1} parent=0 // pred_check_branch
    %11 = sbr.rel (0) target = $region5
  $region4: #{tpu_custom_call.1} parent=0 // pred_region
    _
  $region5: #{tpu_custom_call.1} parent=0 // pred_fallthru
    _
  // Predicated region
  $region6: #{tpu_custom_call.1} parent=0 // pred_check
    _
  $region7: #{tpu_custom_call.1} parent=0 // pred_check_branch
    %13 = sbr.rel (0) target = $region9
  $region8: #{tpu_custom_call.1} parent=0 // pred_region
    _
  $region9: #{tpu_custom_call.1} parent=0 // pred_fallthru
    _
  // Predicated region
  $region10: #{tpu_custom_call.1} parent=0 // pred_check
    _
  $region11: #{tpu_custom_call.1} parent=0 // pred_check_branch
    %15 = sbr.rel (0) target = $region13
  $region12: #{tpu_custom_call.1} parent=0 // pred_region
    _
  $region13: #{tpu_custom_call.1} parent=0 // pred_fallthru
    _
  // Predicated region
  $region14: #{tpu_custom_call.1} parent=0 // pred_check
    _
  $region15: #{tpu_custom_call.1} parent=0 // pred_check_branch
    %17 = sbr.rel (0) target = $region17
  $region16: #{tpu_custom_call.1} parent=0 // pred_region
    _
  $region17: #{tpu_custom_call.1} parent=0 // pred_fallthru
    _
  // Predicated region
  $region18: #{tpu_custom_call.1} parent=0 // pred_check
    _
  $region19: #{tpu_custom_call.1} parent=0 // pred_check_branch
    %19 = sbr.rel (0) target = $region21
  $region20: #{tpu_custom_call.1} parent=0 // pred_region
    _
  $region21: #{tpu_custom_call.1} parent=0 // pred_fallthru
    _
  %v20 = vld [vmem:[%s0] sm:$0xff]
  %v21 = vld [vmem:[%s0 + $0x8] sm:$0xff]
  %v22 = vld [vmem:[%s0 + $0x10] sm:$0xff]
  %v23 = vld [vmem:[%s0 + $0x18] sm:$0xff]
  %v24 = vld [vmem:[%s0 + $0x20] sm:$0xff]
  %v25 = vld [vmem:[%s0 + $0x28] sm:$0xff]
  %v26 = vld [vmem:[%s0 + $0x30] sm:$0xff]
  %v27 = vld [vmem:[%s0 + $0x38] sm:$0xff]
  %v28 = vld [vmem:[%s0 + $0x40] sm:$0xff]
  %v29 = vld [vmem:[%s0 + $0x48] sm:$0xff]
  %v30 = vld [vmem:[%s0 + $0x50] sm:$0xff]
  %v31 = vld [vmem:[%s0 + $0x58] sm:$0xff]
  %v32 = vld [vmem:[%s0 + $0x60] sm:$0xff]
  %v33 = vld [vmem:[%s0 + $0x68] sm:$0xff]
  %v34 = vld [vmem:[%s0 + $0x70] sm:$0xff]
  %v35 = vld [vmem:[%s0 + $0x78] sm:$0xff]
  %v36 = vld [vmem:[%s0 + $0x80] sm:$0xff]
  %v37 = vld [vmem:[%s0 + $0x88] sm:$0xff]
  %v38 = vld [vmem:[%s0 + $0x90] sm:$0xff]
  %v39 = vld [vmem:[%s0 + $0x98] sm:$0xff]
  %v40 = vld [vmem:[%s0 + $0xa0] sm:$0xff]
  %v41 = vld [vmem:[%s0 + $0xa8] sm:$0xff]
  %v42 = vld [vmem:[%s0 + $0xb0] sm:$0xff]
  %v43 = vld [vmem:[%s0 + $0xb8] sm:$0xff]
  %v44 = vld [vmem:[%s0 + $0xc0] sm:$0xff]
  %v45 = vld [vmem:[%s0 + $0xc8] sm:$0xff]
  %v46 = vld [vmem:[%s0 + $0xd0] sm:$0xff]
  %v47 = vld [vmem:[%s0 + $0xd8] sm:$0xff]
  %v48 = vld [vmem:[%s0 + $0xe0] sm:$0xff]
  %v49 = vld [vmem:[%s0 + $0xe8] sm:$0xff]
  %v50 = vld [vmem:[%s0 + $0xf0] sm:$0xff]
  %v51 = vld [vmem:[%s0 + $0xf8] sm:$0xff]
  %v52 = vld [vmem:[%s1] sm:$0xff]
  %v53 = vld [vmem:[%s1 + $0x8] sm:$0xff]
  %v54 = vld [vmem:[%s1 + $0x10] sm:$0xff]
  %v55 = vld [vmem:[%s1 + $0x18] sm:$0xff]
  %v56 = vld [vmem:[%s2] sm:$0x1]
  %v58 = vperm.slane %v56, 0
  %vm60 = vcmask 261120
  %v62 = vsel %vm60, %v20, 0
  %v65 = vsel %vm60, %v21, 0
  %v68 = vsel %vm60, %v22, 0
  %v71 = vsel %vm60, %v23, 0
  %v74 = vsel %vm60, %v24, 0
  %v77 = vsel %vm60, %v25, 0
  %v80 = vsel %vm60, %v26, 0
  %v83 = vsel %vm60, %v27, 0
  %v86 = vsel %vm60, %v28, 0
  %v89 = vsel %vm60, %v29, 0
  %v92 = vsel %vm60, %v30, 0
  %v95 = vsel %vm60, %v31, 0
  %v98 = vsel %vm60, %v32, 0
  %v101 = vsel %vm60, %v33, 0
  %v104 = vsel %vm60, %v34, 0
  %v107 = vsel %vm60, %v35, 0
  %v110 = vsel %vm60, %v36, 0
  %v113 = vsel %vm60, %v37, 0
  %v116 = vsel %vm60, %v38, 0
  %v119 = vsel %vm60, %v39, 0
  %v122 = vsel %vm60, %v40, 0
  %v125 = vsel %vm60, %v41, 0
  %v128 = vsel %vm60, %v42, 0
  %v131 = vsel %vm60, %v43, 0
  %v134 = vsel %vm60, %v44, 0
  %v137 = vsel %vm60, %v45, 0
  %v140 = vsel %vm60, %v46, 0
  %v143 = vsel %vm60, %v47, 0
  %v146 = vsel %vm60, %v48, 0
  %v149 = vsel %vm60, %v49, 0
  %v152 = vsel %vm60, %v50, 0
  %v155 = vsel %vm60, %v51, 0
  %157 = vmatpush.msra.mxu0 0.0
  %158 = vmatpush.msra.mxu0 0.0
  %159 = vmatpush.msra.mxu0 0.0
  %160 = vmatpush.msra.mxu0 0.0
  %161 = vmatpush.msra.mxu0 0.0
  %162 = vmatpush.msra.mxu0 0.0
  %163 = vmatpush.msra.mxu0 0.0
  %164 = vmatpush.msra.mxu0 0.0
  %165 = vmatpush.msra.mxu0 0.0
  %166 = vmatpush.msra.mxu0 0.0
  %167 = vmatpush.msra.mxu0 0.0
  %168 = vmatpush.msra.mxu0 0.0
  %169 = vmatpush.msra.mxu0 %v55
  %170 = vmatpush.msra.mxu0 %v54
  %171 = vmatpush.msra.mxu0 %v53
  %172 = vmatpush.msra.mxu0 %v52
  %173 = vmatmul.f32.gmra.mxu0 %v62
  %v174 = vpop.f32.mrf.mxu0
  %v175 = vadd.f32 %v58, %v174
  %176 = vmatmul.f32.gmra.mxu0 %v65
  %v177 = vpop.f32.mrf.mxu0
  %v178 = vadd.f32 %v58, %v177
  %179 = vmatmul.f32.gmra.mxu0 %v68
  %v180 = vpop.f32.mrf.mxu0
  %v181 = vadd.f32 %v58, %v180
  %182 = vmatmul.f32.gmra.mxu0 %v71
  %v183 = vpop.f32.mrf.mxu0
  %v184 = vadd.f32 %v58, %v183
  %185 = vmatmul.f32.gmra.mxu0 %v74
  %v186 = vpop.f32.mrf.mxu0
  %v187 = vadd.f32 %v58, %v186
  %188 = vmatmul.f32.gmra.mxu0 %v77
  %v189 = vpop.f32.mrf.mxu0
  %v190 = vadd.f32 %v58, %v189
  %191 = vmatmul.f32.gmra.mxu0 %v80
  %v192 = vpop.f32.mrf.mxu0
  %v193 = vadd.f32 %v58, %v192
  %194 = vmatmul.f32.gmra.mxu0 %v83
  %v195 = vpop.f32.mrf.mxu0
  %v196 = vadd.f32 %v58, %v195
  %197 = vmatmul.f32.gmra.mxu0 %v86
  %v198 = vpop.f32.mrf.mxu0
  %v199 = vadd.f32 %v58, %v198
  %200 = vmatmul.f32.gmra.mxu0 %v89
  %v201 = vpop.f32.mrf.mxu0
  %v202 = vadd.f32 %v58, %v201
  %203 = vmatmul.f32.gmra.mxu0 %v92
  %v204 = vpop.f32.mrf.mxu0
  %v205 = vadd.f32 %v58, %v204
  %206 = vmatmul.f32.gmra.mxu0 %v95
  %v207 = vpop.f32.mrf.mxu0
  %v208 = vadd.f32 %v58, %v207
  %209 = vmatmul.f32.gmra.mxu0 %v98
  %v210 = vpop.f32.mrf.mxu0
  %v211 = vadd.f32 %v58, %v210
  %212 = vmatmul.f32.gmra.mxu0 %v101
  %v213 = vpop.f32.mrf.mxu0
  %v214 = vadd.f32 %v58, %v213
  %215 = vmatmul.f32.gmra.mxu0 %v104
  %v216 = vpop.f32.mrf.mxu0
  %v217 = vadd.f32 %v58, %v216
  %218 = vmatmul.f32.gmra.mxu0 %v107
  %v219 = vpop.f32.mrf.mxu0
  %v220 = vadd.f32 %v58, %v219
  %221 = vmatmul.f32.gmra.mxu0 %v110
  %v222 = vpop.f32.mrf.mxu0
  %v223 = vadd.f32 %v58, %v222
  %224 = vmatmul.f32.gmra.mxu0 %v113
  %v225 = vpop.f32.mrf.mxu0
  %v226 = vadd.f32 %v58, %v225
  %227 = vmatmul.f32.gmra.mxu0 %v116
  %v228 = vpop.f32.mrf.mxu0
  %v229 = vadd.f32 %v58, %v228
  %230 = vmatmul.f32.gmra.mxu0 %v119
  %v231 = vpop.f32.mrf.mxu0
  %v232 = vadd.f32 %v58, %v231
  %233 = vmatmul.f32.gmra.mxu0 %v122
  %v234 = vpop.f32.mrf.mxu0
  %v235 = vadd.f32 %v58, %v234
  %236 = vmatmul.f32.gmra.mxu0 %v125
  %v237 = vpop.f32.mrf.mxu0
  %v238 = vadd.f32 %v58, %v237
  %239 = vmatmul.f32.gmra.mxu0 %v128
  %v240 = vpop.f32.mrf.mxu0
  %v241 = vadd.f32 %v58, %v240
  %242 = vmatmul.f32.gmra.mxu0 %v131
  %v243 = vpop.f32.mrf.mxu0
  %v244 = vadd.f32 %v58, %v243
  %245 = vmatmul.f32.gmra.mxu0 %v134
  %v246 = vpop.f32.mrf.mxu0
  %v247 = vadd.f32 %v58, %v246
  %248 = vmatmul.f32.gmra.mxu0 %v137
  %v249 = vpop.f32.mrf.mxu0
  %v250 = vadd.f32 %v58, %v249
  %251 = vmatmul.f32.gmra.mxu0 %v140
  %v252 = vpop.f32.mrf.mxu0
  %v253 = vadd.f32 %v58, %v252
  %254 = vmatmul.f32.gmra.mxu0 %v143
  %v255 = vpop.f32.mrf.mxu0
  %v256 = vadd.f32 %v58, %v255
  %257 = vmatmul.f32.gmra.mxu0 %v146
  %v258 = vpop.f32.mrf.mxu0
  %v259 = vadd.f32 %v58, %v258
  %260 = vmatmul.f32.gmra.mxu0 %v149
  %v261 = vpop.f32.mrf.mxu0
  %v262 = vadd.f32 %v58, %v261
  %263 = vmatmul.f32.gmra.mxu0 %v152
  %v264 = vpop.f32.mrf.mxu0
  %v265 = vadd.f32 %v58, %v264
  %266 = vmatmul.f32.gmra.mxu0 %v155
  %v267 = vpop.f32.mrf.mxu0
  %v268 = vadd.f32 %v58, %v267
  %269 = vdwg.mxu0
  %v270 = vmul.f32 %v175, 0.5
  %v271 = vmul.f32 %v178, 0.5
  %v272 = vmul.f32 %v181, 0.5
  %v273 = vmul.f32 %v184, 0.5
  %v274 = vmul.f32 %v187, 0.5
  %v275 = vmul.f32 %v190, 0.5
  %v276 = vmul.f32 %v193, 0.5
  %v277 = vmul.f32 %v196, 0.5
  %v278 = vmul.f32 %v199, 0.5
  %v279 = vmul.f32 %v202, 0.5
  %v280 = vmul.f32 %v205, 0.5
  %v281 = vmul.f32 %v208, 0.5
  %v282 = vmul.f32 %v211, 0.5
  %v283 = vmul.f32 %v214, 0.5
  %v284 = vmul.f32 %v217, 0.5
  %v285 = vmul.f32 %v220, 0.5
  %v286 = vmul.f32 %v223, 0.5
  %v287 = vmul.f32 %v226, 0.5
  %v288 = vmul.f32 %v229, 0.5
  %v289 = vmul.f32 %v232, 0.5
  %v290 = vmul.f32 %v235, 0.5
  %v291 = vmul.f32 %v238, 0.5
  %v292 = vmul.f32 %v241, 0.5
  %v293 = vmul.f32 %v244, 0.5
  %v294 = vmul.f32 %v247, 0.5
  %v295 = vmul.f32 %v250, 0.5
  %v296 = vmul.f32 %v253, 0.5
  %v297 = vmul.f32 %v256, 0.5
  %v298 = vmul.f32 %v259, 0.5
  %v299 = vmul.f32 %v262, 0.5
  %v300 = vmul.f32 %v265, 0.5
  %v301 = vmul.f32 %v268, 0.5
  %v302 = vmul.f32 %v175, 0.70710677
  %v303 = vmul.f32 %v178, 0.70710677
  %v304 = vmul.f32 %v181, 0.70710677
  %v305 = vmul.f32 %v184, 0.70710677
  %v306 = vmul.f32 %v187, 0.70710677
  %v307 = vmul.f32 %v190, 0.70710677
  %v308 = vmul.f32 %v193, 0.70710677
  %v309 = vmul.f32 %v196, 0.70710677
  %v310 = vmul.f32 %v199, 0.70710677
  %v311 = vmul.f32 %v202, 0.70710677
  %v312 = vmul.f32 %v205, 0.70710677
  %v313 = vmul.f32 %v208, 0.70710677
  %v314 = vmul.f32 %v211, 0.70710677
  %v315 = vmul.f32 %v214, 0.70710677
  %v316 = vmul.f32 %v217, 0.70710677
  %v317 = vmul.f32 %v220, 0.70710677
  %v318 = vmul.f32 %v223, 0.70710677
  %v319 = vmul.f32 %v226, 0.70710677
  %v320 = vmul.f32 %v229, 0.70710677
  %v321 = vmul.f32 %v232, 0.70710677
  %v322 = vmul.f32 %v235, 0.70710677
  %v323 = vmul.f32 %v238, 0.70710677
  %v324 = vmul.f32 %v241, 0.70710677
  %v325 = vmul.f32 %v244, 0.70710677
  %v326 = vmul.f32 %v247, 0.70710677
  %v327 = vmul.f32 %v250, 0.70710677
  %v328 = vmul.f32 %v253, 0.70710677
  %v329 = vmul.f32 %v256, 0.70710677
  %v330 = vmul.f32 %v259, 0.70710677
  %v331 = vmul.f32 %v262, 0.70710677
  %v332 = vmul.f32 %v265, 0.70710677
  %v333 = vmul.f32 %v268, 0.70710677
  %v334 = vmul.f32 %v302, %v302
  %v335 = vmin.f32 16.0, %v334
  %v336 = vmul.f32 %v335, 2.1237322e-06
  %v337 = vadd.f32 %v336, 0.00028619796
  %v338 = vmul.f32 %v335, %v337
  %v339 = vadd.f32 %v338, 0.0036580483
  %v340 = vmul.f32 %v335, %v339
  %v341 = vadd.f32 %v340, 0.05243302
  %v342 = vmul.f32 %v335, %v341
  %v343 = vadd.f32 %v342, 0.18741608
  %v344 = vmul.f32 %v335, %v343
  %v345 = vadd.f32 %v344, 1.1283791
  %v346 = vmul.f32 %v302, %v345
  %v347 = vmul.f32 %v335, 3.8918573e-05
  %v348 = vadd.f32 %v347, 0.001143296
  %v349 = vmul.f32 %v335, %v348
  %v350 = vadd.f32 %v349, 0.014752088
  %v351 = vmul.f32 %v335, %v350
  %v352 = vadd.f32 %v351, 0.112945676
  %v353 = vmul.f32 %v335, %v352
  %v354 = vadd.f32 %v353, 0.4994258
  %v355 = vmul.f32 %v335, %v354
  %v356 = vadd.f32 %v355, 1.0
  %v357 = vrcp.pop %v356
  %v358 = vmul.f32 %v356, %v357
  %v359 = vsub.f32 1.0, %v358
  %v360 = vmul.f32 %v357, %v359
  %v361 = vadd.f32 %v357, %v360
  %vm362 = vweird.f32 %v356
  %vm363 = vweird.f32 %v357
  %vm364 = vmor %vm362, %vm363
  %v365 = vsel %vm364, %v357, %v361
  %v366 = vand.u32 2147483647, %v356
  %vm367 = vcmp.eq.f32.partialorder %v366, 8.507059e+37
  %v368 = vand.u32 %v356, 2147483648
  %v369 = vor.u32 1.1754944e-38, %v368
  %v370 = vsel %vm367, %v369, %v365
  %v371 = vmul.f32 %v346, %v370
  %v372 = vmin.f32 %v371, 1.0
  %v373 = vmax.f32 %v372, -1.0
  %v374 = vmul.f32 %v303, %v303
  %v375 = vmin.f32 16.0, %v374
  %v376 = vmul.f32 %v375, 2.1237322e-06
  %v377 = vadd.f32 %v376, 0.00028619796
  %v378 = vmul.f32 %v375, %v377
  %v379 = vadd.f32 %v378, 0.0036580483
  %v380 = vmul.f32 %v375, %v379
  %v381 = vadd.f32 %v380, 0.05243302
  %v382 = vmul.f32 %v375, %v381
  %v383 = vadd.f32 %v382, 0.18741608
  %v384 = vmul.f32 %v375, %v383
  %v385 = vadd.f32 %v384, 1.1283791
  %v386 = vmul.f32 %v303, %v385
  %v387 = vmul.f32 %v375, 3.8918573e-05
  %v388 = vadd.f32 %v387, 0.001143296
  %v389 = vmul.f32 %v375, %v388
  %v390 = vadd.f32 %v389, 0.014752088
  %v391 = vmul.f32 %v375, %v390
  %v392 = vadd.f32 %v391, 0.112945676
  %v393 = vmul.f32 %v375, %v392
  %v394 = vadd.f32 %v393, 0.4994258
  %v395 = vmul.f32 %v375, %v394
  %v396 = vadd.f32 %v395, 1.0
  %v397 = vrcp.pop %v396
  %v398 = vmul.f32 %v396, %v397
  %v399 = vsub.f32 1.0, %v398
  %v400 = vmul.f32 %v397, %v399
  %v401 = vadd.f32 %v397, %v400
  %vm402 = vweird.f32 %v396
  %vm403 = vweird.f32 %v397
  %vm404 = vmor %vm402, %vm403
  %v405 = vsel %vm404, %v397, %v401
  %v406 = vand.u32 2147483647, %v396
  %vm407 = vcmp.eq.f32.partialorder %v406, 8.507059e+37
  %v408 = vand.u32 %v396, 2147483648
  %v409 = vor.u32 1.1754944e-38, %v408
  %v410 = vsel %vm407, %v409, %v405
  %v411 = vmul.f32 %v386, %v410
  %v412 = vmin.f32 %v411, 1.0
  %v413 = vmax.f32 %v412, -1.0
  %v414 = vmul.f32 %v304, %v304
  %v415 = vmin.f32 16.0, %v414
  %v416 = vmul.f32 %v415, 2.1237322e-06
  %v417 = vadd.f32 %v416, 0.00028619796
  %v418 = vmul.f32 %v415, %v417
  %v419 = vadd.f32 %v418, 0.0036580483
  %v420 = vmul.f32 %v415, %v419
  %v421 = vadd.f32 %v420, 0.05243302
  %v422 = vmul.f32 %v415, %v421
  %v423 = vadd.f32 %v422, 0.18741608
  %v424 = vmul.f32 %v415, %v423
  %v425 = vadd.f32 %v424, 1.1283791
  %v426 = vmul.f32 %v304, %v425
  %v427 = vmul.f32 %v415, 3.8918573e-05
  %v428 = vadd.f32 %v427, 0.001143296
  %v429 = vmul.f32 %v415, %v428
  %v430 = vadd.f32 %v429, 0.014752088
  %v431 = vmul.f32 %v415, %v430
  %v432 = vadd.f32 %v431, 0.112945676
  %v433 = vmul.f32 %v415, %v432
  %v434 = vadd.f32 %v433, 0.4994258
  %v435 = vmul.f32 %v415, %v434
  %v436 = vadd.f32 %v435, 1.0
  %v437 = vrcp.pop %v436
  %v438 = vmul.f32 %v436, %v437
  %v439 = vsub.f32 1.0, %v438
  %v440 = vmul.f32 %v437, %v439
  %v441 = vadd.f32 %v437, %v440
  %vm442 = vweird.f32 %v436
  %vm443 = vweird.f32 %v437
  %vm444 = vmor %vm442, %vm443
  %v445 = vsel %vm444, %v437, %v441
  %v446 = vand.u32 2147483647, %v436
  %vm447 = vcmp.eq.f32.partialorder %v446, 8.507059e+37
  %v448 = vand.u32 %v436, 2147483648
  %v449 = vor.u32 1.1754944e-38, %v448
  %v450 = vsel %vm447, %v449, %v445
  %v451 = vmul.f32 %v426, %v450
  %v452 = vmin.f32 %v451, 1.0
  %v453 = vmax.f32 %v452, -1.0
  %v454 = vmul.f32 %v305, %v305
  %v455 = vmin.f32 16.0, %v454
  %v456 = vmul.f32 %v455, 2.1237322e-06
  %v457 = vadd.f32 %v456, 0.00028619796
  %v458 = vmul.f32 %v455, %v457
  %v459 = vadd.f32 %v458, 0.0036580483
  %v460 = vmul.f32 %v455, %v459
  %v461 = vadd.f32 %v460, 0.05243302
  %v462 = vmul.f32 %v455, %v461
  %v463 = vadd.f32 %v462, 0.18741608
  %v464 = vmul.f32 %v455, %v463
  %v465 = vadd.f32 %v464, 1.1283791
  %v466 = vmul.f32 %v305, %v465
  %v467 = vmul.f32 %v455, 3.8918573e-05
  %v468 = vadd.f32 %v467, 0.001143296
  %v469 = vmul.f32 %v455, %v468
  %v470 = vadd.f32 %v469, 0.014752088
  %v471 = vmul.f32 %v455, %v470
  %v472 = vadd.f32 %v471, 0.112945676
  %v473 = vmul.f32 %v455, %v472
  %v474 = vadd.f32 %v473, 0.4994258
  %v475 = vmul.f32 %v455, %v474
  %v476 = vadd.f32 %v475, 1.0
  %v477 = vrcp.pop %v476
  %v478 = vmul.f32 %v476, %v477
  %v479 = vsub.f32 1.0, %v478
  %v480 = vmul.f32 %v477, %v479
  %v481 = vadd.f32 %v477, %v480
  %vm482 = vweird.f32 %v476
  %vm483 = vweird.f32 %v477
  %vm484 = vmor %vm482, %vm483
  %v485 = vsel %vm484, %v477, %v481
  %v486 = vand.u32 2147483647, %v476
  %vm487 = vcmp.eq.f32.partialorder %v486, 8.507059e+37
  %v488 = vand.u32 %v476, 2147483648
  %v489 = vor.u32 1.1754944e-38, %v488
  %v490 = vsel %vm487, %v489, %v485
  %v491 = vmul.f32 %v466, %v490
  %v492 = vmin.f32 %v491, 1.0
  %v493 = vmax.f32 %v492, -1.0
  %v494 = vmul.f32 %v306, %v306
  %v495 = vmin.f32 16.0, %v494
  %v496 = vmul.f32 %v495, 2.1237322e-06
  %v497 = vadd.f32 %v496, 0.00028619796
  %v498 = vmul.f32 %v495, %v497
  %v499 = vadd.f32 %v498, 0.0036580483
  %v500 = vmul.f32 %v495, %v499
  %v501 = vadd.f32 %v500, 0.05243302
  %v502 = vmul.f32 %v495, %v501
  %v503 = vadd.f32 %v502, 0.18741608
  %v504 = vmul.f32 %v495, %v503
  %v505 = vadd.f32 %v504, 1.1283791
  %v506 = vmul.f32 %v306, %v505
  %v507 = vmul.f32 %v495, 3.8918573e-05
  %v508 = vadd.f32 %v507, 0.001143296
  %v509 = vmul.f32 %v495, %v508
  %v510 = vadd.f32 %v509, 0.014752088
  %v511 = vmul.f32 %v495, %v510
  %v512 = vadd.f32 %v511, 0.112945676
  %v513 = vmul.f32 %v495, %v512
  %v514 = vadd.f32 %v513, 0.4994258
  %v515 = vmul.f32 %v495, %v514
  %v516 = vadd.f32 %v515, 1.0
  %v517 = vrcp.pop %v516
  %v518 = vmul.f32 %v516, %v517
  %v519 = vsub.f32 1.0, %v518
  %v520 = vmul.f32 %v517, %v519
  %v521 = vadd.f32 %v517, %v520
  %vm522 = vweird.f32 %v516
  %vm523 = vweird.f32 %v517
  %vm524 = vmor %vm522, %vm523
  %v525 = vsel %vm524, %v517, %v521
  %v526 = vand.u32 2147483647, %v516
  %vm527 = vcmp.eq.f32.partialorder %v526, 8.507059e+37
  %v528 = vand.u32 %v516, 2147483648
  %v529 = vor.u32 1.1754944e-38, %v528
  %v530 = vsel %vm527, %v529, %v525
  %v531 = vmul.f32 %v506, %v530
  %v532 = vmin.f32 %v531, 1.0
  %v533 = vmax.f32 %v532, -1.0
  %v534 = vmul.f32 %v307, %v307
  %v535 = vmin.f32 16.0, %v534
  %v536 = vmul.f32 %v535, 2.1237322e-06
  %v537 = vadd.f32 %v536, 0.00028619796
  %v538 = vmul.f32 %v535, %v537
  %v539 = vadd.f32 %v538, 0.0036580483
  %v540 = vmul.f32 %v535, %v539
  %v541 = vadd.f32 %v540, 0.05243302
  %v542 = vmul.f32 %v535, %v541
  %v543 = vadd.f32 %v542, 0.18741608
  %v544 = vmul.f32 %v535, %v543
  %v545 = vadd.f32 %v544, 1.1283791
  %v546 = vmul.f32 %v307, %v545
  %v547 = vmul.f32 %v535, 3.8918573e-05
  %v548 = vadd.f32 %v547, 0.001143296
  %v549 = vmul.f32 %v535, %v548
  %v550 = vadd.f32 %v549, 0.014752088
  %v551 = vmul.f32 %v535, %v550
  %v552 = vadd.f32 %v551, 0.112945676
  %v553 = vmul.f32 %v535, %v552
  %v554 = vadd.f32 %v553, 0.4994258
  %v555 = vmul.f32 %v535, %v554
  %v556 = vadd.f32 %v555, 1.0
  %v557 = vrcp.pop %v556
  %v558 = vmul.f32 %v556, %v557
  %v559 = vsub.f32 1.0, %v558
  %v560 = vmul.f32 %v557, %v559
  %v561 = vadd.f32 %v557, %v560
  %vm562 = vweird.f32 %v556
  %vm563 = vweird.f32 %v557
  %vm564 = vmor %vm562, %vm563
  %v565 = vsel %vm564, %v557, %v561
  %v566 = vand.u32 2147483647, %v556
  %vm567 = vcmp.eq.f32.partialorder %v566, 8.507059e+37
  %v568 = vand.u32 %v556, 2147483648
  %v569 = vor.u32 1.1754944e-38, %v568
  %v570 = vsel %vm567, %v569, %v565
  %v571 = vmul.f32 %v546, %v570
  %v572 = vmin.f32 %v571, 1.0
  %v573 = vmax.f32 %v572, -1.0
  %v574 = vmul.f32 %v308, %v308
  %v575 = vmin.f32 16.0, %v574
  %v576 = vmul.f32 %v575, 2.1237322e-06
  %v577 = vadd.f32 %v576, 0.00028619796
  %v578 = vmul.f32 %v575, %v577
  %v579 = vadd.f32 %v578, 0.0036580483
  %v580 = vmul.f32 %v575, %v579
  %v581 = vadd.f32 %v580, 0.05243302
  %v582 = vmul.f32 %v575, %v581
  %v583 = vadd.f32 %v582, 0.18741608
  %v584 = vmul.f32 %v575, %v583
  %v585 = vadd.f32 %v584, 1.1283791
  %v586 = vmul.f32 %v308, %v585
  %v587 = vmul.f32 %v575, 3.8918573e-05
  %v588 = vadd.f32 %v587, 0.001143296
  %v589 = vmul.f32 %v575, %v588
  %v590 = vadd.f32 %v589, 0.014752088
  %v591 = vmul.f32 %v575, %v590
  %v592 = vadd.f32 %v591, 0.112945676
  %v593 = vmul.f32 %v575, %v592
  %v594 = vadd.f32 %v593, 0.4994258
  %v595 = vmul.f32 %v575, %v594
  %v596 = vadd.f32 %v595, 1.0
  %v597 = vrcp.pop %v596
  %v598 = vmul.f32 %v596, %v597
  %v599 = vsub.f32 1.0, %v598
  %v600 = vmul.f32 %v597, %v599
  %v601 = vadd.f32 %v597, %v600
  %vm602 = vweird.f32 %v596
  %vm603 = vweird.f32 %v597
  %vm604 = vmor %vm602, %vm603
  %v605 = vsel %vm604, %v597, %v601
  %v606 = vand.u32 2147483647, %v596
  %vm607 = vcmp.eq.f32.partialorder %v606, 8.507059e+37
  %v608 = vand.u32 %v596, 2147483648
  %v609 = vor.u32 1.1754944e-38, %v608
  %v610 = vsel %vm607, %v609, %v605
  %v611 = vmul.f32 %v586, %v610
  %v612 = vmin.f32 %v611, 1.0
  %v613 = vmax.f32 %v612, -1.0
  %v614 = vmul.f32 %v309, %v309
  %v615 = vmin.f32 16.0, %v614
  %v616 = vmul.f32 %v615, 2.1237322e-06
  %v617 = vadd.f32 %v616, 0.00028619796
  %v618 = vmul.f32 %v615, %v617
  %v619 = vadd.f32 %v618, 0.0036580483
  %v620 = vmul.f32 %v615, %v619
  %v621 = vadd.f32 %v620, 0.05243302
  %v622 = vmul.f32 %v615, %v621
  %v623 = vadd.f32 %v622, 0.18741608
  %v624 = vmul.f32 %v615, %v623
  %v625 = vadd.f32 %v624, 1.1283791
  %v626 = vmul.f32 %v309, %v625
  %v627 = vmul.f32 %v615, 3.8918573e-05
  %v628 = vadd.f32 %v627, 0.001143296
  %v629 = vmul.f32 %v615, %v628
  %v630 = vadd.f32 %v629, 0.014752088
  %v631 = vmul.f32 %v615, %v630
  %v632 = vadd.f32 %v631, 0.112945676
  %v633 = vmul.f32 %v615, %v632
  %v634 = vadd.f32 %v633, 0.4994258
  %v635 = vmul.f32 %v615, %v634
  %v636 = vadd.f32 %v635, 1.0
  %v637 = vrcp.pop %v636
  %v638 = vmul.f32 %v636, %v637
  %v639 = vsub.f32 1.0, %v638
  %v640 = vmul.f32 %v637, %v639
  %v641 = vadd.f32 %v637, %v640
  %vm642 = vweird.f32 %v636
  %vm643 = vweird.f32 %v637
  %vm644 = vmor %vm642, %vm643
  %v645 = vsel %vm644, %v637, %v641
  %v646 = vand.u32 2147483647, %v636
  %vm647 = vcmp.eq.f32.partialorder %v646, 8.507059e+37
  %v648 = vand.u32 %v636, 2147483648
  %v649 = vor.u32 1.1754944e-38, %v648
  %v650 = vsel %vm647, %v649, %v645
  %v651 = vmul.f32 %v626, %v650
  %v652 = vmin.f32 %v651, 1.0
  %v653 = vmax.f32 %v652, -1.0
  %v654 = vmul.f32 %v310, %v310
  %v655 = vmin.f32 16.0, %v654
  %v656 = vmul.f32 %v655, 2.1237322e-06
  %v657 = vadd.f32 %v656, 0.00028619796
  %v658 = vmul.f32 %v655, %v657
  %v659 = vadd.f32 %v658, 0.0036580483
  %v660 = vmul.f32 %v655, %v659
  %v661 = vadd.f32 %v660, 0.05243302
  %v662 = vmul.f32 %v655, %v661
  %v663 = vadd.f32 %v662, 0.18741608
  %v664 = vmul.f32 %v655, %v663
  %v665 = vadd.f32 %v664, 1.1283791
  %v666 = vmul.f32 %v310, %v665
  %v667 = vmul.f32 %v655, 3.8918573e-05
  %v668 = vadd.f32 %v667, 0.001143296
  %v669 = vmul.f32 %v655, %v668
  %v670 = vadd.f32 %v669, 0.014752088
  %v671 = vmul.f32 %v655, %v670
  %v672 = vadd.f32 %v671, 0.112945676
  %v673 = vmul.f32 %v655, %v672
  %v674 = vadd.f32 %v673, 0.4994258
  %v675 = vmul.f32 %v655, %v674
  %v676 = vadd.f32 %v675, 1.0
  %v677 = vrcp.pop %v676
  %v678 = vmul.f32 %v676, %v677
  %v679 = vsub.f32 1.0, %v678
  %v680 = vmul.f32 %v677, %v679
  %v681 = vadd.f32 %v677, %v680
  %vm682 = vweird.f32 %v676
  %vm683 = vweird.f32 %v677
  %vm684 = vmor %vm682, %vm683
  %v685 = vsel %vm684, %v677, %v681
  %v686 = vand.u32 2147483647, %v676
  %vm687 = vcmp.eq.f32.partialorder %v686, 8.507059e+37
  %v688 = vand.u32 %v676, 2147483648
  %v689 = vor.u32 1.1754944e-38, %v688
  %v690 = vsel %vm687, %v689, %v685
  %v691 = vmul.f32 %v666, %v690
  %v692 = vmin.f32 %v691, 1.0
  %v693 = vmax.f32 %v692, -1.0
  %v694 = vmul.f32 %v311, %v311
  %v695 = vmin.f32 16.0, %v694
  %v696 = vmul.f32 %v695, 2.1237322e-06
  %v697 = vadd.f32 %v696, 0.00028619796
  %v698 = vmul.f32 %v695, %v697
  %v699 = vadd.f32 %v698, 0.0036580483
  %v700 = vmul.f32 %v695, %v699
  %v701 = vadd.f32 %v700, 0.05243302
  %v702 = vmul.f32 %v695, %v701
  %v703 = vadd.f32 %v702, 0.18741608
  %v704 = vmul.f32 %v695, %v703
  %v705 = vadd.f32 %v704, 1.1283791
  %v706 = vmul.f32 %v311, %v705
  %v707 = vmul.f32 %v695, 3.8918573e-05
  %v708 = vadd.f32 %v707, 0.001143296
  %v709 = vmul.f32 %v695, %v708
  %v710 = vadd.f32 %v709, 0.014752088
  %v711 = vmul.f32 %v695, %v710
  %v712 = vadd.f32 %v711, 0.112945676
  %v713 = vmul.f32 %v695, %v712
  %v714 = vadd.f32 %v713, 0.4994258
  %v715 = vmul.f32 %v695, %v714
  %v716 = vadd.f32 %v715, 1.0
  %v717 = vrcp.pop %v716
  %v718 = vmul.f32 %v716, %v717
  %v719 = vsub.f32 1.0, %v718
  %v720 = vmul.f32 %v717, %v719
  %v721 = vadd.f32 %v717, %v720
  %vm722 = vweird.f32 %v716
  %vm723 = vweird.f32 %v717
  %vm724 = vmor %vm722, %vm723
  %v725 = vsel %vm724, %v717, %v721
  %v726 = vand.u32 2147483647, %v716
  %vm727 = vcmp.eq.f32.partialorder %v726, 8.507059e+37
  %v728 = vand.u32 %v716, 2147483648
  %v729 = vor.u32 1.1754944e-38, %v728
  %v730 = vsel %vm727, %v729, %v725
  %v731 = vmul.f32 %v706, %v730
  %v732 = vmin.f32 %v731, 1.0
  %v733 = vmax.f32 %v732, -1.0
  %v734 = vmul.f32 %v312, %v312
  %v735 = vmin.f32 16.0, %v734
  %v736 = vmul.f32 %v735, 2.1237322e-06
  %v737 = vadd.f32 %v736, 0.00028619796
  %v738 = vmul.f32 %v735, %v737
  %v739 = vadd.f32 %v738, 0.0036580483
  %v740 = vmul.f32 %v735, %v739
  %v741 = vadd.f32 %v740, 0.05243302
  %v742 = vmul.f32 %v735, %v741
  %v743 = vadd.f32 %v742, 0.18741608
  %v744 = vmul.f32 %v735, %v743
  %v745 = vadd.f32 %v744, 1.1283791
  %v746 = vmul.f32 %v312, %v745
  %v747 = vmul.f32 %v735, 3.8918573e-05
  %v748 = vadd.f32 %v747, 0.001143296
  %v749 = vmul.f32 %v735, %v748
  %v750 = vadd.f32 %v749, 0.014752088
  %v751 = vmul.f32 %v735, %v750
  %v752 = vadd.f32 %v751, 0.112945676
  %v753 = vmul.f32 %v735, %v752
  %v754 = vadd.f32 %v753, 0.4994258
  %v755 = vmul.f32 %v735, %v754
  %v756 = vadd.f32 %v755, 1.0
  %v757 = vrcp.pop %v756
  %v758 = vmul.f32 %v756, %v757
  %v759 = vsub.f32 1.0, %v758
  %v760 = vmul.f32 %v757, %v759
  %v761 = vadd.f32 %v757, %v760
  %vm762 = vweird.f32 %v756
  %vm763 = vweird.f32 %v757
  %vm764 = vmor %vm762, %vm763
  %v765 = vsel %vm764, %v757, %v761
  %v766 = vand.u32 2147483647, %v756
  %vm767 = vcmp.eq.f32.partialorder %v766, 8.507059e+37
  %v768 = vand.u32 %v756, 2147483648
  %v769 = vor.u32 1.1754944e-38, %v768
  %v770 = vsel %vm767, %v769, %v765
  %v771 = vmul.f32 %v746, %v770
  %v772 = vmin.f32 %v771, 1.0
  %v773 = vmax.f32 %v772, -1.0
  %v774 = vmul.f32 %v313, %v313
  %v775 = vmin.f32 16.0, %v774
  %v776 = vmul.f32 %v775, 2.1237322e-06
  %v777 = vadd.f32 %v776, 0.00028619796
  %v778 = vmul.f32 %v775, %v777
  %v779 = vadd.f32 %v778, 0.0036580483
  %v780 = vmul.f32 %v775, %v779
  %v781 = vadd.f32 %v780, 0.05243302
  %v782 = vmul.f32 %v775, %v781
  %v783 = vadd.f32 %v782, 0.18741608
  %v784 = vmul.f32 %v775, %v783
  %v785 = vadd.f32 %v784, 1.1283791
  %v786 = vmul.f32 %v313, %v785
  %v787 = vmul.f32 %v775, 3.8918573e-05
  %v788 = vadd.f32 %v787, 0.001143296
  %v789 = vmul.f32 %v775, %v788
  %v790 = vadd.f32 %v789, 0.014752088
  %v791 = vmul.f32 %v775, %v790
  %v792 = vadd.f32 %v791, 0.112945676
  %v793 = vmul.f32 %v775, %v792
  %v794 = vadd.f32 %v793, 0.4994258
  %v795 = vmul.f32 %v775, %v794
  %v796 = vadd.f32 %v795, 1.0
  %v797 = vrcp.pop %v796
  %v798 = vmul.f32 %v796, %v797
  %v799 = vsub.f32 1.0, %v798
  %v800 = vmul.f32 %v797, %v799
  %v801 = vadd.f32 %v797, %v800
  %vm802 = vweird.f32 %v796
  %vm803 = vweird.f32 %v797
  %vm804 = vmor %vm802, %vm803
  %v805 = vsel %vm804, %v797, %v801
  %v806 = vand.u32 2147483647, %v796
  %vm807 = vcmp.eq.f32.partialorder %v806, 8.507059e+37
  %v808 = vand.u32 %v796, 2147483648
  %v809 = vor.u32 1.1754944e-38, %v808
  %v810 = vsel %vm807, %v809, %v805
  %v811 = vmul.f32 %v786, %v810
  %v812 = vmin.f32 %v811, 1.0
  %v813 = vmax.f32 %v812, -1.0
  %v814 = vmul.f32 %v314, %v314
  %v815 = vmin.f32 16.0, %v814
  %v816 = vmul.f32 %v815, 2.1237322e-06
  %v817 = vadd.f32 %v816, 0.00028619796
  %v818 = vmul.f32 %v815, %v817
  %v819 = vadd.f32 %v818, 0.0036580483
  %v820 = vmul.f32 %v815, %v819
  %v821 = vadd.f32 %v820, 0.05243302
  %v822 = vmul.f32 %v815, %v821
  %v823 = vadd.f32 %v822, 0.18741608
  %v824 = vmul.f32 %v815, %v823
  %v825 = vadd.f32 %v824, 1.1283791
  %v826 = vmul.f32 %v314, %v825
  %v827 = vmul.f32 %v815, 3.8918573e-05
  %v828 = vadd.f32 %v827, 0.001143296
  %v829 = vmul.f32 %v815, %v828
  %v830 = vadd.f32 %v829, 0.014752088
  %v831 = vmul.f32 %v815, %v830
  %v832 = vadd.f32 %v831, 0.112945676
  %v833 = vmul.f32 %v815, %v832
  %v834 = vadd.f32 %v833, 0.4994258
  %v835 = vmul.f32 %v815, %v834
  %v836 = vadd.f32 %v835, 1.0
  %v837 = vrcp.pop %v836
  %v838 = vmul.f32 %v836, %v837
  %v839 = vsub.f32 1.0, %v838
  %v840 = vmul.f32 %v837, %v839
  %v841 = vadd.f32 %v837, %v840
  %vm842 = vweird.f32 %v836
  %vm843 = vweird.f32 %v837
  %vm844 = vmor %vm842, %vm843
  %v845 = vsel %vm844, %v837, %v841
  %v846 = vand.u32 2147483647, %v836
  %vm847 = vcmp.eq.f32.partialorder %v846, 8.507059e+37
  %v848 = vand.u32 %v836, 2147483648
  %v849 = vor.u32 1.1754944e-38, %v848
  %v850 = vsel %vm847, %v849, %v845
  %v851 = vmul.f32 %v826, %v850
  %v852 = vmin.f32 %v851, 1.0
  %v853 = vmax.f32 %v852, -1.0
  %v854 = vmul.f32 %v315, %v315
  %v855 = vmin.f32 16.0, %v854
  %v856 = vmul.f32 %v855, 2.1237322e-06
  %v857 = vadd.f32 %v856, 0.00028619796
  %v858 = vmul.f32 %v855, %v857
  %v859 = vadd.f32 %v858, 0.0036580483
  %v860 = vmul.f32 %v855, %v859
  %v861 = vadd.f32 %v860, 0.05243302
  %v862 = vmul.f32 %v855, %v861
  %v863 = vadd.f32 %v862, 0.18741608
  %v864 = vmul.f32 %v855, %v863
  %v865 = vadd.f32 %v864, 1.1283791
  %v866 = vmul.f32 %v315, %v865
  %v867 = vmul.f32 %v855, 3.8918573e-05
  %v868 = vadd.f32 %v867, 0.001143296
  %v869 = vmul.f32 %v855, %v868
  %v870 = vadd.f32 %v869, 0.014752088
  %v871 = vmul.f32 %v855, %v870
  %v872 = vadd.f32 %v871, 0.112945676
  %v873 = vmul.f32 %v855, %v872
  %v874 = vadd.f32 %v873, 0.4994258
  %v875 = vmul.f32 %v855, %v874
  %v876 = vadd.f32 %v875, 1.0
  %v877 = vrcp.pop %v876
  %v878 = vmul.f32 %v876, %v877
  %v879 = vsub.f32 1.0, %v878
  %v880 = vmul.f32 %v877, %v879
  %v881 = vadd.f32 %v877, %v880
  %vm882 = vweird.f32 %v876
  %vm883 = vweird.f32 %v877
  %vm884 = vmor %vm882, %vm883
  %v885 = vsel %vm884, %v877, %v881
  %v886 = vand.u32 2147483647, %v876
  %vm887 = vcmp.eq.f32.partialorder %v886, 8.507059e+37
  %v888 = vand.u32 %v876, 2147483648
  %v889 = vor.u32 1.1754944e-38, %v888
  %v890 = vsel %vm887, %v889, %v885
  %v891 = vmul.f32 %v866, %v890
  %v892 = vmin.f32 %v891, 1.0
  %v893 = vmax.f32 %v892, -1.0
  %v894 = vmul.f32 %v316, %v316
  %v895 = vmin.f32 16.0, %v894
  %v896 = vmul.f32 %v895, 2.1237322e-06
  %v897 = vadd.f32 %v896, 0.00028619796
  %v898 = vmul.f32 %v895, %v897
  %v899 = vadd.f32 %v898, 0.0036580483
  %v900 = vmul.f32 %v895, %v899
  %v901 = vadd.f32 %v900, 0.05243302
  %v902 = vmul.f32 %v895, %v901
  %v903 = vadd.f32 %v902, 0.18741608
  %v904 = vmul.f32 %v895, %v903
  %v905 = vadd.f32 %v904, 1.1283791
  %v906 = vmul.f32 %v316, %v905
  %v907 = vmul.f32 %v895, 3.8918573e-05
  %v908 = vadd.f32 %v907, 0.001143296
  %v909 = vmul.f32 %v895, %v908
  %v910 = vadd.f32 %v909, 0.014752088
  %v911 = vmul.f32 %v895, %v910
  %v912 = vadd.f32 %v911, 0.112945676
  %v913 = vmul.f32 %v895, %v912
  %v914 = vadd.f32 %v913, 0.4994258
  %v915 = vmul.f32 %v895, %v914
  %v916 = vadd.f32 %v915, 1.0
  %v917 = vrcp.pop %v916
  %v918 = vmul.f32 %v916, %v917
  %v919 = vsub.f32 1.0, %v918
  %v920 = vmul.f32 %v917, %v919
  %v921 = vadd.f32 %v917, %v920
  %vm922 = vweird.f32 %v916
  %vm923 = vweird.f32 %v917
  %vm924 = vmor %vm922, %vm923
  %v925 = vsel %vm924, %v917, %v921
  %v926 = vand.u32 2147483647, %v916
  %vm927 = vcmp.eq.f32.partialorder %v926, 8.507059e+37
  %v928 = vand.u32 %v916, 2147483648
  %v929 = vor.u32 1.1754944e-38, %v928
  %v930 = vsel %vm927, %v929, %v925
  %v931 = vmul.f32 %v906, %v930
  %v932 = vmin.f32 %v931, 1.0
  %v933 = vmax.f32 %v932, -1.0
  %v934 = vmul.f32 %v317, %v317
  %v935 = vmin.f32 16.0, %v934
  %v936 = vmul.f32 %v935, 2.1237322e-06
  %v937 = vadd.f32 %v936, 0.00028619796
  %v938 = vmul.f32 %v935, %v937
  %v939 = vadd.f32 %v938, 0.0036580483
  %v940 = vmul.f32 %v935, %v939
  %v941 = vadd.f32 %v940, 0.05243302
  %v942 = vmul.f32 %v935, %v941
  %v943 = vadd.f32 %v942, 0.18741608
  %v944 = vmul.f32 %v935, %v943
  %v945 = vadd.f32 %v944, 1.1283791
  %v946 = vmul.f32 %v317, %v945
  %v947 = vmul.f32 %v935, 3.8918573e-05
  %v948 = vadd.f32 %v947, 0.001143296
  %v949 = vmul.f32 %v935, %v948
  %v950 = vadd.f32 %v949, 0.014752088
  %v951 = vmul.f32 %v935, %v950
  %v952 = vadd.f32 %v951, 0.112945676
  %v953 = vmul.f32 %v935, %v952
  %v954 = vadd.f32 %v953, 0.4994258
  %v955 = vmul.f32 %v935, %v954
  %v956 = vadd.f32 %v955, 1.0
  %v957 = vrcp.pop %v956
  %v958 = vmul.f32 %v956, %v957
  %v959 = vsub.f32 1.0, %v958
  %v960 = vmul.f32 %v957, %v959
  %v961 = vadd.f32 %v957, %v960
  %vm962 = vweird.f32 %v956
  %vm963 = vweird.f32 %v957
  %vm964 = vmor %vm962, %vm963
  %v965 = vsel %vm964, %v957, %v961
  %v966 = vand.u32 2147483647, %v956
  %vm967 = vcmp.eq.f32.partialorder %v966, 8.507059e+37
  %v968 = vand.u32 %v956, 2147483648
  %v969 = vor.u32 1.1754944e-38, %v968
  %v970 = vsel %vm967, %v969, %v965
  %v971 = vmul.f32 %v946, %v970
  %v972 = vmin.f32 %v971, 1.0
  %v973 = vmax.f32 %v972, -1.0
  %v974 = vmul.f32 %v318, %v318
  %v975 = vmin.f32 16.0, %v974
  %v976 = vmul.f32 %v975, 2.1237322e-06
  %v977 = vadd.f32 %v976, 0.00028619796
  %v978 = vmul.f32 %v975, %v977
  %v979 = vadd.f32 %v978, 0.0036580483
  %v980 = vmul.f32 %v975, %v979
  %v981 = vadd.f32 %v980, 0.05243302
  %v982 = vmul.f32 %v975, %v981
  %v983 = vadd.f32 %v982, 0.18741608
  %v984 = vmul.f32 %v975, %v983
  %v985 = vadd.f32 %v984, 1.1283791
  %v986 = vmul.f32 %v318, %v985
  %v987 = vmul.f32 %v975, 3.8918573e-05
  %v988 = vadd.f32 %v987, 0.001143296
  %v989 = vmul.f32 %v975, %v988
  %v990 = vadd.f32 %v989, 0.014752088
  %v991 = vmul.f32 %v975, %v990
  %v992 = vadd.f32 %v991, 0.112945676
  %v993 = vmul.f32 %v975, %v992
  %v994 = vadd.f32 %v993, 0.4994258
  %v995 = vmul.f32 %v975, %v994
  %v996 = vadd.f32 %v995, 1.0
  %v997 = vrcp.pop %v996
  %v998 = vmul.f32 %v996, %v997
  %v999 = vsub.f32 1.0, %v998
  %v1000 = vmul.f32 %v997, %v999
  %v1001 = vadd.f32 %v997, %v1000
  %vm1002 = vweird.f32 %v996
  %vm1003 = vweird.f32 %v997
  %vm1004 = vmor %vm1002, %vm1003
  %v1005 = vsel %vm1004, %v997, %v1001
  %v1006 = vand.u32 2147483647, %v996
  %vm1007 = vcmp.eq.f32.partialorder %v1006, 8.507059e+37
  %v1008 = vand.u32 %v996, 2147483648
  %v1009 = vor.u32 1.1754944e-38, %v1008
  %v1010 = vsel %vm1007, %v1009, %v1005
  %v1011 = vmul.f32 %v986, %v1010
  %v1012 = vmin.f32 %v1011, 1.0
  %v1013 = vmax.f32 %v1012, -1.0
  %v1014 = vmul.f32 %v319, %v319
  %v1015 = vmin.f32 16.0, %v1014
  %v1016 = vmul.f32 %v1015, 2.1237322e-06
  %v1017 = vadd.f32 %v1016, 0.00028619796
  %v1018 = vmul.f32 %v1015, %v1017
  %v1019 = vadd.f32 %v1018, 0.0036580483
  %v1020 = vmul.f32 %v1015, %v1019
  %v1021 = vadd.f32 %v1020, 0.05243302
  %v1022 = vmul.f32 %v1015, %v1021
  %v1023 = vadd.f32 %v1022, 0.18741608
  %v1024 = vmul.f32 %v1015, %v1023
  %v1025 = vadd.f32 %v1024, 1.1283791
  %v1026 = vmul.f32 %v319, %v1025
  %v1027 = vmul.f32 %v1015, 3.8918573e-05
  %v1028 = vadd.f32 %v1027, 0.001143296
  %v1029 = vmul.f32 %v1015, %v1028
  %v1030 = vadd.f32 %v1029, 0.014752088
  %v1031 = vmul.f32 %v1015, %v1030
  %v1032 = vadd.f32 %v1031, 0.112945676
  %v1033 = vmul.f32 %v1015, %v1032
  %v1034 = vadd.f32 %v1033, 0.4994258
  %v1035 = vmul.f32 %v1015, %v1034
  %v1036 = vadd.f32 %v1035, 1.0
  %v1037 = vrcp.pop %v1036
  %v1038 = vmul.f32 %v1036, %v1037
  %v1039 = vsub.f32 1.0, %v1038
  %v1040 = vmul.f32 %v1037, %v1039
  %v1041 = vadd.f32 %v1037, %v1040
  %vm1042 = vweird.f32 %v1036
  %vm1043 = vweird.f32 %v1037
  %vm1044 = vmor %vm1042, %vm1043
  %v1045 = vsel %vm1044, %v1037, %v1041
  %v1046 = vand.u32 2147483647, %v1036
  %vm1047 = vcmp.eq.f32.partialorder %v1046, 8.507059e+37
  %v1048 = vand.u32 %v1036, 2147483648
  %v1049 = vor.u32 1.1754944e-38, %v1048
  %v1050 = vsel %vm1047, %v1049, %v1045
  %v1051 = vmul.f32 %v1026, %v1050
  %v1052 = vmin.f32 %v1051, 1.0
  %v1053 = vmax.f32 %v1052, -1.0
  %v1054 = vmul.f32 %v320, %v320
  %v1055 = vmin.f32 16.0, %v1054
  %v1056 = vmul.f32 %v1055, 2.1237322e-06
  %v1057 = vadd.f32 %v1056, 0.00028619796
  %v1058 = vmul.f32 %v1055, %v1057
  %v1059 = vadd.f32 %v1058, 0.0036580483
  %v1060 = vmul.f32 %v1055, %v1059
  %v1061 = vadd.f32 %v1060, 0.05243302
  %v1062 = vmul.f32 %v1055, %v1061
  %v1063 = vadd.f32 %v1062, 0.18741608
  %v1064 = vmul.f32 %v1055, %v1063
  %v1065 = vadd.f32 %v1064, 1.1283791
  %v1066 = vmul.f32 %v320, %v1065
  %v1067 = vmul.f32 %v1055, 3.8918573e-05
  %v1068 = vadd.f32 %v1067, 0.001143296
  %v1069 = vmul.f32 %v1055, %v1068
  %v1070 = vadd.f32 %v1069, 0.014752088
  %v1071 = vmul.f32 %v1055, %v1070
  %v1072 = vadd.f32 %v1071, 0.112945676
  %v1073 = vmul.f32 %v1055, %v1072
  %v1074 = vadd.f32 %v1073, 0.4994258
  %v1075 = vmul.f32 %v1055, %v1074
  %v1076 = vadd.f32 %v1075, 1.0
  %v1077 = vrcp.pop %v1076
  %v1078 = vmul.f32 %v1076, %v1077
  %v1079 = vsub.f32 1.0, %v1078
  %v1080 = vmul.f32 %v1077, %v1079
  %v1081 = vadd.f32 %v1077, %v1080
  %vm1082 = vweird.f32 %v1076
  %vm1083 = vweird.f32 %v1077
  %vm1084 = vmor %vm1082, %vm1083
  %v1085 = vsel %vm1084, %v1077, %v1081
  %v1086 = vand.u32 2147483647, %v1076
  %vm1087 = vcmp.eq.f32.partialorder %v1086, 8.507059e+37
  %v1088 = vand.u32 %v1076, 2147483648
  %v1089 = vor.u32 1.1754944e-38, %v1088
  %v1090 = vsel %vm1087, %v1089, %v1085
  %v1091 = vmul.f32 %v1066, %v1090
  %v1092 = vmin.f32 %v1091, 1.0
  %v1093 = vmax.f32 %v1092, -1.0
  %v1094 = vmul.f32 %v321, %v321
  %v1095 = vmin.f32 16.0, %v1094
  %v1096 = vmul.f32 %v1095, 2.1237322e-06
  %v1097 = vadd.f32 %v1096, 0.00028619796
  %v1098 = vmul.f32 %v1095, %v1097
  %v1099 = vadd.f32 %v1098, 0.0036580483
  %v1100 = vmul.f32 %v1095, %v1099
  %v1101 = vadd.f32 %v1100, 0.05243302
  %v1102 = vmul.f32 %v1095, %v1101
  %v1103 = vadd.f32 %v1102, 0.18741608
  %v1104 = vmul.f32 %v1095, %v1103
  %v1105 = vadd.f32 %v1104, 1.1283791
  %v1106 = vmul.f32 %v321, %v1105
  %v1107 = vmul.f32 %v1095, 3.8918573e-05
  %v1108 = vadd.f32 %v1107, 0.001143296
  %v1109 = vmul.f32 %v1095, %v1108
  %v1110 = vadd.f32 %v1109, 0.014752088
  %v1111 = vmul.f32 %v1095, %v1110
  %v1112 = vadd.f32 %v1111, 0.112945676
  %v1113 = vmul.f32 %v1095, %v1112
  %v1114 = vadd.f32 %v1113, 0.4994258
  %v1115 = vmul.f32 %v1095, %v1114
  %v1116 = vadd.f32 %v1115, 1.0
  %v1117 = vrcp.pop %v1116
  %v1118 = vmul.f32 %v1116, %v1117
  %v1119 = vsub.f32 1.0, %v1118
  %v1120 = vmul.f32 %v1117, %v1119
  %v1121 = vadd.f32 %v1117, %v1120
  %vm1122 = vweird.f32 %v1116
  %vm1123 = vweird.f32 %v1117
  %vm1124 = vmor %vm1122, %vm1123
  %v1125 = vsel %vm1124, %v1117, %v1121
  %v1126 = vand.u32 2147483647, %v1116
  %vm1127 = vcmp.eq.f32.partialorder %v1126, 8.507059e+37
  %v1128 = vand.u32 %v1116, 2147483648
  %v1129 = vor.u32 1.1754944e-38, %v1128
  %v1130 = vsel %vm1127, %v1129, %v1125
  %v1131 = vmul.f32 %v1106, %v1130
  %v1132 = vmin.f32 %v1131, 1.0
  %v1133 = vmax.f32 %v1132, -1.0
  %v1134 = vmul.f32 %v322, %v322
  %v1135 = vmin.f32 16.0, %v1134
  %v1136 = vmul.f32 %v1135, 2.1237322e-06
  %v1137 = vadd.f32 %v1136, 0.00028619796
  %v1138 = vmul.f32 %v1135, %v1137
  %v1139 = vadd.f32 %v1138, 0.0036580483
  %v1140 = vmul.f32 %v1135, %v1139
  %v1141 = vadd.f32 %v1140, 0.05243302
  %v1142 = vmul.f32 %v1135, %v1141
  %v1143 = vadd.f32 %v1142, 0.18741608
  %v1144 = vmul.f32 %v1135, %v1143
  %v1145 = vadd.f32 %v1144, 1.1283791
  %v1146 = vmul.f32 %v322, %v1145
  %v1147 = vmul.f32 %v1135, 3.8918573e-05
  %v1148 = vadd.f32 %v1147, 0.001143296
  %v1149 = vmul.f32 %v1135, %v1148
  %v1150 = vadd.f32 %v1149, 0.014752088
  %v1151 = vmul.f32 %v1135, %v1150
  %v1152 = vadd.f32 %v1151, 0.112945676
  %v1153 = vmul.f32 %v1135, %v1152
  %v1154 = vadd.f32 %v1153, 0.4994258
  %v1155 = vmul.f32 %v1135, %v1154
  %v1156 = vadd.f32 %v1155, 1.0
  %v1157 = vrcp.pop %v1156
  %v1158 = vmul.f32 %v1156, %v1157
  %v1159 = vsub.f32 1.0, %v1158
  %v1160 = vmul.f32 %v1157, %v1159
  %v1161 = vadd.f32 %v1157, %v1160
  %vm1162 = vweird.f32 %v1156
  %vm1163 = vweird.f32 %v1157
  %vm1164 = vmor %vm1162, %vm1163
  %v1165 = vsel %vm1164, %v1157, %v1161
  %v1166 = vand.u32 2147483647, %v1156
  %vm1167 = vcmp.eq.f32.partialorder %v1166, 8.507059e+37
  %v1168 = vand.u32 %v1156, 2147483648
  %v1169 = vor.u32 1.1754944e-38, %v1168
  %v1170 = vsel %vm1167, %v1169, %v1165
  %v1171 = vmul.f32 %v1146, %v1170
  %v1172 = vmin.f32 %v1171, 1.0
  %v1173 = vmax.f32 %v1172, -1.0
  %v1174 = vmul.f32 %v323, %v323
  %v1175 = vmin.f32 16.0, %v1174
  %v1176 = vmul.f32 %v1175, 2.1237322e-06
  %v1177 = vadd.f32 %v1176, 0.00028619796
  %v1178 = vmul.f32 %v1175, %v1177
  %v1179 = vadd.f32 %v1178, 0.0036580483
  %v1180 = vmul.f32 %v1175, %v1179
  %v1181 = vadd.f32 %v1180, 0.05243302
  %v1182 = vmul.f32 %v1175, %v1181
  %v1183 = vadd.f32 %v1182, 0.18741608
  %v1184 = vmul.f32 %v1175, %v1183
  %v1185 = vadd.f32 %v1184, 1.1283791
  %v1186 = vmul.f32 %v323, %v1185
  %v1187 = vmul.f32 %v1175, 3.8918573e-05
  %v1188 = vadd.f32 %v1187, 0.001143296
  %v1189 = vmul.f32 %v1175, %v1188
  %v1190 = vadd.f32 %v1189, 0.014752088
  %v1191 = vmul.f32 %v1175, %v1190
  %v1192 = vadd.f32 %v1191, 0.112945676
  %v1193 = vmul.f32 %v1175, %v1192
  %v1194 = vadd.f32 %v1193, 0.4994258
  %v1195 = vmul.f32 %v1175, %v1194
  %v1196 = vadd.f32 %v1195, 1.0
  %v1197 = vrcp.pop %v1196
  %v1198 = vmul.f32 %v1196, %v1197
  %v1199 = vsub.f32 1.0, %v1198
  %v1200 = vmul.f32 %v1197, %v1199
  %v1201 = vadd.f32 %v1197, %v1200
  %vm1202 = vweird.f32 %v1196
  %vm1203 = vweird.f32 %v1197
  %vm1204 = vmor %vm1202, %vm1203
  %v1205 = vsel %vm1204, %v1197, %v1201
  %v1206 = vand.u32 2147483647, %v1196
  %vm1207 = vcmp.eq.f32.partialorder %v1206, 8.507059e+37
  %v1208 = vand.u32 %v1196, 2147483648
  %v1209 = vor.u32 1.1754944e-38, %v1208
  %v1210 = vsel %vm1207, %v1209, %v1205
  %v1211 = vmul.f32 %v1186, %v1210
  %v1212 = vmin.f32 %v1211, 1.0
  %v1213 = vmax.f32 %v1212, -1.0
  %v1214 = vmul.f32 %v324, %v324
  %v1215 = vmin.f32 16.0, %v1214
  %v1216 = vmul.f32 %v1215, 2.1237322e-06
  %v1217 = vadd.f32 %v1216, 0.00028619796
  %v1218 = vmul.f32 %v1215, %v1217
  %v1219 = vadd.f32 %v1218, 0.0036580483
  %v1220 = vmul.f32 %v1215, %v1219
  %v1221 = vadd.f32 %v1220, 0.05243302
  %v1222 = vmul.f32 %v1215, %v1221
  %v1223 = vadd.f32 %v1222, 0.18741608
  %v1224 = vmul.f32 %v1215, %v1223
  %v1225 = vadd.f32 %v1224, 1.1283791
  %v1226 = vmul.f32 %v324, %v1225
  %v1227 = vmul.f32 %v1215, 3.8918573e-05
  %v1228 = vadd.f32 %v1227, 0.001143296
  %v1229 = vmul.f32 %v1215, %v1228
  %v1230 = vadd.f32 %v1229, 0.014752088
  %v1231 = vmul.f32 %v1215, %v1230
  %v1232 = vadd.f32 %v1231, 0.112945676
  %v1233 = vmul.f32 %v1215, %v1232
  %v1234 = vadd.f32 %v1233, 0.4994258
  %v1235 = vmul.f32 %v1215, %v1234
  %v1236 = vadd.f32 %v1235, 1.0
  %v1237 = vrcp.pop %v1236
  %v1238 = vmul.f32 %v1236, %v1237
  %v1239 = vsub.f32 1.0, %v1238
  %v1240 = vmul.f32 %v1237, %v1239
  %v1241 = vadd.f32 %v1237, %v1240
  %vm1242 = vweird.f32 %v1236
  %vm1243 = vweird.f32 %v1237
  %vm1244 = vmor %vm1242, %vm1243
  %v1245 = vsel %vm1244, %v1237, %v1241
  %v1246 = vand.u32 2147483647, %v1236
  %vm1247 = vcmp.eq.f32.partialorder %v1246, 8.507059e+37
  %v1248 = vand.u32 %v1236, 2147483648
  %v1249 = vor.u32 1.1754944e-38, %v1248
  %v1250 = vsel %vm1247, %v1249, %v1245
  %v1251 = vmul.f32 %v1226, %v1250
  %v1252 = vmin.f32 %v1251, 1.0
  %v1253 = vmax.f32 %v1252, -1.0
  %v1254 = vmul.f32 %v325, %v325
  %v1255 = vmin.f32 16.0, %v1254
  %v1256 = vmul.f32 %v1255, 2.1237322e-06
  %v1257 = vadd.f32 %v1256, 0.00028619796
  %v1258 = vmul.f32 %v1255, %v1257
  %v1259 = vadd.f32 %v1258, 0.0036580483
  %v1260 = vmul.f32 %v1255, %v1259
  %v1261 = vadd.f32 %v1260, 0.05243302
  %v1262 = vmul.f32 %v1255, %v1261
  %v1263 = vadd.f32 %v1262, 0.18741608
  %v1264 = vmul.f32 %v1255, %v1263
  %v1265 = vadd.f32 %v1264, 1.1283791
  %v1266 = vmul.f32 %v325, %v1265
  %v1267 = vmul.f32 %v1255, 3.8918573e-05
  %v1268 = vadd.f32 %v1267, 0.001143296
  %v1269 = vmul.f32 %v1255, %v1268
  %v1270 = vadd.f32 %v1269, 0.014752088
  %v1271 = vmul.f32 %v1255, %v1270
  %v1272 = vadd.f32 %v1271, 0.112945676
  %v1273 = vmul.f32 %v1255, %v1272
  %v1274 = vadd.f32 %v1273, 0.4994258
  %v1275 = vmul.f32 %v1255, %v1274
  %v1276 = vadd.f32 %v1275, 1.0
  %v1277 = vrcp.pop %v1276
  %v1278 = vmul.f32 %v1276, %v1277
  %v1279 = vsub.f32 1.0, %v1278
  %v1280 = vmul.f32 %v1277, %v1279
  %v1281 = vadd.f32 %v1277, %v1280
  %vm1282 = vweird.f32 %v1276
  %vm1283 = vweird.f32 %v1277
  %vm1284 = vmor %vm1282, %vm1283
  %v1285 = vsel %vm1284, %v1277, %v1281
  %v1286 = vand.u32 2147483647, %v1276
  %vm1287 = vcmp.eq.f32.partialorder %v1286, 8.507059e+37
  %v1288 = vand.u32 %v1276, 2147483648
  %v1289 = vor.u32 1.1754944e-38, %v1288
  %v1290 = vsel %vm1287, %v1289, %v1285
  %v1291 = vmul.f32 %v1266, %v1290
  %v1292 = vmin.f32 %v1291, 1.0
  %v1293 = vmax.f32 %v1292, -1.0
  %v1294 = vmul.f32 %v326, %v326
  %v1295 = vmin.f32 16.0, %v1294
  %v1296 = vmul.f32 %v1295, 2.1237322e-06
  %v1297 = vadd.f32 %v1296, 0.00028619796
  %v1298 = vmul.f32 %v1295, %v1297
  %v1299 = vadd.f32 %v1298, 0.0036580483
  %v1300 = vmul.f32 %v1295, %v1299
  %v1301 = vadd.f32 %v1300, 0.05243302
  %v1302 = vmul.f32 %v1295, %v1301
  %v1303 = vadd.f32 %v1302, 0.18741608
  %v1304 = vmul.f32 %v1295, %v1303
  %v1305 = vadd.f32 %v1304, 1.1283791
  %v1306 = vmul.f32 %v326, %v1305
  %v1307 = vmul.f32 %v1295, 3.8918573e-05
  %v1308 = vadd.f32 %v1307, 0.001143296
  %v1309 = vmul.f32 %v1295, %v1308
  %v1310 = vadd.f32 %v1309, 0.014752088
  %v1311 = vmul.f32 %v1295, %v1310
  %v1312 = vadd.f32 %v1311, 0.112945676
  %v1313 = vmul.f32 %v1295, %v1312
  %v1314 = vadd.f32 %v1313, 0.4994258
  %v1315 = vmul.f32 %v1295, %v1314
  %v1316 = vadd.f32 %v1315, 1.0
  %v1317 = vrcp.pop %v1316
  %v1318 = vmul.f32 %v1316, %v1317
  %v1319 = vsub.f32 1.0, %v1318
  %v1320 = vmul.f32 %v1317, %v1319
  %v1321 = vadd.f32 %v1317, %v1320
  %vm1322 = vweird.f32 %v1316
  %vm1323 = vweird.f32 %v1317
  %vm1324 = vmor %vm1322, %vm1323
  %v1325 = vsel %vm1324, %v1317, %v1321
  %v1326 = vand.u32 2147483647, %v1316
  %vm1327 = vcmp.eq.f32.partialorder %v1326, 8.507059e+37
  %v1328 = vand.u32 %v1316, 2147483648
  %v1329 = vor.u32 1.1754944e-38, %v1328
  %v1330 = vsel %vm1327, %v1329, %v1325
  %v1331 = vmul.f32 %v1306, %v1330
  %v1332 = vmin.f32 %v1331, 1.0
  %v1333 = vmax.f32 %v1332, -1.0
  %v1334 = vmul.f32 %v327, %v327
  %v1335 = vmin.f32 16.0, %v1334
  %v1336 = vmul.f32 %v1335, 2.1237322e-06
  %v1337 = vadd.f32 %v1336, 0.00028619796
  %v1338 = vmul.f32 %v1335, %v1337
  %v1339 = vadd.f32 %v1338, 0.0036580483
  %v1340 = vmul.f32 %v1335, %v1339
  %v1341 = vadd.f32 %v1340, 0.05243302
  %v1342 = vmul.f32 %v1335, %v1341
  %v1343 = vadd.f32 %v1342, 0.18741608
  %v1344 = vmul.f32 %v1335, %v1343
  %v1345 = vadd.f32 %v1344, 1.1283791
  %v1346 = vmul.f32 %v327, %v1345
  %v1347 = vmul.f32 %v1335, 3.8918573e-05
  %v1348 = vadd.f32 %v1347, 0.001143296
  %v1349 = vmul.f32 %v1335, %v1348
  %v1350 = vadd.f32 %v1349, 0.014752088
  %v1351 = vmul.f32 %v1335, %v1350
  %v1352 = vadd.f32 %v1351, 0.112945676
  %v1353 = vmul.f32 %v1335, %v1352
  %v1354 = vadd.f32 %v1353, 0.4994258
  %v1355 = vmul.f32 %v1335, %v1354
  %v1356 = vadd.f32 %v1355, 1.0
  %v1357 = vrcp.pop %v1356
  %v1358 = vmul.f32 %v1356, %v1357
  %v1359 = vsub.f32 1.0, %v1358
  %v1360 = vmul.f32 %v1357, %v1359
  %v1361 = vadd.f32 %v1357, %v1360
  %vm1362 = vweird.f32 %v1356
  %vm1363 = vweird.f32 %v1357
  %vm1364 = vmor %vm1362, %vm1363
  %v1365 = vsel %vm1364, %v1357, %v1361
  %v1366 = vand.u32 2147483647, %v1356
  %vm1367 = vcmp.eq.f32.partialorder %v1366, 8.507059e+37
  %v1368 = vand.u32 %v1356, 2147483648
  %v1369 = vor.u32 1.1754944e-38, %v1368
  %v1370 = vsel %vm1367, %v1369, %v1365
  %v1371 = vmul.f32 %v1346, %v1370
  %v1372 = vmin.f32 %v1371, 1.0
  %v1373 = vmax.f32 %v1372, -1.0
  %v1374 = vmul.f32 %v328, %v328
  %v1375 = vmin.f32 16.0, %v1374
  %v1376 = vmul.f32 %v1375, 2.1237322e-06
  %v1377 = vadd.f32 %v1376, 0.00028619796
  %v1378 = vmul.f32 %v1375, %v1377
  %v1379 = vadd.f32 %v1378, 0.0036580483
  %v1380 = vmul.f32 %v1375, %v1379
  %v1381 = vadd.f32 %v1380, 0.05243302
  %v1382 = vmul.f32 %v1375, %v1381
  %v1383 = vadd.f32 %v1382, 0.18741608
  %v1384 = vmul.f32 %v1375, %v1383
  %v1385 = vadd.f32 %v1384, 1.1283791
  %v1386 = vmul.f32 %v328, %v1385
  %v1387 = vmul.f32 %v1375, 3.8918573e-05
  %v1388 = vadd.f32 %v1387, 0.001143296
  %v1389 = vmul.f32 %v1375, %v1388
  %v1390 = vadd.f32 %v1389, 0.014752088
  %v1391 = vmul.f32 %v1375, %v1390
  %v1392 = vadd.f32 %v1391, 0.112945676
  %v1393 = vmul.f32 %v1375, %v1392
  %v1394 = vadd.f32 %v1393, 0.4994258
  %v1395 = vmul.f32 %v1375, %v1394
  %v1396 = vadd.f32 %v1395, 1.0
  %v1397 = vrcp.pop %v1396
  %v1398 = vmul.f32 %v1396, %v1397
  %v1399 = vsub.f32 1.0, %v1398
  %v1400 = vmul.f32 %v1397, %v1399
  %v1401 = vadd.f32 %v1397, %v1400
  %vm1402 = vweird.f32 %v1396
  %vm1403 = vweird.f32 %v1397
  %vm1404 = vmor %vm1402, %vm1403
  %v1405 = vsel %vm1404, %v1397, %v1401
  %v1406 = vand.u32 2147483647, %v1396
  %vm1407 = vcmp.eq.f32.partialorder %v1406, 8.507059e+37
  %v1408 = vand.u32 %v1396, 2147483648
  %v1409 = vor.u32 1.1754944e-38, %v1408
  %v1410 = vsel %vm1407, %v1409, %v1405
  %v1411 = vmul.f32 %v1386, %v1410
  %v1412 = vmin.f32 %v1411, 1.0
  %v1413 = vmax.f32 %v1412, -1.0
  %v1414 = vmul.f32 %v329, %v329
  %v1415 = vmin.f32 16.0, %v1414
  %v1416 = vmul.f32 %v1415, 2.1237322e-06
  %v1417 = vadd.f32 %v1416, 0.00028619796
  %v1418 = vmul.f32 %v1415, %v1417
  %v1419 = vadd.f32 %v1418, 0.0036580483
  %v1420 = vmul.f32 %v1415, %v1419
  %v1421 = vadd.f32 %v1420, 0.05243302
  %v1422 = vmul.f32 %v1415, %v1421
  %v1423 = vadd.f32 %v1422, 0.18741608
  %v1424 = vmul.f32 %v1415, %v1423
  %v1425 = vadd.f32 %v1424, 1.1283791
  %v1426 = vmul.f32 %v329, %v1425
  %v1427 = vmul.f32 %v1415, 3.8918573e-05
  %v1428 = vadd.f32 %v1427, 0.001143296
  %v1429 = vmul.f32 %v1415, %v1428
  %v1430 = vadd.f32 %v1429, 0.014752088
  %v1431 = vmul.f32 %v1415, %v1430
  %v1432 = vadd.f32 %v1431, 0.112945676
  %v1433 = vmul.f32 %v1415, %v1432
  %v1434 = vadd.f32 %v1433, 0.4994258
  %v1435 = vmul.f32 %v1415, %v1434
  %v1436 = vadd.f32 %v1435, 1.0
  %v1437 = vrcp.pop %v1436
  %v1438 = vmul.f32 %v1436, %v1437
  %v1439 = vsub.f32 1.0, %v1438
  %v1440 = vmul.f32 %v1437, %v1439
  %v1441 = vadd.f32 %v1437, %v1440
  %vm1442 = vweird.f32 %v1436
  %vm1443 = vweird.f32 %v1437
  %vm1444 = vmor %vm1442, %vm1443
  %v1445 = vsel %vm1444, %v1437, %v1441
  %v1446 = vand.u32 2147483647, %v1436
  %vm1447 = vcmp.eq.f32.partialorder %v1446, 8.507059e+37
  %v1448 = vand.u32 %v1436, 2147483648
  %v1449 = vor.u32 1.1754944e-38, %v1448
  %v1450 = vsel %vm1447, %v1449, %v1445
  %v1451 = vmul.f32 %v1426, %v1450
  %v1452 = vmin.f32 %v1451, 1.0
  %v1453 = vmax.f32 %v1452, -1.0
  %v1454 = vmul.f32 %v330, %v330
  %v1455 = vmin.f32 16.0, %v1454
  %v1456 = vmul.f32 %v1455, 2.1237322e-06
  %v1457 = vadd.f32 %v1456, 0.00028619796
  %v1458 = vmul.f32 %v1455, %v1457
  %v1459 = vadd.f32 %v1458, 0.0036580483
  %v1460 = vmul.f32 %v1455, %v1459
  %v1461 = vadd.f32 %v1460, 0.05243302
  %v1462 = vmul.f32 %v1455, %v1461
  %v1463 = vadd.f32 %v1462, 0.18741608
  %v1464 = vmul.f32 %v1455, %v1463
  %v1465 = vadd.f32 %v1464, 1.1283791
  %v1466 = vmul.f32 %v330, %v1465
  %v1467 = vmul.f32 %v1455, 3.8918573e-05
  %v1468 = vadd.f32 %v1467, 0.001143296
  %v1469 = vmul.f32 %v1455, %v1468
  %v1470 = vadd.f32 %v1469, 0.014752088
  %v1471 = vmul.f32 %v1455, %v1470
  %v1472 = vadd.f32 %v1471, 0.112945676
  %v1473 = vmul.f32 %v1455, %v1472
  %v1474 = vadd.f32 %v1473, 0.4994258
  %v1475 = vmul.f32 %v1455, %v1474
  %v1476 = vadd.f32 %v1475, 1.0
  %v1477 = vrcp.pop %v1476
  %v1478 = vmul.f32 %v1476, %v1477
  %v1479 = vsub.f32 1.0, %v1478
  %v1480 = vmul.f32 %v1477, %v1479
  %v1481 = vadd.f32 %v1477, %v1480
  %vm1482 = vweird.f32 %v1476
  %vm1483 = vweird.f32 %v1477
  %vm1484 = vmor %vm1482, %vm1483
  %v1485 = vsel %vm1484, %v1477, %v1481
  %v1486 = vand.u32 2147483647, %v1476
  %vm1487 = vcmp.eq.f32.partialorder %v1486, 8.507059e+37
  %v1488 = vand.u32 %v1476, 2147483648
  %v1489 = vor.u32 1.1754944e-38, %v1488
  %v1490 = vsel %vm1487, %v1489, %v1485
  %v1491 = vmul.f32 %v1466, %v1490
  %v1492 = vmin.f32 %v1491, 1.0
  %v1493 = vmax.f32 %v1492, -1.0
  %v1494 = vmul.f32 %v331, %v331
  %v1495 = vmin.f32 16.0, %v1494
  %v1496 = vmul.f32 %v1495, 2.1237322e-06
  %v1497 = vadd.f32 %v1496, 0.00028619796
  %v1498 = vmul.f32 %v1495, %v1497
  %v1499 = vadd.f32 %v1498, 0.0036580483
  %v1500 = vmul.f32 %v1495, %v1499
  %v1501 = vadd.f32 %v1500, 0.05243302
  %v1502 = vmul.f32 %v1495, %v1501
  %v1503 = vadd.f32 %v1502, 0.18741608
  %v1504 = vmul.f32 %v1495, %v1503
  %v1505 = vadd.f32 %v1504, 1.1283791
  %v1506 = vmul.f32 %v331, %v1505
  %v1507 = vmul.f32 %v1495, 3.8918573e-05
  %v1508 = vadd.f32 %v1507, 0.001143296
  %v1509 = vmul.f32 %v1495, %v1508
  %v1510 = vadd.f32 %v1509, 0.014752088
  %v1511 = vmul.f32 %v1495, %v1510
  %v1512 = vadd.f32 %v1511, 0.112945676
  %v1513 = vmul.f32 %v1495, %v1512
  %v1514 = vadd.f32 %v1513, 0.4994258
  %v1515 = vmul.f32 %v1495, %v1514
  %v1516 = vadd.f32 %v1515, 1.0
  %v1517 = vrcp.pop %v1516
  %v1518 = vmul.f32 %v1516, %v1517
  %v1519 = vsub.f32 1.0, %v1518
  %v1520 = vmul.f32 %v1517, %v1519
  %v1521 = vadd.f32 %v1517, %v1520
  %vm1522 = vweird.f32 %v1516
  %vm1523 = vweird.f32 %v1517
  %vm1524 = vmor %vm1522, %vm1523
  %v1525 = vsel %vm1524, %v1517, %v1521
  %v1526 = vand.u32 2147483647, %v1516
  %vm1527 = vcmp.eq.f32.partialorder %v1526, 8.507059e+37
  %v1528 = vand.u32 %v1516, 2147483648
  %v1529 = vor.u32 1.1754944e-38, %v1528
  %v1530 = vsel %vm1527, %v1529, %v1525
  %v1531 = vmul.f32 %v1506, %v1530
  %v1532 = vmin.f32 %v1531, 1.0
  %v1533 = vmax.f32 %v1532, -1.0
  %v1534 = vmul.f32 %v332, %v332
  %v1535 = vmin.f32 16.0, %v1534
  %v1536 = vmul.f32 %v1535, 2.1237322e-06
  %v1537 = vadd.f32 %v1536, 0.00028619796
  %v1538 = vmul.f32 %v1535, %v1537
  %v1539 = vadd.f32 %v1538, 0.0036580483
  %v1540 = vmul.f32 %v1535, %v1539
  %v1541 = vadd.f32 %v1540, 0.05243302
  %v1542 = vmul.f32 %v1535, %v1541
  %v1543 = vadd.f32 %v1542, 0.18741608
  %v1544 = vmul.f32 %v1535, %v1543
  %v1545 = vadd.f32 %v1544, 1.1283791
  %v1546 = vmul.f32 %v332, %v1545
  %v1547 = vmul.f32 %v1535, 3.8918573e-05
  %v1548 = vadd.f32 %v1547, 0.001143296
  %v1549 = vmul.f32 %v1535, %v1548
  %v1550 = vadd.f32 %v1549, 0.014752088
  %v1551 = vmul.f32 %v1535, %v1550
  %v1552 = vadd.f32 %v1551, 0.112945676
  %v1553 = vmul.f32 %v1535, %v1552
  %v1554 = vadd.f32 %v1553, 0.4994258
  %v1555 = vmul.f32 %v1535, %v1554
  %v1556 = vadd.f32 %v1555, 1.0
  %v1557 = vrcp.pop %v1556
  %v1558 = vmul.f32 %v1556, %v1557
  %v1559 = vsub.f32 1.0, %v1558
  %v1560 = vmul.f32 %v1557, %v1559
  %v1561 = vadd.f32 %v1557, %v1560
  %vm1562 = vweird.f32 %v1556
  %vm1563 = vweird.f32 %v1557
  %vm1564 = vmor %vm1562, %vm1563
  %v1565 = vsel %vm1564, %v1557, %v1561
  %v1566 = vand.u32 2147483647, %v1556
  %vm1567 = vcmp.eq.f32.partialorder %v1566, 8.507059e+37
  %v1568 = vand.u32 %v1556, 2147483648
  %v1569 = vor.u32 1.1754944e-38, %v1568
  %v1570 = vsel %vm1567, %v1569, %v1565
  %v1571 = vmul.f32 %v1546, %v1570
  %v1572 = vmin.f32 %v1571, 1.0
  %v1573 = vmax.f32 %v1572, -1.0
  %v1574 = vmul.f32 %v333, %v333
  %v1575 = vmin.f32 16.0, %v1574
  %v1576 = vmul.f32 %v1575, 2.1237322e-06
  %v1577 = vadd.f32 %v1576, 0.00028619796
  %v1578 = vmul.f32 %v1575, %v1577
  %v1579 = vadd.f32 %v1578, 0.0036580483
  %v1580 = vmul.f32 %v1575, %v1579
  %v1581 = vadd.f32 %v1580, 0.05243302
  %v1582 = vmul.f32 %v1575, %v1581
  %v1583 = vadd.f32 %v1582, 0.18741608
  %v1584 = vmul.f32 %v1575, %v1583
  %v1585 = vadd.f32 %v1584, 1.1283791
  %v1586 = vmul.f32 %v333, %v1585
  %v1587 = vmul.f32 %v1575, 3.8918573e-05
  %v1588 = vadd.f32 %v1587, 0.001143296
  %v1589 = vmul.f32 %v1575, %v1588
  %v1590 = vadd.f32 %v1589, 0.014752088
  %v1591 = vmul.f32 %v1575, %v1590
  %v1592 = vadd.f32 %v1591, 0.112945676
  %v1593 = vmul.f32 %v1575, %v1592
  %v1594 = vadd.f32 %v1593, 0.4994258
  %v1595 = vmul.f32 %v1575, %v1594
  %v1596 = vadd.f32 %v1595, 1.0
  %v1597 = vrcp.pop %v1596
  %v1598 = vmul.f32 %v1596, %v1597
  %v1599 = vsub.f32 1.0, %v1598
  %v1600 = vmul.f32 %v1597, %v1599
  %v1601 = vadd.f32 %v1597, %v1600
  %vm1602 = vweird.f32 %v1596
  %vm1603 = vweird.f32 %v1597
  %vm1604 = vmor %vm1602, %vm1603
  %v1605 = vsel %vm1604, %v1597, %v1601
  %v1606 = vand.u32 2147483647, %v1596
  %vm1607 = vcmp.eq.f32.partialorder %v1606, 8.507059e+37
  %v1608 = vand.u32 %v1596, 2147483648
  %v1609 = vor.u32 1.1754944e-38, %v1608
  %v1610 = vsel %vm1607, %v1609, %v1605
  %v1611 = vmul.f32 %v1586, %v1610
  %v1612 = vmin.f32 %v1611, 1.0
  %v1613 = vmax.f32 %v1612, -1.0
  %v1614 = vadd.f32 %v373, 1.0
  %v1615 = vadd.f32 %v413, 1.0
  %v1616 = vadd.f32 %v453, 1.0
  %v1617 = vadd.f32 %v493, 1.0
  %v1618 = vadd.f32 %v533, 1.0
  %v1619 = vadd.f32 %v573, 1.0
  %v1620 = vadd.f32 %v613, 1.0
  %v1621 = vadd.f32 %v653, 1.0
  %v1622 = vadd.f32 %v693, 1.0
  %v1623 = vadd.f32 %v733, 1.0
  %v1624 = vadd.f32 %v773, 1.0
  %v1625 = vadd.f32 %v813, 1.0
  %v1626 = vadd.f32 %v853, 1.0
  %v1627 = vadd.f32 %v893, 1.0
  %v1628 = vadd.f32 %v933, 1.0
  %v1629 = vadd.f32 %v973, 1.0
  %v1630 = vadd.f32 %v1013, 1.0
  %v1631 = vadd.f32 %v1053, 1.0
  %v1632 = vadd.f32 %v1093, 1.0
  %v1633 = vadd.f32 %v1133, 1.0
  %v1634 = vadd.f32 %v1173, 1.0
  %v1635 = vadd.f32 %v1213, 1.0
  %v1636 = vadd.f32 %v1253, 1.0
  %v1637 = vadd.f32 %v1293, 1.0
  %v1638 = vadd.f32 %v1333, 1.0
  %v1639 = vadd.f32 %v1373, 1.0
  %v1640 = vadd.f32 %v1413, 1.0
  %v1641 = vadd.f32 %v1453, 1.0
  %v1642 = vadd.f32 %v1493, 1.0
  %v1643 = vadd.f32 %v1533, 1.0
  %v1644 = vadd.f32 %v1573, 1.0
  %v1645 = vadd.f32 %v1613, 1.0
  %v1646 = vmul.f32 %v270, %v1614
  %v1647 = vmul.f32 %v271, %v1615
  %v1648 = vmul.f32 %v272, %v1616
  %v1649 = vmul.f32 %v273, %v1617
  %v1650 = vmul.f32 %v274, %v1618
  %v1651 = vmul.f32 %v275, %v1619
  %v1652 = vmul.f32 %v276, %v1620
  %v1653 = vmul.f32 %v277, %v1621
  %v1654 = vmul.f32 %v278, %v1622
  %v1655 = vmul.f32 %v279, %v1623
  %v1656 = vmul.f32 %v280, %v1624
  %v1657 = vmul.f32 %v281, %v1625
  %v1658 = vmul.f32 %v282, %v1626
  %v1659 = vmul.f32 %v283, %v1627
  %v1660 = vmul.f32 %v284, %v1628
  %v1661 = vmul.f32 %v285, %v1629
  %v1662 = vmul.f32 %v286, %v1630
  %v1663 = vmul.f32 %v287, %v1631
  %v1664 = vmul.f32 %v288, %v1632
  %v1665 = vmul.f32 %v289, %v1633
  %v1666 = vmul.f32 %v290, %v1634
  %v1667 = vmul.f32 %v291, %v1635
  %v1668 = vmul.f32 %v292, %v1636
  %v1669 = vmul.f32 %v293, %v1637
  %v1670 = vmul.f32 %v294, %v1638
  %v1671 = vmul.f32 %v295, %v1639
  %v1672 = vmul.f32 %v296, %v1640
  %v1673 = vmul.f32 %v297, %v1641
  %v1674 = vmul.f32 %v298, %v1642
  %v1675 = vmul.f32 %v299, %v1643
  %v1676 = vmul.f32 %v300, %v1644
  %v1677 = vmul.f32 %v301, %v1645
  %v1678 = vld [vmem:[%s3] sm:$0xff]
  %v1679 = vld [vmem:[%s3 + $0x8] sm:$0xff]
  %v1680 = vld [vmem:[%s3 + $0x10] sm:$0xff]
  %v1681 = vld [vmem:[%s3 + $0x18] sm:$0xff]
  %v1682 = vld [vmem:[%s3 + $0x20] sm:$0xff]
  %v1683 = vld [vmem:[%s3 + $0x28] sm:$0xff]
  %v1684 = vld [vmem:[%s3 + $0x30] sm:$0xff]
  %v1685 = vld [vmem:[%s3 + $0x38] sm:$0xff]
  %v1686 = vld [vmem:[%s4] sm:$0x1]
  %v1688 = vperm.slane %v1686, 0
  %vm1690 = vcmask 523264
  %v1692 = vsel %vm1690, %v1646, 0
  %v1695 = vsel %vm1690, %v1647, 0
  %v1698 = vsel %vm1690, %v1648, 0
  %v1701 = vsel %vm1690, %v1649, 0
  %v1704 = vsel %vm1690, %v1650, 0
  %v1707 = vsel %vm1690, %v1651, 0
  %v1710 = vsel %vm1690, %v1652, 0
  %v1713 = vsel %vm1690, %v1653, 0
  %v1716 = vsel %vm1690, %v1654, 0
  %v1719 = vsel %vm1690, %v1655, 0
  %v1722 = vsel %vm1690, %v1656, 0
  %v1725 = vsel %vm1690, %v1657, 0
  %v1728 = vsel %vm1690, %v1658, 0
  %v1731 = vsel %vm1690, %v1659, 0
  %v1734 = vsel %vm1690, %v1660, 0
  %v1737 = vsel %vm1690, %v1661, 0
  %v1740 = vsel %vm1690, %v1662, 0
  %v1743 = vsel %vm1690, %v1663, 0
  %v1746 = vsel %vm1690, %v1664, 0
  %v1749 = vsel %vm1690, %v1665, 0
  %v1752 = vsel %vm1690, %v1666, 0
  %v1755 = vsel %vm1690, %v1667, 0
  %v1758 = vsel %vm1690, %v1668, 0
  %v1761 = vsel %vm1690, %v1669, 0
  %v1764 = vsel %vm1690, %v1670, 0
  %v1767 = vsel %vm1690, %v1671, 0
  %v1770 = vsel %vm1690, %v1672, 0
  %v1773 = vsel %vm1690, %v1673, 0
  %v1776 = vsel %vm1690, %v1674, 0
  %v1779 = vsel %vm1690, %v1675, 0
  %v1782 = vsel %vm1690, %v1676, 0
  %v1785 = vsel %vm1690, %v1677, 0
  %1787 = vmatpush.msra.mxu0 0.0
  %1788 = vmatpush.msra.mxu0 0.0
  %1789 = vmatpush.msra.mxu0 0.0
  %1790 = vmatpush.msra.mxu0 0.0
  %1791 = vmatpush.msra.mxu0 0.0
  %1792 = vmatpush.msra.mxu0 0.0
  %1793 = vmatpush.msra.mxu0 0.0
  %1794 = vmatpush.msra.mxu0 0.0
  %1795 = vmatpush.msra.mxu0 %v1685
  %1796 = vmatpush.msra.mxu0 %v1684
  %1797 = vmatpush.msra.mxu0 %v1683
  %1798 = vmatpush.msra.mxu0 %v1682
  %1799 = vmatpush.msra.mxu0 %v1681
  %1800 = vmatpush.msra.mxu0 %v1680
  %1801 = vmatpush.msra.mxu0 %v1679
  %1802 = vmatpush.msra.mxu0 %v1678
  %1803 = vmatmul.f32.gmra.mxu0 %v1692
  %v1804 = vpop.f32.mrf.mxu0
  %v1805 = vadd.f32 %v1688, %v1804
  %1806 = vmatmul.f32.gmra.mxu0 %v1695
  %v1807 = vpop.f32.mrf.mxu0
  %v1808 = vadd.f32 %v1688, %v1807
  %1809 = vmatmul.f32.gmra.mxu0 %v1698
  %v1810 = vpop.f32.mrf.mxu0
  %v1811 = vadd.f32 %v1688, %v1810
  %1812 = vmatmul.f32.gmra.mxu0 %v1701
  %v1813 = vpop.f32.mrf.mxu0
  %v1814 = vadd.f32 %v1688, %v1813
  %1815 = vmatmul.f32.gmra.mxu0 %v1704
  %v1816 = vpop.f32.mrf.mxu0
  %v1817 = vadd.f32 %v1688, %v1816
  %1818 = vmatmul.f32.gmra.mxu0 %v1707
  %v1819 = vpop.f32.mrf.mxu0
  %v1820 = vadd.f32 %v1688, %v1819
  %1821 = vmatmul.f32.gmra.mxu0 %v1710
  %v1822 = vpop.f32.mrf.mxu0
  %v1823 = vadd.f32 %v1688, %v1822
  %1824 = vmatmul.f32.gmra.mxu0 %v1713
  %v1825 = vpop.f32.mrf.mxu0
  %v1826 = vadd.f32 %v1688, %v1825
  %1827 = vmatmul.f32.gmra.mxu0 %v1716
  %v1828 = vpop.f32.mrf.mxu0
  %v1829 = vadd.f32 %v1688, %v1828
  %1830 = vmatmul.f32.gmra.mxu0 %v1719
  %v1831 = vpop.f32.mrf.mxu0
  %v1832 = vadd.f32 %v1688, %v1831
  %1833 = vmatmul.f32.gmra.mxu0 %v1722
  %v1834 = vpop.f32.mrf.mxu0
  %v1835 = vadd.f32 %v1688, %v1834
  %1836 = vmatmul.f32.gmra.mxu0 %v1725
  %v1837 = vpop.f32.mrf.mxu0
  %v1838 = vadd.f32 %v1688, %v1837
  %1839 = vmatmul.f32.gmra.mxu0 %v1728
  %v1840 = vpop.f32.mrf.mxu0
  %v1841 = vadd.f32 %v1688, %v1840
  %1842 = vmatmul.f32.gmra.mxu0 %v1731
  %v1843 = vpop.f32.mrf.mxu0
  %v1844 = vadd.f32 %v1688, %v1843
  %1845 = vmatmul.f32.gmra.mxu0 %v1734
  %v1846 = vpop.f32.mrf.mxu0
  %v1847 = vadd.f32 %v1688, %v1846
  %1848 = vmatmul.f32.gmra.mxu0 %v1737
  %v1849 = vpop.f32.mrf.mxu0
  %v1850 = vadd.f32 %v1688, %v1849
  %1851 = vmatmul.f32.gmra.mxu0 %v1740
  %v1852 = vpop.f32.mrf.mxu0
  %v1853 = vadd.f32 %v1688, %v1852
  %1854 = vmatmul.f32.gmra.mxu0 %v1743
  %v1855 = vpop.f32.mrf.mxu0
  %v1856 = vadd.f32 %v1688, %v1855
  %1857 = vmatmul.f32.gmra.mxu0 %v1746
  %v1858 = vpop.f32.mrf.mxu0
  %v1859 = vadd.f32 %v1688, %v1858
  %1860 = vmatmul.f32.gmra.mxu0 %v1749
  %v1861 = vpop.f32.mrf.mxu0
  %v1862 = vadd.f32 %v1688, %v1861
  %1863 = vmatmul.f32.gmra.mxu0 %v1752
  %v1864 = vpop.f32.mrf.mxu0
  %v1865 = vadd.f32 %v1688, %v1864
  %1866 = vmatmul.f32.gmra.mxu0 %v1755
  %v1867 = vpop.f32.mrf.mxu0
  %v1868 = vadd.f32 %v1688, %v1867
  %1869 = vmatmul.f32.gmra.mxu0 %v1758
  %v1870 = vpop.f32.mrf.mxu0
  %v1871 = vadd.f32 %v1688, %v1870
  %1872 = vmatmul.f32.gmra.mxu0 %v1761
  %v1873 = vpop.f32.mrf.mxu0
  %v1874 = vadd.f32 %v1688, %v1873
  %1875 = vmatmul.f32.gmra.mxu0 %v1764
  %v1876 = vpop.f32.mrf.mxu0
  %v1877 = vadd.f32 %v1688, %v1876
  %1878 = vmatmul.f32.gmra.mxu0 %v1767
  %v1879 = vpop.f32.mrf.mxu0
  %v1880 = vadd.f32 %v1688, %v1879
  %1881 = vmatmul.f32.gmra.mxu0 %v1770
  %v1882 = vpop.f32.mrf.mxu0
  %v1883 = vadd.f32 %v1688, %v1882
  %1884 = vmatmul.f32.gmra.mxu0 %v1773
  %v1885 = vpop.f32.mrf.mxu0
  %v1886 = vadd.f32 %v1688, %v1885
  %1887 = vmatmul.f32.gmra.mxu0 %v1776
  %v1888 = vpop.f32.mrf.mxu0
  %v1889 = vadd.f32 %v1688, %v1888
  %1890 = vmatmul.f32.gmra.mxu0 %v1779
  %v1891 = vpop.f32.mrf.mxu0
  %v1892 = vadd.f32 %v1688, %v1891
  %1893 = vmatmul.f32.gmra.mxu0 %v1782
  %v1894 = vpop.f32.mrf.mxu0
  %v1895 = vadd.f32 %v1688, %v1894
  %1896 = vmatmul.f32.gmra.mxu0 %v1785
  %v1897 = vpop.f32.mrf.mxu0
  %v1898 = vadd.f32 %v1688, %v1897
  %1899 = vdwg.mxu0
  %1900 = vst.msk [vmem:[%s5] sm:$0xff] %vm60, %v1805
  %1901 = vst.msk [vmem:[%s5 + $0x8] sm:$0xff] %vm60, %v1808
  %1902 = vst.msk [vmem:[%s5 + $0x10] sm:$0xff] %vm60, %v1811
  %1903 = vst.msk [vmem:[%s5 + $0x18] sm:$0xff] %vm60, %v1814
  %1904 = vst.msk [vmem:[%s5 + $0x20] sm:$0xff] %vm60, %v1817
  %1905 = vst.msk [vmem:[%s5 + $0x28] sm:$0xff] %vm60, %v1820
  %1906 = vst.msk [vmem:[%s5 + $0x30] sm:$0xff] %vm60, %v1823
  %1907 = vst.msk [vmem:[%s5 + $0x38] sm:$0xff] %vm60, %v1826
  %1908 = vst.msk [vmem:[%s5 + $0x40] sm:$0xff] %vm60, %v1829
  %1909 = vst.msk [vmem:[%s5 + $0x48] sm:$0xff] %vm60, %v1832
  %1910 = vst.msk [vmem:[%s5 + $0x50] sm:$0xff] %vm60, %v1835
  %1911 = vst.msk [vmem:[%s5 + $0x58] sm:$0xff] %vm60, %v1838
  %1912 = vst.msk [vmem:[%s5 + $0x60] sm:$0xff] %vm60, %v1841
  %1913 = vst.msk [vmem:[%s5 + $0x68] sm:$0xff] %vm60, %v1844
  %1914 = vst.msk [vmem:[%s5 + $0x70] sm:$0xff] %vm60, %v1847
  %1915 = vst.msk [vmem:[%s5 + $0x78] sm:$0xff] %vm60, %v1850
  %1916 = vst.msk [vmem:[%s5 + $0x80] sm:$0xff] %vm60, %v1853
  %1917 = vst.msk [vmem:[%s5 + $0x88] sm:$0xff] %vm60, %v1856
  %1918 = vst.msk [vmem:[%s5 + $0x90] sm:$0xff] %vm60, %v1859
  %1919 = vst.msk [vmem:[%s5 + $0x98] sm:$0xff] %vm60, %v1862
  %1920 = vst.msk [vmem:[%s5 + $0xa0] sm:$0xff] %vm60, %v1865
  %1921 = vst.msk [vmem:[%s5 + $0xa8] sm:$0xff] %vm60, %v1868
  %1922 = vst.msk [vmem:[%s5 + $0xb0] sm:$0xff] %vm60, %v1871
  %1923 = vst.msk [vmem:[%s5 + $0xb8] sm:$0xff] %vm60, %v1874
  %1924 = vst.msk [vmem:[%s5 + $0xc0] sm:$0xff] %vm60, %v1877
  %1925 = vst.msk [vmem:[%s5 + $0xc8] sm:$0xff] %vm60, %v1880
  %1926 = vst.msk [vmem:[%s5 + $0xd0] sm:$0xff] %vm60, %v1883
  %1927 = vst.msk [vmem:[%s5 + $0xd8] sm:$0xff] %vm60, %v1886
  %1928 = vst.msk [vmem:[%s5 + $0xe0] sm:$0xff] %vm60, %v1889
  %1929 = vst.msk [vmem:[%s5 + $0xe8] sm:$0xff] %vm60, %v1892
  %1930 = vst.msk [vmem:[%s5 + $0xf0] sm:$0xff] %vm60, %v1895
  %1931 = vst.msk [vmem:[%s5 + $0xf8] sm:$0xff] %vm60, %v1898
  // Predicated region
  $region22: #{tpu_custom_call.1} parent=0 // pred_check
    _
  $region23: #{tpu_custom_call.1} parent=0 // pred_check_branch
    %1933 = sbr.rel (0) target = $region25
  $region24: #{tpu_custom_call.1} parent=0 // pred_region
    _
  $region25: #{tpu_custom_call.1} parent=0 // pred_fallthru
    _
  // Predicated region
  $region26: #{tpu_custom_call.1} parent=0 // pred_check
    _
  $region27: #{tpu_custom_call.1} parent=0 // pred_check_branch
    %1935 = sbr.rel (0) target = $region29
  $region28: #{tpu_custom_call.1} parent=0 // pred_region
    _
  $region29: #{tpu_custom_call.1} parent=0 // pred_fallthru
    _

</llo_original>
